<compile_context>
chip_gen: v7x
topology: tpu7x:2x2x1
jax: 0.10.0
libtpu: 0.0.40
codegen_flags: <defaults>
</compile_context>

<pallas_src>
import jax
import jax.numpy as jnp
from jax.experimental import pallas as pl
from jax.experimental.pallas import tpu as pltpu

NUM_SEGMENTS = 8
IN_FEATURES = 2048
NUM_ACTIONS = 4


def _action_head_kernel(x_ref, w_ref, b_ref, o_ref):
    # x_ref: (nb, S, K)   lane-dense block: nb clips, S=8 segments, K = C*HW
    # w_ref: (A, K)       expanded FC weight, pre-scaled by 1/(S*HW), VMEM-resident
    # b_ref: (1, A)       FC bias row
    # o_ref: (1, nb, A)   per-step output block
    # f32 accumulation regardless of input dtype (no-op for f32 inputs).
    x = x_ref[...].astype(jnp.float32)

    # Segment (consensus) sum: sublane reduction over S=8 -> (nb, K).
    seg_sum = jnp.sum(x, axis=1)

    # Weighted lane reductions on VPU/XLU (no MXU): (nb,1,K)*(1,A,K) -> (nb,A,K)
    # then reduce over the lane axis -> (nb, A).  A=4 so the intermediate is tiny.
    weighted = seg_sum[:, None, :] * w_ref[...][None, :, :]
    logits = jnp.sum(weighted, axis=-1) + b_ref[...]          # (nb, A)

    o_ref[...] = logits.reshape(o_ref.shape).astype(o_ref.dtype)


def action_model_forward(x_nchw, w, b, *, clips_per_block=2):
    """x_nchw: (N, C, H, W); w: (A, C) PyTorch Linear layout; b: (A,)."""
    N, C, H, W = x_nchw.shape
    A = w.shape[0]
    assert C == w.shape[1]
    assert N % NUM_SEGMENTS == 0
    n_clips = N // NUM_SEGMENTS
    HW = H * W
    K = C * HW

    # Largest clips-per-step that divides n_clips (keeps the grid exact).
    # nb=2 -> ~12.8 MB double-buffered at HW=49: fits v5e/v6e/v7x VMEM budgets.
    nb = max(1, min(clips_per_block, n_clips))
    while n_clips % nb != 0:
        nb -= 1

    # Free, contiguous lane-dense reshape (no HBM transpose pass).
    x3 = x_nchw.reshape(n_clips, NUM_SEGMENTS, K)

    # Fold the 1/(S*HW) pool+consensus scale into the tiny FC weight and expand
    # it over HW so it lines up with the lane-dense x layout:
    #   w_exp[a, c*HW + hw] = w[a, c] / (S*HW)
    scale = 1.0 / float(NUM_SEGMENTS * HW)
    w_exp = jnp.repeat((w * scale).astype(jnp.float32), HW, axis=1)   # (A, K)
    b_row = b.reshape(1, A).astype(jnp.float32)                        # (1, A)

    out3 = pl.pallas_call(
        _action_head_kernel,
        out_shape=jax.ShapeDtypeStruct((n_clips // nb, nb, A), jnp.float32),
        grid=(n_clips // nb,),
        in_specs=[
            # Streamed x block: last two dims (S=8, K) satisfy the (8,128) rule
            # (S divisible by 8, K is the full minor extent / multiple of 128).
            pl.BlockSpec((nb, NUM_SEGMENTS, K), lambda i: (i, 0, 0)),
            # Constant index_maps -> weight & bias stay resident in VMEM.
            pl.BlockSpec((A, K), lambda i: (0, 0)),
            pl.BlockSpec((1, A), lambda i: (0, 0)),
        ],
        out_specs=pl.BlockSpec((1, nb, A), lambda i: (i, 0, 0)),
        compiler_params=pltpu.CompilerParams(
            dimension_semantics=("parallel",),
            # ~2*nb*S*K*4 B for x buffers + ~2*A*K*4 B weight + intermediates:
            # ~15 MB at HW=49, nb=2 -> well inside 32 MiB on v5e/v6e/v7x.
            vmem_limit_bytes=32 * 1024 * 1024,
        ),
    )(x3, w_exp, b_row)

    return out3.reshape(n_clips, A)
    # TODO(synk): if the upstream backbone can emit x in bf16, stream it as
    # bf16 to halve HBM traffic (kernel already upcasts to f32 before summing);
    # do NOT astype in this wrapper -- that adds its own HBM pass.


def _reference_forward(x_nchw, w, b):
    N = x_nchw.shape[0]
    pooled = jnp.mean(x_nchw, axis=(2, 3))               # (N, C)
    logits = pooled @ w.T + b                             # (N, A)
    clips = logits.reshape(N // NUM_SEGMENTS, NUM_SEGMENTS, NUM_ACTIONS)
    return jnp.mean(clips, axis=1)                        # (N/8, A)


if __name__ == "__main__":
    key = jax.random.PRNGKey(0)
    k_x, k_w, k_b = jax.random.split(key, 3)

    # Small example: 2 clips x 8 segments = 16 frames; C fixed at 2048 by the
    # Linear; small 4x4 spatial grid.
    N, C, H, W = 16, IN_FEATURES, 4, 4
    x = jax.random.normal(k_x, (N, C, H, W), dtype=jnp.float32)

    # Deterministic Linear(2048, 4) init (PyTorch-style uniform bounds).
    bound = 1.0 / (IN_FEATURES ** 0.5)
    w = jax.random.uniform(k_w, (NUM_ACTIONS, IN_FEATURES),
                           minval=-bound, maxval=bound, dtype=jnp.float32)
    b = jax.random.uniform(k_b, (NUM_ACTIONS,),
                           minval=-bound, maxval=bound, dtype=jnp.float32)

    out = action_model_forward(x, w, b)
    out = jax.block_until_ready(out)

    ref = _reference_forward(x, w, b)
    assert out.shape == (N // NUM_SEGMENTS, NUM_ACTIONS)
    assert jnp.allclose(out, ref, atol=1e-4, rtol=1e-4), "mismatch vs reference"

    print("KERNEL_OK")
</pallas_src>

<mosaic_0001>
module attributes {stable_mosaic.version = 11 : i64} {
  func.func @_action_head_kernel(%arg0: i32, %arg1: memref<2x8x32768xf32, #tpu.memory_space<vmem>>, %arg2: memref<4x32768xf32, #tpu.memory_space<vmem>>, %arg3: memref<1x4xf32, #tpu.memory_space<vmem>>, %arg4: memref<1x2x4xf32, #tpu.memory_space<vmem>>) attributes {dimension_semantics = [#tpu.dimension_semantics<parallel>], iteration_bounds = array<i64: 1>, scalar_prefetch = 0 : i64, scratch_operands = 0 : i64, tpu.core_type = #tpu.core_type<tc>, window_params = [{transform_indices = @transform_0, window_bounds = array<i64: 2, 8, 32768>}, {pipeline_mode = #tpu.pipeline_mode<synchronous>, transform_indices = @transform_1, window_bounds = array<i64: 4, 32768>}, {pipeline_mode = #tpu.pipeline_mode<synchronous>, transform_indices = @transform_2, window_bounds = array<i64: 1, 4>}, {transform_indices = @transform_3, window_bounds = array<i64: 1, 2, 4>}]} {
    %c0 = arith.constant 0 : index
    %c0_0 = arith.constant 0 : index
    %c0_1 = arith.constant 0 : index
    %0 = vector.load %arg1[%c0, %c0_0, %c0_1] : memref<2x8x32768xf32, #tpu.memory_space<vmem>>, vector<2x8x32768xf32>
    %cst = arith.constant dense<0.000000e+00> : vector<2x32768xf32>
    %1 = vector.multi_reduction <add>, %0, %cst [1] : vector<2x8x32768xf32> to vector<2x32768xf32>
    %2 = vector.shape_cast %1 : vector<2x32768xf32> to vector<2x1x32768xf32>
    %c0_2 = arith.constant 0 : index
    %c0_3 = arith.constant 0 : index
    %3 = vector.load %arg2[%c0_2, %c0_3] : memref<4x32768xf32, #tpu.memory_space<vmem>>, vector<4x32768xf32>
    %4 = vector.shape_cast %3 : vector<4x32768xf32> to vector<1x4x32768xf32>
    %5 = vector.broadcast %2 : vector<2x1x32768xf32> to vector<2x4x32768xf32>
    %6 = vector.broadcast %4 : vector<1x4x32768xf32> to vector<2x4x32768xf32>
    %7 = arith.mulf %5, %6 : vector<2x4x32768xf32>
    %cst_4 = arith.constant dense<0.000000e+00> : vector<2x4xf32>
    %8 = vector.multi_reduction <add>, %7, %cst_4 [2] : vector<2x4x32768xf32> to vector<2x4xf32>
    %c0_5 = arith.constant 0 : index
    %c0_6 = arith.constant 0 : index
    %9 = vector.load %arg3[%c0_5, %c0_6] : memref<1x4xf32, #tpu.memory_space<vmem>>, vector<1x4xf32>
    %10 = vector.broadcast %9 : vector<1x4xf32> to vector<2x4xf32>
    %11 = arith.addf %8, %10 : vector<2x4xf32>
    %12 = vector.shape_cast %11 : vector<2x4xf32> to vector<1x2x4xf32>
    %c0_7 = arith.constant 0 : index
    %c0_8 = arith.constant 0 : index
    %c0_9 = arith.constant 0 : index
    %13 = vector.load %arg4[%c0_7, %c0_8, %c0_9] : memref<1x2x4xf32, #tpu.memory_space<vmem>>, vector<1x2x4xf32>
    tpu.vector_store %arg4[%c0_7, %c0_8, %c0_9], %12 {strides = array<i32>} : memref<1x2x4xf32, #tpu.memory_space<vmem>>, vector<1x2x4xf32>,
    return
  }
  func.func @transform_0(%arg0: i32) -> (i32, i32, i32) {
    %c0_i32 = arith.constant 0 : i32
    %c0_i32_0 = arith.constant 0 : i32
    %c0_i32_1 = arith.constant 0 : i32
    return %arg0, %c0_i32, %c0_i32_0 : i32, i32, i32
  }
  func.func @transform_1(%arg0: i32) -> (i32, i32) {
    %c0_i32 = arith.constant 0 : i32
    %c0_i32_0 = arith.constant 0 : i32
    %c0_i32_1 = arith.constant 0 : i32
    return %c0_i32, %c0_i32_0 : i32, i32
  }
  func.func @transform_2(%arg0: i32) -> (i32, i32) {
    %c0_i32 = arith.constant 0 : i32
    %c0_i32_0 = arith.constant 0 : i32
    %c0_i32_1 = arith.constant 0 : i32
    return %c0_i32, %c0_i32_0 : i32, i32
  }
  func.func @transform_3(%arg0: i32) -> (i32, i32, i32) {
    %c0_i32 = arith.constant 0 : i32
    %c0_i32_0 = arith.constant 0 : i32
    %c0_i32_1 = arith.constant 0 : i32
    return %arg0, %c0_i32, %c0_i32_0 : i32, i32, i32
  }
}

</mosaic_0001>

<llo_original>
// kernel: tpu_custom_call.1
$region0: #{tpu_custom_call.1}
  #allocation0 [shape = 'u32[]', space=smem, size = 0x4, offset = 0x4, fixed_abs, tag = 'smem constant byte address 0x4 - core index']
  #allocation1 [shape = 'u32[144,128]{1,0:T(1,128)}', space=vmem, size = 0x12000, scoped, tag = 'internal scratch']
  %s0 = inlined_call_operand.hbm [shape: f32[2,8,32768], index: 0, kind: input, shape index: {}]
  %s1 = inlined_call_operand.hbm [shape: f32[4,32768], index: 1, kind: input, shape index: {}]
  %s2 = inlined_call_operand.hbm [shape: f32[1,4], index: 2, kind: input, shape index: {}]
  %s3 = inlined_call_operand.hbm [shape: f32[1,2,4], index: 3, kind: output, shape index: {}]
  %s4 = sld [smem:[#allocation0]]
  $region34: #{tpu_custom_call.1} parent=0
    _
  %s6 = ssub.s32 1, %s4
  %s7 = scalar_select 0, %s6, %s4
  $region1: #{tpu_custom_call.1} parent=0
    #allocation2 [shape = 'u8[2097152]{0}', space=vmem, size = 0x200000, scoped, tag = 'input window, operand 0, single buffered']
    #allocation3 [shape = 's32[1]{0}', space=sflag, size = 0x4, scoped, tag = 'scoped memory for tpu_custom_call.1']
    #allocation4 [shape = 's32[1]{0}', space=sflag, size = 0x4, scoped, tag = 'scoped memory for tpu_custom_call.1']
    #allocation5 [shape = 'u8[524288]{0}', space=vmem, size = 0x80000, scoped, tag = 'input window, operand 1, single buffered']
    #allocation6 [shape = 's32[1]{0}', space=sflag, size = 0x4, scoped, tag = 'scoped memory for tpu_custom_call.1']
    #allocation7 [shape = 'u8[512]{0}', space=vmem, size = 0x400, scoped, tag = 'input window, operand 2, single buffered']
    #allocation8 [shape = 'u8[1024]{0}', space=vmem, size = 0x400, scoped, tag = 'output window, operand 0, single buffered']
    %8 = vsyncpa [#allocation3], 0
    %9 = vsyncpa [#allocation6], 0
    %10 = vsyncpa [#allocation4], 0
    // Predicated region
    $region2: #{tpu_custom_call.1} parent=1 // pred_check
      _
    $region3: #{tpu_custom_call.1} parent=1 // pred_check_branch
      %12 = sbr.rel (0) target = $region5
    $region4: #{tpu_custom_call.1} parent=1 // pred_region
      %s14 = ssub.s32 65536, 65536
      %15 = vsyncadd [#allocation3], %s14
      %s16 = sshll.u32 [#allocation2], 4
      %s17 = int_to_ptr.vmem [resolvable:$true] %s16
      %22 = dma.hbm_to_vmem [thread:$0]  %s0, 65536, %s17, [#allocation3], 32768, 32768, 2048
    $region5: #{tpu_custom_call.1} parent=1 // pred_fallthru
      _
    // Predicated region
    $region6: #{tpu_custom_call.1} parent=1 // pred_check
      _
    $region7: #{tpu_custom_call.1} parent=1 // pred_check_branch
      %24 = sbr.rel (0) target = $region9
    $region8: #{tpu_custom_call.1} parent=1 // pred_region
      %s26 = ssub.s32 16384, 16384
      %27 = vsyncadd [#allocation6], %s26
      %s29 = sshll.u32 [#allocation5], 4
      %s30 = int_to_ptr.vmem [resolvable:$true] %s29
      %32 = dma.hbm_to_vmem [thread:$0]  %s1, 16384, %s30, [#allocation6]
    $region9: #{tpu_custom_call.1} parent=1 // pred_fallthru
      _
    // Predicated region
    $region10: #{tpu_custom_call.1} parent=1 // pred_check
      _
    $region11: #{tpu_custom_call.1} parent=1 // pred_check_branch
      %34 = sbr.rel (0) target = $region13
    $region12: #{tpu_custom_call.1} parent=1 // pred_region
      %s36 = ssub.s32 16, 16
      %37 = vsyncadd [#allocation6], %s36
      %s39 = sshll.u32 [#allocation7], 4
      %s40 = int_to_ptr.vmem [resolvable:$true] %s39
      %42 = dma.hbm_to_vmem [thread:$0]  %s2, 16, %s40, [#allocation6]
    $region13: #{tpu_custom_call.1} parent=1 // pred_fallthru
      _
    // Predicated region
    $region14: #{tpu_custom_call.1} parent=1 // pred_check
      _
    $region15: #{tpu_custom_call.1} parent=1 // pred_check_branch
      %44 = sbr.rel (0) target = $region17
    $region16: #{tpu_custom_call.1} parent=1 // pred_region
      %45 = dma.done [#allocation3], 65536
    $region17: #{tpu_custom_call.1} parent=1 // pred_fallthru
      _
    // Predicated region
    $region18: #{tpu_custom_call.1} parent=1 // pred_check
      _
    $region19: #{tpu_custom_call.1} parent=1 // pred_check_branch
      %47 = sbr.rel (0) target = $region21
    $region20: #{tpu_custom_call.1} parent=1 // pred_region
      %48 = dma.done [#allocation6], 16384
    $region21: #{tpu_custom_call.1} parent=1 // pred_fallthru
      _
    // Predicated region
    $region22: #{tpu_custom_call.1} parent=1 // pred_check
      _
    $region23: #{tpu_custom_call.1} parent=1 // pred_check_branch
      %50 = sbr.rel (0) target = $region25
    $region24: #{tpu_custom_call.1} parent=1 // pred_region
      %51 = dma.done [#allocation6], 16
    $region25: #{tpu_custom_call.1} parent=1 // pred_fallthru
      _
    %v52 = vld [vmem:[#allocation2] sm:$0xff]
    %v53 = vld [vmem:[#allocation2 + $0x8] sm:$0xff]
    %v54 = vld [vmem:[#allocation2 + $0x10] sm:$0xff]
    %v55 = vld [vmem:[#allocation2 + $0x18] sm:$0xff]
    %v56 = vld [vmem:[#allocation2 + $0x20] sm:$0xff]
    %v57 = vld [vmem:[#allocation2 + $0x28] sm:$0xff]
    %v58 = vld [vmem:[#allocation2 + $0x30] sm:$0xff]
    %v59 = vld [vmem:[#allocation2 + $0x38] sm:$0xff]
    %v60 = vld [vmem:[#allocation2 + $0x40] sm:$0xff]
    %v61 = vld [vmem:[#allocation2 + $0x48] sm:$0xff]
    %v62 = vld [vmem:[#allocation2 + $0x50] sm:$0xff]
    %v63 = vld [vmem:[#allocation2 + $0x58] sm:$0xff]
    %v64 = vld [vmem:[#allocation2 + $0x60] sm:$0xff]
    %v65 = vld [vmem:[#allocation2 + $0x68] sm:$0xff]
    %v66 = vld [vmem:[#allocation2 + $0x70] sm:$0xff]
    %v67 = vld [vmem:[#allocation2 + $0x78] sm:$0xff]
    %v68 = vld [vmem:[#allocation2 + $0x80] sm:$0xff]
    %v69 = vld [vmem:[#allocation2 + $0x88] sm:$0xff]
    %v70 = vld [vmem:[#allocation2 + $0x90] sm:$0xff]
    %v71 = vld [vmem:[#allocation2 + $0x98] sm:$0xff]
    %v72 = vld [vmem:[#allocation2 + $0xa0] sm:$0xff]
    %v73 = vld [vmem:[#allocation2 + $0xa8] sm:$0xff]
    %v74 = vld [vmem:[#allocation2 + $0xb0] sm:$0xff]
    %v75 = vld [vmem:[#allocation2 + $0xb8] sm:$0xff]
    %v76 = vld [vmem:[#allocation2 + $0xc0] sm:$0xff]
    %v77 = vld [vmem:[#allocation2 + $0xc8] sm:$0xff]
    %v78 = vld [vmem:[#allocation2 + $0xd0] sm:$0xff]
    %v79 = vld [vmem:[#allocation2 + $0xd8] sm:$0xff]
    %v80 = vld [vmem:[#allocation2 + $0xe0] sm:$0xff]
    %v81 = vld [vmem:[#allocation2 + $0xe8] sm:$0xff]
    %v82 = vld [vmem:[#allocation2 + $0xf0] sm:$0xff]
    %v83 = vld [vmem:[#allocation2 + $0xf8] sm:$0xff]
    %v84 = vld [vmem:[#allocation2 + $0x100] sm:$0xff]
    %v85 = vld [vmem:[#allocation2 + $0x108] sm:$0xff]
    %v86 = vld [vmem:[#allocation2 + $0x110] sm:$0xff]
    %v87 = vld [vmem:[#allocation2 + $0x118] sm:$0xff]
    %v88 = vld [vmem:[#allocation2 + $0x120] sm:$0xff]
    %v89 = vld [vmem:[#allocation2 + $0x128] sm:$0xff]
    %v90 = vld [vmem:[#allocation2 + $0x130] sm:$0xff]
    %v91 = vld [vmem:[#allocation2 + $0x138] sm:$0xff]
    %v92 = vld [vmem:[#allocation2 + $0x140] sm:$0xff]
    %v93 = vld [vmem:[#allocation2 + $0x148] sm:$0xff]
    %v94 = vld [vmem:[#allocation2 + $0x150] sm:$0xff]
    %v95 = vld [vmem:[#allocation2 + $0x158] sm:$0xff]
    %v96 = vld [vmem:[#allocation2 + $0x160] sm:$0xff]
    %v97 = vld [vmem:[#allocation2 + $0x168] sm:$0xff]
    %v98 = vld [vmem:[#allocation2 + $0x170] sm:$0xff]
    %v99 = vld [vmem:[#allocation2 + $0x178] sm:$0xff]
    %v100 = vld [vmem:[#allocation2 + $0x180] sm:$0xff]
    %v101 = vld [vmem:[#allocation2 + $0x188] sm:$0xff]
    %v102 = vld [vmem:[#allocation2 + $0x190] sm:$0xff]
    %v103 = vld [vmem:[#allocation2 + $0x198] sm:$0xff]
    %v104 = vld [vmem:[#allocation2 + $0x1a0] sm:$0xff]
    %v105 = vld [vmem:[#allocation2 + $0x1a8] sm:$0xff]
    %v106 = vld [vmem:[#allocation2 + $0x1b0] sm:$0xff]
    %v107 = vld [vmem:[#allocation2 + $0x1b8] sm:$0xff]
    %v108 = vld [vmem:[#allocation2 + $0x1c0] sm:$0xff]
    %v109 = vld [vmem:[#allocation2 + $0x1c8] sm:$0xff]
    %v110 = vld [vmem:[#allocation2 + $0x1d0] sm:$0xff]
    %v111 = vld [vmem:[#allocation2 + $0x1d8] sm:$0xff]
    %v112 = vld [vmem:[#allocation2 + $0x1e0] sm:$0xff]
    %v113 = vld [vmem:[#allocation2 + $0x1e8] sm:$0xff]
    %v114 = vld [vmem:[#allocation2 + $0x1f0] sm:$0xff]
    %v115 = vld [vmem:[#allocation2 + $0x1f8] sm:$0xff]
    %v116 = vld [vmem:[#allocation2 + $0x200] sm:$0xff]
    %v117 = vld [vmem:[#allocation2 + $0x208] sm:$0xff]
    %v118 = vld [vmem:[#allocation2 + $0x210] sm:$0xff]
    %v119 = vld [vmem:[#allocation2 + $0x218] sm:$0xff]
    %v120 = vld [vmem:[#allocation2 + $0x220] sm:$0xff]
    %v121 = vld [vmem:[#allocation2 + $0x228] sm:$0xff]
    %v122 = vld [vmem:[#allocation2 + $0x230] sm:$0xff]
    %v123 = vld [vmem:[#allocation2 + $0x238] sm:$0xff]
    %v124 = vld [vmem:[#allocation2 + $0x240] sm:$0xff]
    %v125 = vld [vmem:[#allocation2 + $0x248] sm:$0xff]
    %v126 = vld [vmem:[#allocation2 + $0x250] sm:$0xff]
    %v127 = vld [vmem:[#allocation2 + $0x258] sm:$0xff]
    %v128 = vld [vmem:[#allocation2 + $0x260] sm:$0xff]
    %v129 = vld [vmem:[#allocation2 + $0x268] sm:$0xff]
    %v130 = vld [vmem:[#allocation2 + $0x270] sm:$0xff]
    %v131 = vld [vmem:[#allocation2 + $0x278] sm:$0xff]
    %v132 = vld [vmem:[#allocation2 + $0x280] sm:$0xff]
    %v133 = vld [vmem:[#allocation2 + $0x288] sm:$0xff]
    %v134 = vld [vmem:[#allocation2 + $0x290] sm:$0xff]
    %v135 = vld [vmem:[#allocation2 + $0x298] sm:$0xff]
    %v136 = vld [vmem:[#allocation2 + $0x2a0] sm:$0xff]
    %v137 = vld [vmem:[#allocation2 + $0x2a8] sm:$0xff]
    %v138 = vld [vmem:[#allocation2 + $0x2b0] sm:$0xff]
    %v139 = vld [vmem:[#allocation2 + $0x2b8] sm:$0xff]
    %v140 = vld [vmem:[#allocation2 + $0x2c0] sm:$0xff]
    %v141 = vld [vmem:[#allocation2 + $0x2c8] sm:$0xff]
    %v142 = vld [vmem:[#allocation2 + $0x2d0] sm:$0xff]
    %v143 = vld [vmem:[#allocation2 + $0x2d8] sm:$0xff]
    %v144 = vld [vmem:[#allocation2 + $0x2e0] sm:$0xff]
    %v145 = vld [vmem:[#allocation2 + $0x2e8] sm:$0xff]
    %v146 = vld [vmem:[#allocation2 + $0x2f0] sm:$0xff]
    %v147 = vld [vmem:[#allocation2 + $0x2f8] sm:$0xff]
    %v148 = vld [vmem:[#allocation2 + $0x300] sm:$0xff]
    %v149 = vld [vmem:[#allocation2 + $0x308] sm:$0xff]
    %v150 = vld [vmem:[#allocation2 + $0x310] sm:$0xff]
    %v151 = vld [vmem:[#allocation2 + $0x318] sm:$0xff]
    %v152 = vld [vmem:[#allocation2 + $0x320] sm:$0xff]
    %v153 = vld [vmem:[#allocation2 + $0x328] sm:$0xff]
    %v154 = vld [vmem:[#allocation2 + $0x330] sm:$0xff]
    %v155 = vld [vmem:[#allocation2 + $0x338] sm:$0xff]
    %v156 = vld [vmem:[#allocation2 + $0x340] sm:$0xff]
    %v157 = vld [vmem:[#allocation2 + $0x348] sm:$0xff]
    %v158 = vld [vmem:[#allocation2 + $0x350] sm:$0xff]
    %v159 = vld [vmem:[#allocation2 + $0x358] sm:$0xff]
    %v160 = vld [vmem:[#allocation2 + $0x360] sm:$0xff]
    %v161 = vld [vmem:[#allocation2 + $0x368] sm:$0xff]
    %v162 = vld [vmem:[#allocation2 + $0x370] sm:$0xff]
    %v163 = vld [vmem:[#allocation2 + $0x378] sm:$0xff]
    %v164 = vld [vmem:[#allocation2 + $0x380] sm:$0xff]
    %v165 = vld [vmem:[#allocation2 + $0x388] sm:$0xff]
    %v166 = vld [vmem:[#allocation2 + $0x390] sm:$0xff]
    %v167 = vld [vmem:[#allocation2 + $0x398] sm:$0xff]
    %v168 = vld [vmem:[#allocation2 + $0x3a0] sm:$0xff]
    %v169 = vld [vmem:[#allocation2 + $0x3a8] sm:$0xff]
    %v170 = vld [vmem:[#allocation2 + $0x3b0] sm:$0xff]
    %v171 = vld [vmem:[#allocation2 + $0x3b8] sm:$0xff]
    %v172 = vld [vmem:[#allocation2 + $0x3c0] sm:$0xff]
    %v173 = vld [vmem:[#allocation2 + $0x3c8] sm:$0xff]
    %v174 = vld [vmem:[#allocation2 + $0x3d0] sm:$0xff]
    %v175 = vld [vmem:[#allocation2 + $0x3d8] sm:$0xff]
    %v176 = vld [vmem:[#allocation2 + $0x3e0] sm:$0xff]
    %v177 = vld [vmem:[#allocation2 + $0x3e8] sm:$0xff]
    %v178 = vld [vmem:[#allocation2 + $0x3f0] sm:$0xff]
    %v179 = vld [vmem:[#allocation2 + $0x3f8] sm:$0xff]
    %v180 = vld [vmem:[#allocation2 + $0x400] sm:$0xff]
    %v181 = vld [vmem:[#allocation2 + $0x408] sm:$0xff]
    %v182 = vld [vmem:[#allocation2 + $0x410] sm:$0xff]
    %v183 = vld [vmem:[#allocation2 + $0x418] sm:$0xff]
    %v184 = vld [vmem:[#allocation2 + $0x420] sm:$0xff]
    %v185 = vld [vmem:[#allocation2 + $0x428] sm:$0xff]
    %v186 = vld [vmem:[#allocation2 + $0x430] sm:$0xff]
    %v187 = vld [vmem:[#allocation2 + $0x438] sm:$0xff]
    %v188 = vld [vmem:[#allocation2 + $0x440] sm:$0xff]
    %v189 = vld [vmem:[#allocation2 + $0x448] sm:$0xff]
    %v190 = vld [vmem:[#allocation2 + $0x450] sm:$0xff]
    %v191 = vld [vmem:[#allocation2 + $0x458] sm:$0xff]
    %v192 = vld [vmem:[#allocation2 + $0x460] sm:$0xff]
    %v193 = vld [vmem:[#allocation2 + $0x468] sm:$0xff]
    %v194 = vld [vmem:[#allocation2 + $0x470] sm:$0xff]
    %v195 = vld [vmem:[#allocation2 + $0x478] sm:$0xff]
    %v196 = vld [vmem:[#allocation2 + $0x480] sm:$0xff]
    %v197 = vld [vmem:[#allocation2 + $0x488] sm:$0xff]
    %v198 = vld [vmem:[#allocation2 + $0x490] sm:$0xff]
    %v199 = vld [vmem:[#allocation2 + $0x498] sm:$0xff]
    %v200 = vld [vmem:[#allocation2 + $0x4a0] sm:$0xff]
    %v201 = vld [vmem:[#allocation2 + $0x4a8] sm:$0xff]
    %v202 = vld [vmem:[#allocation2 + $0x4b0] sm:$0xff]
    %v203 = vld [vmem:[#allocation2 + $0x4b8] sm:$0xff]
    %v204 = vld [vmem:[#allocation2 + $0x4c0] sm:$0xff]
    %v205 = vld [vmem:[#allocation2 + $0x4c8] sm:$0xff]
    %v206 = vld [vmem:[#allocation2 + $0x4d0] sm:$0xff]
    %v207 = vld [vmem:[#allocation2 + $0x4d8] sm:$0xff]
    %v208 = vld [vmem:[#allocation2 + $0x4e0] sm:$0xff]
    %v209 = vld [vmem:[#allocation2 + $0x4e8] sm:$0xff]
    %v210 = vld [vmem:[#allocation2 + $0x4f0] sm:$0xff]
    %v211 = vld [vmem:[#allocation2 + $0x4f8] sm:$0xff]
    %v212 = vld [vmem:[#allocation2 + $0x500] sm:$0xff]
    %v213 = vld [vmem:[#allocation2 + $0x508] sm:$0xff]
    %v214 = vld [vmem:[#allocation2 + $0x510] sm:$0xff]
    %v215 = vld [vmem:[#allocation2 + $0x518] sm:$0xff]
    %v216 = vld [vmem:[#allocation2 + $0x520] sm:$0xff]
    %v217 = vld [vmem:[#allocation2 + $0x528] sm:$0xff]
    %v218 = vld [vmem:[#allocation2 + $0x530] sm:$0xff]
    %v219 = vld [vmem:[#allocation2 + $0x538] sm:$0xff]
    %v220 = vld [vmem:[#allocation2 + $0x540] sm:$0xff]
    %v221 = vld [vmem:[#allocation2 + $0x548] sm:$0xff]
    %v222 = vld [vmem:[#allocation2 + $0x550] sm:$0xff]
    %v223 = vld [vmem:[#allocation2 + $0x558] sm:$0xff]
    %v224 = vld [vmem:[#allocation2 + $0x560] sm:$0xff]
    %v225 = vld [vmem:[#allocation2 + $0x568] sm:$0xff]
    %v226 = vld [vmem:[#allocation2 + $0x570] sm:$0xff]
    %v227 = vld [vmem:[#allocation2 + $0x578] sm:$0xff]
    %v228 = vld [vmem:[#allocation2 + $0x580] sm:$0xff]
    %v229 = vld [vmem:[#allocation2 + $0x588] sm:$0xff]
    %v230 = vld [vmem:[#allocation2 + $0x590] sm:$0xff]
    %v231 = vld [vmem:[#allocation2 + $0x598] sm:$0xff]
    %v232 = vld [vmem:[#allocation2 + $0x5a0] sm:$0xff]
    %v233 = vld [vmem:[#allocation2 + $0x5a8] sm:$0xff]
    %v234 = vld [vmem:[#allocation2 + $0x5b0] sm:$0xff]
    %v235 = vld [vmem:[#allocation2 + $0x5b8] sm:$0xff]
    %v236 = vld [vmem:[#allocation2 + $0x5c0] sm:$0xff]
    %v237 = vld [vmem:[#allocation2 + $0x5c8] sm:$0xff]
    %v238 = vld [vmem:[#allocation2 + $0x5d0] sm:$0xff]
    %v239 = vld [vmem:[#allocation2 + $0x5d8] sm:$0xff]
    %v240 = vld [vmem:[#allocation2 + $0x5e0] sm:$0xff]
    %v241 = vld [vmem:[#allocation2 + $0x5e8] sm:$0xff]
    %v242 = vld [vmem:[#allocation2 + $0x5f0] sm:$0xff]
    %v243 = vld [vmem:[#allocation2 + $0x5f8] sm:$0xff]
    %v244 = vld [vmem:[#allocation2 + $0x600] sm:$0xff]
    %v245 = vld [vmem:[#allocation2 + $0x608] sm:$0xff]
    %v246 = vld [vmem:[#allocation2 + $0x610] sm:$0xff]
    %v247 = vld [vmem:[#allocation2 + $0x618] sm:$0xff]
    %v248 = vld [vmem:[#allocation2 + $0x620] sm:$0xff]
    %v249 = vld [vmem:[#allocation2 + $0x628] sm:$0xff]
    %v250 = vld [vmem:[#allocation2 + $0x630] sm:$0xff]
    %v251 = vld [vmem:[#allocation2 + $0x638] sm:$0xff]
    %v252 = vld [vmem:[#allocation2 + $0x640] sm:$0xff]
    %v253 = vld [vmem:[#allocation2 + $0x648] sm:$0xff]
    %v254 = vld [vmem:[#allocation2 + $0x650] sm:$0xff]
    %v255 = vld [vmem:[#allocation2 + $0x658] sm:$0xff]
    %v256 = vld [vmem:[#allocation2 + $0x660] sm:$0xff]
    %v257 = vld [vmem:[#allocation2 + $0x668] sm:$0xff]
    %v258 = vld [vmem:[#allocation2 + $0x670] sm:$0xff]
    %v259 = vld [vmem:[#allocation2 + $0x678] sm:$0xff]
    %v260 = vld [vmem:[#allocation2 + $0x680] sm:$0xff]
    %v261 = vld [vmem:[#allocation2 + $0x688] sm:$0xff]
    %v262 = vld [vmem:[#allocation2 + $0x690] sm:$0xff]
    %v263 = vld [vmem:[#allocation2 + $0x698] sm:$0xff]
    %v264 = vld [vmem:[#allocation2 + $0x6a0] sm:$0xff]
    %v265 = vld [vmem:[#allocation2 + $0x6a8] sm:$0xff]
    %v266 = vld [vmem:[#allocation2 + $0x6b0] sm:$0xff]
    %v267 = vld [vmem:[#allocation2 + $0x6b8] sm:$0xff]
    %v268 = vld [vmem:[#allocation2 + $0x6c0] sm:$0xff]
    %v269 = vld [vmem:[#allocation2 + $0x6c8] sm:$0xff]
    %v270 = vld [vmem:[#allocation2 + $0x6d0] sm:$0xff]
    %v271 = vld [vmem:[#allocation2 + $0x6d8] sm:$0xff]
    %v272 = vld [vmem:[#allocation2 + $0x6e0] sm:$0xff]
    %v273 = vld [vmem:[#allocation2 + $0x6e8] sm:$0xff]
    %v274 = vld [vmem:[#allocation2 + $0x6f0] sm:$0xff]
    %v275 = vld [vmem:[#allocation2 + $0x6f8] sm:$0xff]
    %v276 = vld [vmem:[#allocation2 + $0x700] sm:$0xff]
    %v277 = vld [vmem:[#allocation2 + $0x708] sm:$0xff]
    %v278 = vld [vmem:[#allocation2 + $0x710] sm:$0xff]
    %v279 = vld [vmem:[#allocation2 + $0x718] sm:$0xff]
    %v280 = vld [vmem:[#allocation2 + $0x720] sm:$0xff]
    %v281 = vld [vmem:[#allocation2 + $0x728] sm:$0xff]
    %v282 = vld [vmem:[#allocation2 + $0x730] sm:$0xff]
    %v283 = vld [vmem:[#allocation2 + $0x738] sm:$0xff]
    %v284 = vld [vmem:[#allocation2 + $0x740] sm:$0xff]
    %v285 = vld [vmem:[#allocation2 + $0x748] sm:$0xff]
    %v286 = vld [vmem:[#allocation2 + $0x750] sm:$0xff]
    %v287 = vld [vmem:[#allocation2 + $0x758] sm:$0xff]
    %v288 = vld [vmem:[#allocation2 + $0x760] sm:$0xff]
    %v289 = vld [vmem:[#allocation2 + $0x768] sm:$0xff]
    %v290 = vld [vmem:[#allocation2 + $0x770] sm:$0xff]
    %v291 = vld [vmem:[#allocation2 + $0x778] sm:$0xff]
    %v292 = vld [vmem:[#allocation2 + $0x780] sm:$0xff]
    %v293 = vld [vmem:[#allocation2 + $0x788] sm:$0xff]
    %v294 = vld [vmem:[#allocation2 + $0x790] sm:$0xff]
    %v295 = vld [vmem:[#allocation2 + $0x798] sm:$0xff]
    %v296 = vld [vmem:[#allocation2 + $0x7a0] sm:$0xff]
    %v297 = vld [vmem:[#allocation2 + $0x7a8] sm:$0xff]
    %v298 = vld [vmem:[#allocation2 + $0x7b0] sm:$0xff]
    %v299 = vld [vmem:[#allocation2 + $0x7b8] sm:$0xff]
    %v300 = vld [vmem:[#allocation2 + $0x7c0] sm:$0xff]
    %v301 = vld [vmem:[#allocation2 + $0x7c8] sm:$0xff]
    %v302 = vld [vmem:[#allocation2 + $0x7d0] sm:$0xff]
    %v303 = vld [vmem:[#allocation2 + $0x7d8] sm:$0xff]
    %v304 = vld [vmem:[#allocation2 + $0x7e0] sm:$0xff]
    %v305 = vld [vmem:[#allocation2 + $0x7e8] sm:$0xff]
    %v306 = vld [vmem:[#allocation2 + $0x7f0] sm:$0xff]
    %v307 = vld [vmem:[#allocation2 + $0x7f8] sm:$0xff]
    %v308 = vld [vmem:[#allocation2 + $0x800] sm:$0xff]
    %v309 = vld [vmem:[#allocation2 + $0x808] sm:$0xff]
    %v310 = vld [vmem:[#allocation2 + $0x810] sm:$0xff]
    %v311 = vld [vmem:[#allocation2 + $0x818] sm:$0xff]
    %v312 = vld [vmem:[#allocation2 + $0x820] sm:$0xff]
    %v313 = vld [vmem:[#allocation2 + $0x828] sm:$0xff]
    %v314 = vld [vmem:[#allocation2 + $0x830] sm:$0xff]
    %v315 = vld [vmem:[#allocation2 + $0x838] sm:$0xff]
    %v316 = vld [vmem:[#allocation2 + $0x840] sm:$0xff]
    %v317 = vld [vmem:[#allocation2 + $0x848] sm:$0xff]
    %v318 = vld [vmem:[#allocation2 + $0x850] sm:$0xff]
    %v319 = vld [vmem:[#allocation2 + $0x858] sm:$0xff]
    %v320 = vld [vmem:[#allocation2 + $0x860] sm:$0xff]
    %v321 = vld [vmem:[#allocation2 + $0x868] sm:$0xff]
    %v322 = vld [vmem:[#allocation2 + $0x870] sm:$0xff]
    %v323 = vld [vmem:[#allocation2 + $0x878] sm:$0xff]
    %v324 = vld [vmem:[#allocation2 + $0x880] sm:$0xff]
    %v325 = vld [vmem:[#allocation2 + $0x888] sm:$0xff]
    %v326 = vld [vmem:[#allocation2 + $0x890] sm:$0xff]
    %v327 = vld [vmem:[#allocation2 + $0x898] sm:$0xff]
    %v328 = vld [vmem:[#allocation2 + $0x8a0] sm:$0xff]
    %v329 = vld [vmem:[#allocation2 + $0x8a8] sm:$0xff]
    %v330 = vld [vmem:[#allocation2 + $0x8b0] sm:$0xff]
    %v331 = vld [vmem:[#allocation2 + $0x8b8] sm:$0xff]
    %v332 = vld [vmem:[#allocation2 + $0x8c0] sm:$0xff]
    %v333 = vld [vmem:[#allocation2 + $0x8c8] sm:$0xff]
    %v334 = vld [vmem:[#allocation2 + $0x8d0] sm:$0xff]
    %v335 = vld [vmem:[#allocation2 + $0x8d8] sm:$0xff]
    %v336 = vld [vmem:[#allocation2 + $0x8e0] sm:$0xff]
    %v337 = vld [vmem:[#allocation2 + $0x8e8] sm:$0xff]
    %v338 = vld [vmem:[#allocation2 + $0x8f0] sm:$0xff]
    %v339 = vld [vmem:[#allocation2 + $0x8f8] sm:$0xff]
    %v340 = vld [vmem:[#allocation2 + $0x900] sm:$0xff]
    %v341 = vld [vmem:[#allocation2 + $0x908] sm:$0xff]
    %v342 = vld [vmem:[#allocation2 + $0x910] sm:$0xff]
    %v343 = vld [vmem:[#allocation2 + $0x918] sm:$0xff]
    %v344 = vld [vmem:[#allocation2 + $0x920] sm:$0xff]
    %v345 = vld [vmem:[#allocation2 + $0x928] sm:$0xff]
    %v346 = vld [vmem:[#allocation2 + $0x930] sm:$0xff]
    %v347 = vld [vmem:[#allocation2 + $0x938] sm:$0xff]
    %v348 = vld [vmem:[#allocation2 + $0x940] sm:$0xff]
    %v349 = vld [vmem:[#allocation2 + $0x948] sm:$0xff]
    %v350 = vld [vmem:[#allocation2 + $0x950] sm:$0xff]
    %v351 = vld [vmem:[#allocation2 + $0x958] sm:$0xff]
    %v352 = vld [vmem:[#allocation2 + $0x960] sm:$0xff]
    %v353 = vld [vmem:[#allocation2 + $0x968] sm:$0xff]
    %v354 = vld [vmem:[#allocation2 + $0x970] sm:$0xff]
    %v355 = vld [vmem:[#allocation2 + $0x978] sm:$0xff]
    %v356 = vld [vmem:[#allocation2 + $0x980] sm:$0xff]
    %v357 = vld [vmem:[#allocation2 + $0x988] sm:$0xff]
    %v358 = vld [vmem:[#allocation2 + $0x990] sm:$0xff]
    %v359 = vld [vmem:[#allocation2 + $0x998] sm:$0xff]
    %v360 = vld [vmem:[#allocation2 + $0x9a0] sm:$0xff]
    %v361 = vld [vmem:[#allocation2 + $0x9a8] sm:$0xff]
    %v362 = vld [vmem:[#allocation2 + $0x9b0] sm:$0xff]
    %v363 = vld [vmem:[#allocation2 + $0x9b8] sm:$0xff]
    %v364 = vld [vmem:[#allocation2 + $0x9c0] sm:$0xff]
    %v365 = vld [vmem:[#allocation2 + $0x9c8] sm:$0xff]
    %v366 = vld [vmem:[#allocation2 + $0x9d0] sm:$0xff]
    %v367 = vld [vmem:[#allocation2 + $0x9d8] sm:$0xff]
    %v368 = vld [vmem:[#allocation2 + $0x9e0] sm:$0xff]
    %v369 = vld [vmem:[#allocation2 + $0x9e8] sm:$0xff]
    %v370 = vld [vmem:[#allocation2 + $0x9f0] sm:$0xff]
    %v371 = vld [vmem:[#allocation2 + $0x9f8] sm:$0xff]
    %v372 = vld [vmem:[#allocation2 + $0xa00] sm:$0xff]
    %v373 = vld [vmem:[#allocation2 + $0xa08] sm:$0xff]
    %v374 = vld [vmem:[#allocation2 + $0xa10] sm:$0xff]
    %v375 = vld [vmem:[#allocation2 + $0xa18] sm:$0xff]
    %v376 = vld [vmem:[#allocation2 + $0xa20] sm:$0xff]
    %v377 = vld [vmem:[#allocation2 + $0xa28] sm:$0xff]
    %v378 = vld [vmem:[#allocation2 + $0xa30] sm:$0xff]
    %v379 = vld [vmem:[#allocation2 + $0xa38] sm:$0xff]
    %v380 = vld [vmem:[#allocation2 + $0xa40] sm:$0xff]
    %v381 = vld [vmem:[#allocation2 + $0xa48] sm:$0xff]
    %v382 = vld [vmem:[#allocation2 + $0xa50] sm:$0xff]
    %v383 = vld [vmem:[#allocation2 + $0xa58] sm:$0xff]
    %v384 = vld [vmem:[#allocation2 + $0xa60] sm:$0xff]
    %v385 = vld [vmem:[#allocation2 + $0xa68] sm:$0xff]
    %v386 = vld [vmem:[#allocation2 + $0xa70] sm:$0xff]
    %v387 = vld [vmem:[#allocation2 + $0xa78] sm:$0xff]
    %v388 = vld [vmem:[#allocation2 + $0xa80] sm:$0xff]
    %v389 = vld [vmem:[#allocation2 + $0xa88] sm:$0xff]
    %v390 = vld [vmem:[#allocation2 + $0xa90] sm:$0xff]
    %v391 = vld [vmem:[#allocation2 + $0xa98] sm:$0xff]
    %v392 = vld [vmem:[#allocation2 + $0xaa0] sm:$0xff]
    %v393 = vld [vmem:[#allocation2 + $0xaa8] sm:$0xff]
    %v394 = vld [vmem:[#allocation2 + $0xab0] sm:$0xff]
    %v395 = vld [vmem:[#allocation2 + $0xab8] sm:$0xff]
    %v396 = vld [vmem:[#allocation2 + $0xac0] sm:$0xff]
    %v397 = vld [vmem:[#allocation2 + $0xac8] sm:$0xff]
    %v398 = vld [vmem:[#allocation2 + $0xad0] sm:$0xff]
    %v399 = vld [vmem:[#allocation2 + $0xad8] sm:$0xff]
    %v400 = vld [vmem:[#allocation2 + $0xae0] sm:$0xff]
    %v401 = vld [vmem:[#allocation2 + $0xae8] sm:$0xff]
    %v402 = vld [vmem:[#allocation2 + $0xaf0] sm:$0xff]
    %v403 = vld [vmem:[#allocation2 + $0xaf8] sm:$0xff]
    %v404 = vld [vmem:[#allocation2 + $0xb00] sm:$0xff]
    %v405 = vld [vmem:[#allocation2 + $0xb08] sm:$0xff]
    %v406 = vld [vmem:[#allocation2 + $0xb10] sm:$0xff]
    %v407 = vld [vmem:[#allocation2 + $0xb18] sm:$0xff]
    %v408 = vld [vmem:[#allocation2 + $0xb20] sm:$0xff]
    %v409 = vld [vmem:[#allocation2 + $0xb28] sm:$0xff]
    %v410 = vld [vmem:[#allocation2 + $0xb30] sm:$0xff]
    %v411 = vld [vmem:[#allocation2 + $0xb38] sm:$0xff]
    %v412 = vld [vmem:[#allocation2 + $0xb40] sm:$0xff]
    %v413 = vld [vmem:[#allocation2 + $0xb48] sm:$0xff]
    %v414 = vld [vmem:[#allocation2 + $0xb50] sm:$0xff]
    %v415 = vld [vmem:[#allocation2 + $0xb58] sm:$0xff]
    %v416 = vld [vmem:[#allocation2 + $0xb60] sm:$0xff]
    %v417 = vld [vmem:[#allocation2 + $0xb68] sm:$0xff]
    %v418 = vld [vmem:[#allocation2 + $0xb70] sm:$0xff]
    %v419 = vld [vmem:[#allocation2 + $0xb78] sm:$0xff]
    %v420 = vld [vmem:[#allocation2 + $0xb80] sm:$0xff]
    %v421 = vld [vmem:[#allocation2 + $0xb88] sm:$0xff]
    %v422 = vld [vmem:[#allocation2 + $0xb90] sm:$0xff]
    %v423 = vld [vmem:[#allocation2 + $0xb98] sm:$0xff]
    %v424 = vld [vmem:[#allocation2 + $0xba0] sm:$0xff]
    %v425 = vld [vmem:[#allocation2 + $0xba8] sm:$0xff]
    %v426 = vld [vmem:[#allocation2 + $0xbb0] sm:$0xff]
    %v427 = vld [vmem:[#allocation2 + $0xbb8] sm:$0xff]
    %v428 = vld [vmem:[#allocation2 + $0xbc0] sm:$0xff]
    %v429 = vld [vmem:[#allocation2 + $0xbc8] sm:$0xff]
    %v430 = vld [vmem:[#allocation2 + $0xbd0] sm:$0xff]
    %v431 = vld [vmem:[#allocation2 + $0xbd8] sm:$0xff]
    %v432 = vld [vmem:[#allocation2 + $0xbe0] sm:$0xff]
    %v433 = vld [vmem:[#allocation2 + $0xbe8] sm:$0xff]
    %v434 = vld [vmem:[#allocation2 + $0xbf0] sm:$0xff]
    %v435 = vld [vmem:[#allocation2 + $0xbf8] sm:$0xff]
    %v436 = vld [vmem:[#allocation2 + $0xc00] sm:$0xff]
    %v437 = vld [vmem:[#allocation2 + $0xc08] sm:$0xff]
    %v438 = vld [vmem:[#allocation2 + $0xc10] sm:$0xff]
    %v439 = vld [vmem:[#allocation2 + $0xc18] sm:$0xff]
    %v440 = vld [vmem:[#allocation2 + $0xc20] sm:$0xff]
    %v441 = vld [vmem:[#allocation2 + $0xc28] sm:$0xff]
    %v442 = vld [vmem:[#allocation2 + $0xc30] sm:$0xff]
    %v443 = vld [vmem:[#allocation2 + $0xc38] sm:$0xff]
    %v444 = vld [vmem:[#allocation2 + $0xc40] sm:$0xff]
    %v445 = vld [vmem:[#allocation2 + $0xc48] sm:$0xff]
    %v446 = vld [vmem:[#allocation2 + $0xc50] sm:$0xff]
    %v447 = vld [vmem:[#allocation2 + $0xc58] sm:$0xff]
    %v448 = vld [vmem:[#allocation2 + $0xc60] sm:$0xff]
    %v449 = vld [vmem:[#allocation2 + $0xc68] sm:$0xff]
    %v450 = vld [vmem:[#allocation2 + $0xc70] sm:$0xff]
    %v451 = vld [vmem:[#allocation2 + $0xc78] sm:$0xff]
    %v452 = vld [vmem:[#allocation2 + $0xc80] sm:$0xff]
    %v453 = vld [vmem:[#allocation2 + $0xc88] sm:$0xff]
    %v454 = vld [vmem:[#allocation2 + $0xc90] sm:$0xff]
    %v455 = vld [vmem:[#allocation2 + $0xc98] sm:$0xff]
    %v456 = vld [vmem:[#allocation2 + $0xca0] sm:$0xff]
    %v457 = vld [vmem:[#allocation2 + $0xca8] sm:$0xff]
    %v458 = vld [vmem:[#allocation2 + $0xcb0] sm:$0xff]
    %v459 = vld [vmem:[#allocation2 + $0xcb8] sm:$0xff]
    %v460 = vld [vmem:[#allocation2 + $0xcc0] sm:$0xff]
    %v461 = vld [vmem:[#allocation2 + $0xcc8] sm:$0xff]
    %v462 = vld [vmem:[#allocation2 + $0xcd0] sm:$0xff]
    %v463 = vld [vmem:[#allocation2 + $0xcd8] sm:$0xff]
    %v464 = vld [vmem:[#allocation2 + $0xce0] sm:$0xff]
    %v465 = vld [vmem:[#allocation2 + $0xce8] sm:$0xff]
    %v466 = vld [vmem:[#allocation2 + $0xcf0] sm:$0xff]
    %v467 = vld [vmem:[#allocation2 + $0xcf8] sm:$0xff]
    %v468 = vld [vmem:[#allocation2 + $0xd00] sm:$0xff]
    %v469 = vld [vmem:[#allocation2 + $0xd08] sm:$0xff]
    %v470 = vld [vmem:[#allocation2 + $0xd10] sm:$0xff]
    %v471 = vld [vmem:[#allocation2 + $0xd18] sm:$0xff]
    %v472 = vld [vmem:[#allocation2 + $0xd20] sm:$0xff]
    %v473 = vld [vmem:[#allocation2 + $0xd28] sm:$0xff]
    %v474 = vld [vmem:[#allocation2 + $0xd30] sm:$0xff]
    %v475 = vld [vmem:[#allocation2 + $0xd38] sm:$0xff]
    %v476 = vld [vmem:[#allocation2 + $0xd40] sm:$0xff]
    %v477 = vld [vmem:[#allocation2 + $0xd48] sm:$0xff]
    %v478 = vld [vmem:[#allocation2 + $0xd50] sm:$0xff]
    %v479 = vld [vmem:[#allocation2 + $0xd58] sm:$0xff]
    %v480 = vld [vmem:[#allocation2 + $0xd60] sm:$0xff]
    %v481 = vld [vmem:[#allocation2 + $0xd68] sm:$0xff]
    %v482 = vld [vmem:[#allocation2 + $0xd70] sm:$0xff]
    %v483 = vld [vmem:[#allocation2 + $0xd78] sm:$0xff]
    %v484 = vld [vmem:[#allocation2 + $0xd80] sm:$0xff]
    %v485 = vld [vmem:[#allocation2 + $0xd88] sm:$0xff]
    %v486 = vld [vmem:[#allocation2 + $0xd90] sm:$0xff]
    %v487 = vld [vmem:[#allocation2 + $0xd98] sm:$0xff]
    %v488 = vld [vmem:[#allocation2 + $0xda0] sm:$0xff]
    %v489 = vld [vmem:[#allocation2 + $0xda8] sm:$0xff]
    %v490 = vld [vmem:[#allocation2 + $0xdb0] sm:$0xff]
    %v491 = vld [vmem:[#allocation2 + $0xdb8] sm:$0xff]
    %v492 = vld [vmem:[#allocation2 + $0xdc0] sm:$0xff]
    %v493 = vld [vmem:[#allocation2 + $0xdc8] sm:$0xff]
    %v494 = vld [vmem:[#allocation2 + $0xdd0] sm:$0xff]
    %v495 = vld [vmem:[#allocation2 + $0xdd8] sm:$0xff]
    %v496 = vld [vmem:[#allocation2 + $0xde0] sm:$0xff]
    %v497 = vld [vmem:[#allocation2 + $0xde8] sm:$0xff]
    %v498 = vld [vmem:[#allocation2 + $0xdf0] sm:$0xff]
    %v499 = vld [vmem:[#allocation2 + $0xdf8] sm:$0xff]
    %v500 = vld [vmem:[#allocation2 + $0xe00] sm:$0xff]
    %v501 = vld [vmem:[#allocation2 + $0xe08] sm:$0xff]
    %v502 = vld [vmem:[#allocation2 + $0xe10] sm:$0xff]
    %v503 = vld [vmem:[#allocation2 + $0xe18] sm:$0xff]
    %v504 = vld [vmem:[#allocation2 + $0xe20] sm:$0xff]
    %v505 = vld [vmem:[#allocation2 + $0xe28] sm:$0xff]
    %v506 = vld [vmem:[#allocation2 + $0xe30] sm:$0xff]
    %v507 = vld [vmem:[#allocation2 + $0xe38] sm:$0xff]
    %v508 = vld [vmem:[#allocation2 + $0xe40] sm:$0xff]
    %v509 = vld [vmem:[#allocation2 + $0xe48] sm:$0xff]
    %v510 = vld [vmem:[#allocation2 + $0xe50] sm:$0xff]
    %v511 = vld [vmem:[#allocation2 + $0xe58] sm:$0xff]
    %v512 = vld [vmem:[#allocation2 + $0xe60] sm:$0xff]
    %v513 = vld [vmem:[#allocation2 + $0xe68] sm:$0xff]
    %v514 = vld [vmem:[#allocation2 + $0xe70] sm:$0xff]
    %v515 = vld [vmem:[#allocation2 + $0xe78] sm:$0xff]
    %v516 = vld [vmem:[#allocation2 + $0xe80] sm:$0xff]
    %v517 = vld [vmem:[#allocation2 + $0xe88] sm:$0xff]
    %v518 = vld [vmem:[#allocation2 + $0xe90] sm:$0xff]
    %v519 = vld [vmem:[#allocation2 + $0xe98] sm:$0xff]
    %v520 = vld [vmem:[#allocation2 + $0xea0] sm:$0xff]
    %v521 = vld [vmem:[#allocation2 + $0xea8] sm:$0xff]
    %v522 = vld [vmem:[#allocation2 + $0xeb0] sm:$0xff]
    %v523 = vld [vmem:[#allocation2 + $0xeb8] sm:$0xff]
    %v524 = vld [vmem:[#allocation2 + $0xec0] sm:$0xff]
    %v525 = vld [vmem:[#allocation2 + $0xec8] sm:$0xff]
    %v526 = vld [vmem:[#allocation2 + $0xed0] sm:$0xff]
    %v527 = vld [vmem:[#allocation2 + $0xed8] sm:$0xff]
    %v528 = vld [vmem:[#allocation2 + $0xee0] sm:$0xff]
    %v529 = vld [vmem:[#allocation2 + $0xee8] sm:$0xff]
    %v530 = vld [vmem:[#allocation2 + $0xef0] sm:$0xff]
    %v531 = vld [vmem:[#allocation2 + $0xef8] sm:$0xff]
    %v532 = vld [vmem:[#allocation2 + $0xf00] sm:$0xff]
    %v533 = vld [vmem:[#allocation2 + $0xf08] sm:$0xff]
    %v534 = vld [vmem:[#allocation2 + $0xf10] sm:$0xff]
    %v535 = vld [vmem:[#allocation2 + $0xf18] sm:$0xff]
    %v536 = vld [vmem:[#allocation2 + $0xf20] sm:$0xff]
    %v537 = vld [vmem:[#allocation2 + $0xf28] sm:$0xff]
    %v538 = vld [vmem:[#allocation2 + $0xf30] sm:$0xff]
    %v539 = vld [vmem:[#allocation2 + $0xf38] sm:$0xff]
    %v540 = vld [vmem:[#allocation2 + $0xf40] sm:$0xff]
    %v541 = vld [vmem:[#allocation2 + $0xf48] sm:$0xff]
    %v542 = vld [vmem:[#allocation2 + $0xf50] sm:$0xff]
    %v543 = vld [vmem:[#allocation2 + $0xf58] sm:$0xff]
    %v544 = vld [vmem:[#allocation2 + $0xf60] sm:$0xff]
    %v545 = vld [vmem:[#allocation2 + $0xf68] sm:$0xff]
    %v546 = vld [vmem:[#allocation2 + $0xf70] sm:$0xff]
    %v547 = vld [vmem:[#allocation2 + $0xf78] sm:$0xff]
    %v548 = vld [vmem:[#allocation2 + $0xf80] sm:$0xff]
    %v549 = vld [vmem:[#allocation2 + $0xf88] sm:$0xff]
    %v550 = vld [vmem:[#allocation2 + $0xf90] sm:$0xff]
    %v551 = vld [vmem:[#allocation2 + $0xf98] sm:$0xff]
    %v552 = vld [vmem:[#allocation2 + $0xfa0] sm:$0xff]
    %v553 = vld [vmem:[#allocation2 + $0xfa8] sm:$0xff]
    %v554 = vld [vmem:[#allocation2 + $0xfb0] sm:$0xff]
    %v555 = vld [vmem:[#allocation2 + $0xfb8] sm:$0xff]
    %v556 = vld [vmem:[#allocation2 + $0xfc0] sm:$0xff]
    %v557 = vld [vmem:[#allocation2 + $0xfc8] sm:$0xff]
    %v558 = vld [vmem:[#allocation2 + $0xfd0] sm:$0xff]
    %v559 = vld [vmem:[#allocation2 + $0xfd8] sm:$0xff]
    %v560 = vld [vmem:[#allocation2 + $0xfe0] sm:$0xff]
    %v561 = vld [vmem:[#allocation2 + $0xfe8] sm:$0xff]
    %v562 = vld [vmem:[#allocation2 + $0xff0] sm:$0xff]
    %v563 = vld [vmem:[#allocation2 + $0xff8] sm:$0xff]
    %v564 = vrot.slane %v52, 4
    %v565 = vadd.f32 %v52, %v564
    %v566 = vrot.slane %v565, 2
    %v567 = vadd.f32 %v565, %v566
    %v568 = vrot.slane %v567, 1
    %v569 = vadd.f32 %v567, %v568
    %v570 = vrot.slane %v53, 4
    %v571 = vadd.f32 %v53, %v570
    %v572 = vrot.slane %v571, 2
    %v573 = vadd.f32 %v571, %v572
    %v574 = vrot.slane %v573, 1
    %v575 = vadd.f32 %v573, %v574
    %v576 = vrot.slane %v54, 4
    %v577 = vadd.f32 %v54, %v576
    %v578 = vrot.slane %v577, 2
    %v579 = vadd.f32 %v577, %v578
    %v580 = vrot.slane %v579, 1
    %v581 = vadd.f32 %v579, %v580
    %v582 = vrot.slane %v55, 4
    %v583 = vadd.f32 %v55, %v582
    %v584 = vrot.slane %v583, 2
    %v585 = vadd.f32 %v583, %v584
    %v586 = vrot.slane %v585, 1
    %v587 = vadd.f32 %v585, %v586
    %v588 = vrot.slane %v56, 4
    %v589 = vadd.f32 %v56, %v588
    %v590 = vrot.slane %v589, 2
    %v591 = vadd.f32 %v589, %v590
    %v592 = vrot.slane %v591, 1
    %v593 = vadd.f32 %v591, %v592
    %v594 = vrot.slane %v57, 4
    %v595 = vadd.f32 %v57, %v594
    %v596 = vrot.slane %v595, 2
    %v597 = vadd.f32 %v595, %v596
    %v598 = vrot.slane %v597, 1
    %v599 = vadd.f32 %v597, %v598
    %v600 = vrot.slane %v58, 4
    %v601 = vadd.f32 %v58, %v600
    %v602 = vrot.slane %v601, 2
    %v603 = vadd.f32 %v601, %v602
    %v604 = vrot.slane %v603, 1
    %v605 = vadd.f32 %v603, %v604
    %v606 = vrot.slane %v59, 4
    %v607 = vadd.f32 %v59, %v606
    %v608 = vrot.slane %v607, 2
    %v609 = vadd.f32 %v607, %v608
    %v610 = vrot.slane %v609, 1
    %v611 = vadd.f32 %v609, %v610
    %v612 = vrot.slane %v60, 4
    %v613 = vadd.f32 %v60, %v612
    %v614 = vrot.slane %v613, 2
    %v615 = vadd.f32 %v613, %v614
    %v616 = vrot.slane %v615, 1
    %v617 = vadd.f32 %v615, %v616
    %v618 = vrot.slane %v61, 4
    %v619 = vadd.f32 %v61, %v618
    %v620 = vrot.slane %v619, 2
    %v621 = vadd.f32 %v619, %v620
    %v622 = vrot.slane %v621, 1
    %v623 = vadd.f32 %v621, %v622
    %v624 = vrot.slane %v62, 4
    %v625 = vadd.f32 %v62, %v624
    %v626 = vrot.slane %v625, 2
    %v627 = vadd.f32 %v625, %v626
    %v628 = vrot.slane %v627, 1
    %v629 = vadd.f32 %v627, %v628
    %v630 = vrot.slane %v63, 4
    %v631 = vadd.f32 %v63, %v630
    %v632 = vrot.slane %v631, 2
    %v633 = vadd.f32 %v631, %v632
    %v634 = vrot.slane %v633, 1
    %v635 = vadd.f32 %v633, %v634
    %v636 = vrot.slane %v64, 4
    %v637 = vadd.f32 %v64, %v636
    %v638 = vrot.slane %v637, 2
    %v639 = vadd.f32 %v637, %v638
    %v640 = vrot.slane %v639, 1
    %v641 = vadd.f32 %v639, %v640
    %v642 = vrot.slane %v65, 4
    %v643 = vadd.f32 %v65, %v642
    %v644 = vrot.slane %v643, 2
    %v645 = vadd.f32 %v643, %v644
    %v646 = vrot.slane %v645, 1
    %v647 = vadd.f32 %v645, %v646
    %v648 = vrot.slane %v66, 4
    %v649 = vadd.f32 %v66, %v648
    %v650 = vrot.slane %v649, 2
    %v651 = vadd.f32 %v649, %v650
    %v652 = vrot.slane %v651, 1
    %v653 = vadd.f32 %v651, %v652
    %v654 = vrot.slane %v67, 4
    %v655 = vadd.f32 %v67, %v654
    %v656 = vrot.slane %v655, 2
    %v657 = vadd.f32 %v655, %v656
    %v658 = vrot.slane %v657, 1
    %v659 = vadd.f32 %v657, %v658
    %v660 = vrot.slane %v68, 4
    %v661 = vadd.f32 %v68, %v660
    %v662 = vrot.slane %v661, 2
    %v663 = vadd.f32 %v661, %v662
    %v664 = vrot.slane %v663, 1
    %v665 = vadd.f32 %v663, %v664
    %v666 = vrot.slane %v69, 4
    %v667 = vadd.f32 %v69, %v666
    %v668 = vrot.slane %v667, 2
    %v669 = vadd.f32 %v667, %v668
    %v670 = vrot.slane %v669, 1
    %v671 = vadd.f32 %v669, %v670
    %v672 = vrot.slane %v70, 4
    %v673 = vadd.f32 %v70, %v672
    %v674 = vrot.slane %v673, 2
    %v675 = vadd.f32 %v673, %v674
    %v676 = vrot.slane %v675, 1
    %v677 = vadd.f32 %v675, %v676
    %v678 = vrot.slane %v71, 4
    %v679 = vadd.f32 %v71, %v678
    %v680 = vrot.slane %v679, 2
    %v681 = vadd.f32 %v679, %v680
    %v682 = vrot.slane %v681, 1
    %v683 = vadd.f32 %v681, %v682
    %v684 = vrot.slane %v72, 4
    %v685 = vadd.f32 %v72, %v684
    %v686 = vrot.slane %v685, 2
    %v687 = vadd.f32 %v685, %v686
    %v688 = vrot.slane %v687, 1
    %v689 = vadd.f32 %v687, %v688
    %v690 = vrot.slane %v73, 4
    %v691 = vadd.f32 %v73, %v690
    %v692 = vrot.slane %v691, 2
    %v693 = vadd.f32 %v691, %v692
    %v694 = vrot.slane %v693, 1
    %v695 = vadd.f32 %v693, %v694
    %v696 = vrot.slane %v74, 4
    %v697 = vadd.f32 %v74, %v696
    %v698 = vrot.slane %v697, 2
    %v699 = vadd.f32 %v697, %v698
    %v700 = vrot.slane %v699, 1
    %v701 = vadd.f32 %v699, %v700
    %v702 = vrot.slane %v75, 4
    %v703 = vadd.f32 %v75, %v702
    %v704 = vrot.slane %v703, 2
    %v705 = vadd.f32 %v703, %v704
    %v706 = vrot.slane %v705, 1
    %v707 = vadd.f32 %v705, %v706
    %v708 = vrot.slane %v76, 4
    %v709 = vadd.f32 %v76, %v708
    %v710 = vrot.slane %v709, 2
    %v711 = vadd.f32 %v709, %v710
    %v712 = vrot.slane %v711, 1
    %v713 = vadd.f32 %v711, %v712
    %v714 = vrot.slane %v77, 4
    %v715 = vadd.f32 %v77, %v714
    %v716 = vrot.slane %v715, 2
    %v717 = vadd.f32 %v715, %v716
    %v718 = vrot.slane %v717, 1
    %v719 = vadd.f32 %v717, %v718
    %v720 = vrot.slane %v78, 4
    %v721 = vadd.f32 %v78, %v720
    %v722 = vrot.slane %v721, 2
    %v723 = vadd.f32 %v721, %v722
    %v724 = vrot.slane %v723, 1
    %v725 = vadd.f32 %v723, %v724
    %v726 = vrot.slane %v79, 4
    %v727 = vadd.f32 %v79, %v726
    %v728 = vrot.slane %v727, 2
    %v729 = vadd.f32 %v727, %v728
    %v730 = vrot.slane %v729, 1
    %v731 = vadd.f32 %v729, %v730
    %v732 = vrot.slane %v80, 4
    %v733 = vadd.f32 %v80, %v732
    %v734 = vrot.slane %v733, 2
    %v735 = vadd.f32 %v733, %v734
    %v736 = vrot.slane %v735, 1
    %v737 = vadd.f32 %v735, %v736
    %v738 = vrot.slane %v81, 4
    %v739 = vadd.f32 %v81, %v738
    %v740 = vrot.slane %v739, 2
    %v741 = vadd.f32 %v739, %v740
    %v742 = vrot.slane %v741, 1
    %v743 = vadd.f32 %v741, %v742
    %v744 = vrot.slane %v82, 4
    %v745 = vadd.f32 %v82, %v744
    %v746 = vrot.slane %v745, 2
    %v747 = vadd.f32 %v745, %v746
    %v748 = vrot.slane %v747, 1
    %v749 = vadd.f32 %v747, %v748
    %v750 = vrot.slane %v83, 4
    %v751 = vadd.f32 %v83, %v750
    %v752 = vrot.slane %v751, 2
    %v753 = vadd.f32 %v751, %v752
    %v754 = vrot.slane %v753, 1
    %v755 = vadd.f32 %v753, %v754
    %v756 = vrot.slane %v84, 4
    %v757 = vadd.f32 %v84, %v756
    %v758 = vrot.slane %v757, 2
    %v759 = vadd.f32 %v757, %v758
    %v760 = vrot.slane %v759, 1
    %v761 = vadd.f32 %v759, %v760
    %v762 = vrot.slane %v85, 4
    %v763 = vadd.f32 %v85, %v762
    %v764 = vrot.slane %v763, 2
    %v765 = vadd.f32 %v763, %v764
    %v766 = vrot.slane %v765, 1
    %v767 = vadd.f32 %v765, %v766
    %v768 = vrot.slane %v86, 4
    %v769 = vadd.f32 %v86, %v768
    %v770 = vrot.slane %v769, 2
    %v771 = vadd.f32 %v769, %v770
    %v772 = vrot.slane %v771, 1
    %v773 = vadd.f32 %v771, %v772
    %v774 = vrot.slane %v87, 4
    %v775 = vadd.f32 %v87, %v774
    %v776 = vrot.slane %v775, 2
    %v777 = vadd.f32 %v775, %v776
    %v778 = vrot.slane %v777, 1
    %v779 = vadd.f32 %v777, %v778
    %v780 = vrot.slane %v88, 4
    %v781 = vadd.f32 %v88, %v780
    %v782 = vrot.slane %v781, 2
    %v783 = vadd.f32 %v781, %v782
    %v784 = vrot.slane %v783, 1
    %v785 = vadd.f32 %v783, %v784
    %v786 = vrot.slane %v89, 4
    %v787 = vadd.f32 %v89, %v786
    %v788 = vrot.slane %v787, 2
    %v789 = vadd.f32 %v787, %v788
    %v790 = vrot.slane %v789, 1
    %v791 = vadd.f32 %v789, %v790
    %v792 = vrot.slane %v90, 4
    %v793 = vadd.f32 %v90, %v792
    %v794 = vrot.slane %v793, 2
    %v795 = vadd.f32 %v793, %v794
    %v796 = vrot.slane %v795, 1
    %v797 = vadd.f32 %v795, %v796
    %v798 = vrot.slane %v91, 4
    %v799 = vadd.f32 %v91, %v798
    %v800 = vrot.slane %v799, 2
    %v801 = vadd.f32 %v799, %v800
    %v802 = vrot.slane %v801, 1
    %v803 = vadd.f32 %v801, %v802
    %v804 = vrot.slane %v92, 4
    %v805 = vadd.f32 %v92, %v804
    %v806 = vrot.slane %v805, 2
    %v807 = vadd.f32 %v805, %v806
    %v808 = vrot.slane %v807, 1
    %v809 = vadd.f32 %v807, %v808
    %v810 = vrot.slane %v93, 4
    %v811 = vadd.f32 %v93, %v810
    %v812 = vrot.slane %v811, 2
    %v813 = vadd.f32 %v811, %v812
    %v814 = vrot.slane %v813, 1
    %v815 = vadd.f32 %v813, %v814
    %v816 = vrot.slane %v94, 4
    %v817 = vadd.f32 %v94, %v816
    %v818 = vrot.slane %v817, 2
    %v819 = vadd.f32 %v817, %v818
    %v820 = vrot.slane %v819, 1
    %v821 = vadd.f32 %v819, %v820
    %v822 = vrot.slane %v95, 4
    %v823 = vadd.f32 %v95, %v822
    %v824 = vrot.slane %v823, 2
    %v825 = vadd.f32 %v823, %v824
    %v826 = vrot.slane %v825, 1
    %v827 = vadd.f32 %v825, %v826
    %v828 = vrot.slane %v96, 4
    %v829 = vadd.f32 %v96, %v828
    %v830 = vrot.slane %v829, 2
    %v831 = vadd.f32 %v829, %v830
    %v832 = vrot.slane %v831, 1
    %v833 = vadd.f32 %v831, %v832
    %v834 = vrot.slane %v97, 4
    %v835 = vadd.f32 %v97, %v834
    %v836 = vrot.slane %v835, 2
    %v837 = vadd.f32 %v835, %v836
    %v838 = vrot.slane %v837, 1
    %v839 = vadd.f32 %v837, %v838
    %v840 = vrot.slane %v98, 4
    %v841 = vadd.f32 %v98, %v840
    %v842 = vrot.slane %v841, 2
    %v843 = vadd.f32 %v841, %v842
    %v844 = vrot.slane %v843, 1
    %v845 = vadd.f32 %v843, %v844
    %v846 = vrot.slane %v99, 4
    %v847 = vadd.f32 %v99, %v846
    %v848 = vrot.slane %v847, 2
    %v849 = vadd.f32 %v847, %v848
    %v850 = vrot.slane %v849, 1
    %v851 = vadd.f32 %v849, %v850
    %v852 = vrot.slane %v100, 4
    %v853 = vadd.f32 %v100, %v852
    %v854 = vrot.slane %v853, 2
    %v855 = vadd.f32 %v853, %v854
    %v856 = vrot.slane %v855, 1
    %v857 = vadd.f32 %v855, %v856
    %v858 = vrot.slane %v101, 4
    %v859 = vadd.f32 %v101, %v858
    %v860 = vrot.slane %v859, 2
    %v861 = vadd.f32 %v859, %v860
    %v862 = vrot.slane %v861, 1
    %v863 = vadd.f32 %v861, %v862
    %v864 = vrot.slane %v102, 4
    %v865 = vadd.f32 %v102, %v864
    %v866 = vrot.slane %v865, 2
    %v867 = vadd.f32 %v865, %v866
    %v868 = vrot.slane %v867, 1
    %v869 = vadd.f32 %v867, %v868
    %v870 = vrot.slane %v103, 4
    %v871 = vadd.f32 %v103, %v870
    %v872 = vrot.slane %v871, 2
    %v873 = vadd.f32 %v871, %v872
    %v874 = vrot.slane %v873, 1
    %v875 = vadd.f32 %v873, %v874
    %v876 = vrot.slane %v104, 4
    %v877 = vadd.f32 %v104, %v876
    %v878 = vrot.slane %v877, 2
    %v879 = vadd.f32 %v877, %v878
    %v880 = vrot.slane %v879, 1
    %v881 = vadd.f32 %v879, %v880
    %v882 = vrot.slane %v105, 4
    %v883 = vadd.f32 %v105, %v882
    %v884 = vrot.slane %v883, 2
    %v885 = vadd.f32 %v883, %v884
    %v886 = vrot.slane %v885, 1
    %v887 = vadd.f32 %v885, %v886
    %v888 = vrot.slane %v106, 4
    %v889 = vadd.f32 %v106, %v888
    %v890 = vrot.slane %v889, 2
    %v891 = vadd.f32 %v889, %v890
    %v892 = vrot.slane %v891, 1
    %v893 = vadd.f32 %v891, %v892
    %v894 = vrot.slane %v107, 4
    %v895 = vadd.f32 %v107, %v894
    %v896 = vrot.slane %v895, 2
    %v897 = vadd.f32 %v895, %v896
    %v898 = vrot.slane %v897, 1
    %v899 = vadd.f32 %v897, %v898
    %v900 = vrot.slane %v108, 4
    %v901 = vadd.f32 %v108, %v900
    %v902 = vrot.slane %v901, 2
    %v903 = vadd.f32 %v901, %v902
    %v904 = vrot.slane %v903, 1
    %v905 = vadd.f32 %v903, %v904
    %v906 = vrot.slane %v109, 4
    %v907 = vadd.f32 %v109, %v906
    %v908 = vrot.slane %v907, 2
    %v909 = vadd.f32 %v907, %v908
    %v910 = vrot.slane %v909, 1
    %v911 = vadd.f32 %v909, %v910
    %v912 = vrot.slane %v110, 4
    %v913 = vadd.f32 %v110, %v912
    %v914 = vrot.slane %v913, 2
    %v915 = vadd.f32 %v913, %v914
    %v916 = vrot.slane %v915, 1
    %v917 = vadd.f32 %v915, %v916
    %v918 = vrot.slane %v111, 4
    %v919 = vadd.f32 %v111, %v918
    %v920 = vrot.slane %v919, 2
    %v921 = vadd.f32 %v919, %v920
    %v922 = vrot.slane %v921, 1
    %v923 = vadd.f32 %v921, %v922
    %v924 = vrot.slane %v112, 4
    %v925 = vadd.f32 %v112, %v924
    %v926 = vrot.slane %v925, 2
    %v927 = vadd.f32 %v925, %v926
    %v928 = vrot.slane %v927, 1
    %v929 = vadd.f32 %v927, %v928
    %v930 = vrot.slane %v113, 4
    %v931 = vadd.f32 %v113, %v930
    %v932 = vrot.slane %v931, 2
    %v933 = vadd.f32 %v931, %v932
    %v934 = vrot.slane %v933, 1
    %v935 = vadd.f32 %v933, %v934
    %v936 = vrot.slane %v114, 4
    %v937 = vadd.f32 %v114, %v936
    %v938 = vrot.slane %v937, 2
    %v939 = vadd.f32 %v937, %v938
    %v940 = vrot.slane %v939, 1
    %v941 = vadd.f32 %v939, %v940
    %v942 = vrot.slane %v115, 4
    %v943 = vadd.f32 %v115, %v942
    %v944 = vrot.slane %v943, 2
    %v945 = vadd.f32 %v943, %v944
    %v946 = vrot.slane %v945, 1
    %v947 = vadd.f32 %v945, %v946
    %v948 = vrot.slane %v116, 4
    %v949 = vadd.f32 %v116, %v948
    %v950 = vrot.slane %v949, 2
    %v951 = vadd.f32 %v949, %v950
    %v952 = vrot.slane %v951, 1
    %v953 = vadd.f32 %v951, %v952
    %v954 = vrot.slane %v117, 4
    %v955 = vadd.f32 %v117, %v954
    %v956 = vrot.slane %v955, 2
    %v957 = vadd.f32 %v955, %v956
    %v958 = vrot.slane %v957, 1
    %v959 = vadd.f32 %v957, %v958
    %v960 = vrot.slane %v118, 4
    %v961 = vadd.f32 %v118, %v960
    %v962 = vrot.slane %v961, 2
    %v963 = vadd.f32 %v961, %v962
    %v964 = vrot.slane %v963, 1
    %v965 = vadd.f32 %v963, %v964
    %v966 = vrot.slane %v119, 4
    %v967 = vadd.f32 %v119, %v966
    %v968 = vrot.slane %v967, 2
    %v969 = vadd.f32 %v967, %v968
    %v970 = vrot.slane %v969, 1
    %v971 = vadd.f32 %v969, %v970
    %v972 = vrot.slane %v120, 4
    %v973 = vadd.f32 %v120, %v972
    %v974 = vrot.slane %v973, 2
    %v975 = vadd.f32 %v973, %v974
    %v976 = vrot.slane %v975, 1
    %v977 = vadd.f32 %v975, %v976
    %v978 = vrot.slane %v121, 4
    %v979 = vadd.f32 %v121, %v978
    %v980 = vrot.slane %v979, 2
    %v981 = vadd.f32 %v979, %v980
    %v982 = vrot.slane %v981, 1
    %v983 = vadd.f32 %v981, %v982
    %v984 = vrot.slane %v122, 4
    %v985 = vadd.f32 %v122, %v984
    %v986 = vrot.slane %v985, 2
    %v987 = vadd.f32 %v985, %v986
    %v988 = vrot.slane %v987, 1
    %v989 = vadd.f32 %v987, %v988
    %v990 = vrot.slane %v123, 4
    %v991 = vadd.f32 %v123, %v990
    %v992 = vrot.slane %v991, 2
    %v993 = vadd.f32 %v991, %v992
    %v994 = vrot.slane %v993, 1
    %v995 = vadd.f32 %v993, %v994
    %v996 = vrot.slane %v124, 4
    %v997 = vadd.f32 %v124, %v996
    %v998 = vrot.slane %v997, 2
    %v999 = vadd.f32 %v997, %v998
    %v1000 = vrot.slane %v999, 1
    %v1001 = vadd.f32 %v999, %v1000
    %v1002 = vrot.slane %v125, 4
    %v1003 = vadd.f32 %v125, %v1002
    %v1004 = vrot.slane %v1003, 2
    %v1005 = vadd.f32 %v1003, %v1004
    %v1006 = vrot.slane %v1005, 1
    %v1007 = vadd.f32 %v1005, %v1006
    %v1008 = vrot.slane %v126, 4
    %v1009 = vadd.f32 %v126, %v1008
    %v1010 = vrot.slane %v1009, 2
    %v1011 = vadd.f32 %v1009, %v1010
    %v1012 = vrot.slane %v1011, 1
    %v1013 = vadd.f32 %v1011, %v1012
    %v1014 = vrot.slane %v127, 4
    %v1015 = vadd.f32 %v127, %v1014
    %v1016 = vrot.slane %v1015, 2
    %v1017 = vadd.f32 %v1015, %v1016
    %v1018 = vrot.slane %v1017, 1
    %v1019 = vadd.f32 %v1017, %v1018
    %v1020 = vrot.slane %v128, 4
    %v1021 = vadd.f32 %v128, %v1020
    %v1022 = vrot.slane %v1021, 2
    %v1023 = vadd.f32 %v1021, %v1022
    %v1024 = vrot.slane %v1023, 1
    %v1025 = vadd.f32 %v1023, %v1024
    %v1026 = vrot.slane %v129, 4
    %v1027 = vadd.f32 %v129, %v1026
    %v1028 = vrot.slane %v1027, 2
    %v1029 = vadd.f32 %v1027, %v1028
    %v1030 = vrot.slane %v1029, 1
    %v1031 = vadd.f32 %v1029, %v1030
    %v1032 = vrot.slane %v130, 4
    %v1033 = vadd.f32 %v130, %v1032
    %v1034 = vrot.slane %v1033, 2
    %v1035 = vadd.f32 %v1033, %v1034
    %v1036 = vrot.slane %v1035, 1
    %v1037 = vadd.f32 %v1035, %v1036
    %v1038 = vrot.slane %v131, 4
    %v1039 = vadd.f32 %v131, %v1038
    %v1040 = vrot.slane %v1039, 2
    %v1041 = vadd.f32 %v1039, %v1040
    %v1042 = vrot.slane %v1041, 1
    %v1043 = vadd.f32 %v1041, %v1042
    %v1044 = vrot.slane %v132, 4
    %v1045 = vadd.f32 %v132, %v1044
    %v1046 = vrot.slane %v1045, 2
    %v1047 = vadd.f32 %v1045, %v1046
    %v1048 = vrot.slane %v1047, 1
    %v1049 = vadd.f32 %v1047, %v1048
    %v1050 = vrot.slane %v133, 4
    %v1051 = vadd.f32 %v133, %v1050
    %v1052 = vrot.slane %v1051, 2
    %v1053 = vadd.f32 %v1051, %v1052
    %v1054 = vrot.slane %v1053, 1
    %v1055 = vadd.f32 %v1053, %v1054
    %v1056 = vrot.slane %v134, 4
    %v1057 = vadd.f32 %v134, %v1056
    %v1058 = vrot.slane %v1057, 2
    %v1059 = vadd.f32 %v1057, %v1058
    %v1060 = vrot.slane %v1059, 1
    %v1061 = vadd.f32 %v1059, %v1060
    %v1062 = vrot.slane %v135, 4
    %v1063 = vadd.f32 %v135, %v1062
    %v1064 = vrot.slane %v1063, 2
    %v1065 = vadd.f32 %v1063, %v1064
    %v1066 = vrot.slane %v1065, 1
    %v1067 = vadd.f32 %v1065, %v1066
    %v1068 = vrot.slane %v136, 4
    %v1069 = vadd.f32 %v136, %v1068
    %v1070 = vrot.slane %v1069, 2
    %v1071 = vadd.f32 %v1069, %v1070
    %v1072 = vrot.slane %v1071, 1
    %v1073 = vadd.f32 %v1071, %v1072
    %v1074 = vrot.slane %v137, 4
    %v1075 = vadd.f32 %v137, %v1074
    %v1076 = vrot.slane %v1075, 2
    %v1077 = vadd.f32 %v1075, %v1076
    %v1078 = vrot.slane %v1077, 1
    %v1079 = vadd.f32 %v1077, %v1078
    %v1080 = vrot.slane %v138, 4
    %v1081 = vadd.f32 %v138, %v1080
    %v1082 = vrot.slane %v1081, 2
    %v1083 = vadd.f32 %v1081, %v1082
    %v1084 = vrot.slane %v1083, 1
    %v1085 = vadd.f32 %v1083, %v1084
    %v1086 = vrot.slane %v139, 4
    %v1087 = vadd.f32 %v139, %v1086
    %v1088 = vrot.slane %v1087, 2
    %v1089 = vadd.f32 %v1087, %v1088
    %v1090 = vrot.slane %v1089, 1
    %v1091 = vadd.f32 %v1089, %v1090
    %v1092 = vrot.slane %v140, 4
    %v1093 = vadd.f32 %v140, %v1092
    %v1094 = vrot.slane %v1093, 2
    %v1095 = vadd.f32 %v1093, %v1094
    %v1096 = vrot.slane %v1095, 1
    %v1097 = vadd.f32 %v1095, %v1096
    %v1098 = vrot.slane %v141, 4
    %v1099 = vadd.f32 %v141, %v1098
    %v1100 = vrot.slane %v1099, 2
    %v1101 = vadd.f32 %v1099, %v1100
    %v1102 = vrot.slane %v1101, 1
    %v1103 = vadd.f32 %v1101, %v1102
    %v1104 = vrot.slane %v142, 4
    %v1105 = vadd.f32 %v142, %v1104
    %v1106 = vrot.slane %v1105, 2
    %v1107 = vadd.f32 %v1105, %v1106
    %v1108 = vrot.slane %v1107, 1
    %v1109 = vadd.f32 %v1107, %v1108
    %v1110 = vrot.slane %v143, 4
    %v1111 = vadd.f32 %v143, %v1110
    %v1112 = vrot.slane %v1111, 2
    %v1113 = vadd.f32 %v1111, %v1112
    %v1114 = vrot.slane %v1113, 1
    %v1115 = vadd.f32 %v1113, %v1114
    %v1116 = vrot.slane %v144, 4
    %v1117 = vadd.f32 %v144, %v1116
    %v1118 = vrot.slane %v1117, 2
    %v1119 = vadd.f32 %v1117, %v1118
    %v1120 = vrot.slane %v1119, 1
    %v1121 = vadd.f32 %v1119, %v1120
    %v1122 = vrot.slane %v145, 4
    %v1123 = vadd.f32 %v145, %v1122
    %v1124 = vrot.slane %v1123, 2
    %v1125 = vadd.f32 %v1123, %v1124
    %v1126 = vrot.slane %v1125, 1
    %v1127 = vadd.f32 %v1125, %v1126
    %v1128 = vrot.slane %v146, 4
    %v1129 = vadd.f32 %v146, %v1128
    %v1130 = vrot.slane %v1129, 2
    %v1131 = vadd.f32 %v1129, %v1130
    %v1132 = vrot.slane %v1131, 1
    %v1133 = vadd.f32 %v1131, %v1132
    %v1134 = vrot.slane %v147, 4
    %v1135 = vadd.f32 %v147, %v1134
    %v1136 = vrot.slane %v1135, 2
    %v1137 = vadd.f32 %v1135, %v1136
    %v1138 = vrot.slane %v1137, 1
    %v1139 = vadd.f32 %v1137, %v1138
    %v1140 = vrot.slane %v148, 4
    %v1141 = vadd.f32 %v148, %v1140
    %v1142 = vrot.slane %v1141, 2
    %v1143 = vadd.f32 %v1141, %v1142
    %v1144 = vrot.slane %v1143, 1
    %v1145 = vadd.f32 %v1143, %v1144
    %v1146 = vrot.slane %v149, 4
    %v1147 = vadd.f32 %v149, %v1146
    %v1148 = vrot.slane %v1147, 2
    %v1149 = vadd.f32 %v1147, %v1148
    %v1150 = vrot.slane %v1149, 1
    %v1151 = vadd.f32 %v1149, %v1150
    %v1152 = vrot.slane %v150, 4
    %v1153 = vadd.f32 %v150, %v1152
    %v1154 = vrot.slane %v1153, 2
    %v1155 = vadd.f32 %v1153, %v1154
    %v1156 = vrot.slane %v1155, 1
    %v1157 = vadd.f32 %v1155, %v1156
    %v1158 = vrot.slane %v151, 4
    %v1159 = vadd.f32 %v151, %v1158
    %v1160 = vrot.slane %v1159, 2
    %v1161 = vadd.f32 %v1159, %v1160
    %v1162 = vrot.slane %v1161, 1
    %v1163 = vadd.f32 %v1161, %v1162
    %v1164 = vrot.slane %v152, 4
    %v1165 = vadd.f32 %v152, %v1164
    %v1166 = vrot.slane %v1165, 2
    %v1167 = vadd.f32 %v1165, %v1166
    %v1168 = vrot.slane %v1167, 1
    %v1169 = vadd.f32 %v1167, %v1168
    %v1170 = vrot.slane %v153, 4
    %v1171 = vadd.f32 %v153, %v1170
    %v1172 = vrot.slane %v1171, 2
    %v1173 = vadd.f32 %v1171, %v1172
    %v1174 = vrot.slane %v1173, 1
    %v1175 = vadd.f32 %v1173, %v1174
    %v1176 = vrot.slane %v154, 4
    %v1177 = vadd.f32 %v154, %v1176
    %v1178 = vrot.slane %v1177, 2
    %v1179 = vadd.f32 %v1177, %v1178
    %v1180 = vrot.slane %v1179, 1
    %v1181 = vadd.f32 %v1179, %v1180
    %v1182 = vrot.slane %v155, 4
    %v1183 = vadd.f32 %v155, %v1182
    %v1184 = vrot.slane %v1183, 2
    %v1185 = vadd.f32 %v1183, %v1184
    %v1186 = vrot.slane %v1185, 1
    %v1187 = vadd.f32 %v1185, %v1186
    %v1188 = vrot.slane %v156, 4
    %v1189 = vadd.f32 %v156, %v1188
    %v1190 = vrot.slane %v1189, 2
    %v1191 = vadd.f32 %v1189, %v1190
    %v1192 = vrot.slane %v1191, 1
    %v1193 = vadd.f32 %v1191, %v1192
    %v1194 = vrot.slane %v157, 4
    %v1195 = vadd.f32 %v157, %v1194
    %v1196 = vrot.slane %v1195, 2
    %v1197 = vadd.f32 %v1195, %v1196
    %v1198 = vrot.slane %v1197, 1
    %v1199 = vadd.f32 %v1197, %v1198
    %v1200 = vrot.slane %v158, 4
    %v1201 = vadd.f32 %v158, %v1200
    %v1202 = vrot.slane %v1201, 2
    %v1203 = vadd.f32 %v1201, %v1202
    %v1204 = vrot.slane %v1203, 1
    %v1205 = vadd.f32 %v1203, %v1204
    %v1206 = vrot.slane %v159, 4
    %v1207 = vadd.f32 %v159, %v1206
    %v1208 = vrot.slane %v1207, 2
    %v1209 = vadd.f32 %v1207, %v1208
    %v1210 = vrot.slane %v1209, 1
    %v1211 = vadd.f32 %v1209, %v1210
    %v1212 = vrot.slane %v160, 4
    %v1213 = vadd.f32 %v160, %v1212
    %v1214 = vrot.slane %v1213, 2
    %v1215 = vadd.f32 %v1213, %v1214
    %v1216 = vrot.slane %v1215, 1
    %v1217 = vadd.f32 %v1215, %v1216
    %v1218 = vrot.slane %v161, 4
    %v1219 = vadd.f32 %v161, %v1218
    %v1220 = vrot.slane %v1219, 2
    %v1221 = vadd.f32 %v1219, %v1220
    %v1222 = vrot.slane %v1221, 1
    %v1223 = vadd.f32 %v1221, %v1222
    %v1224 = vrot.slane %v162, 4
    %v1225 = vadd.f32 %v162, %v1224
    %v1226 = vrot.slane %v1225, 2
    %v1227 = vadd.f32 %v1225, %v1226
    %v1228 = vrot.slane %v1227, 1
    %v1229 = vadd.f32 %v1227, %v1228
    %v1230 = vrot.slane %v163, 4
    %v1231 = vadd.f32 %v163, %v1230
    %v1232 = vrot.slane %v1231, 2
    %v1233 = vadd.f32 %v1231, %v1232
    %v1234 = vrot.slane %v1233, 1
    %v1235 = vadd.f32 %v1233, %v1234
    %v1236 = vrot.slane %v164, 4
    %v1237 = vadd.f32 %v164, %v1236
    %v1238 = vrot.slane %v1237, 2
    %v1239 = vadd.f32 %v1237, %v1238
    %v1240 = vrot.slane %v1239, 1
    %v1241 = vadd.f32 %v1239, %v1240
    %v1242 = vrot.slane %v165, 4
    %v1243 = vadd.f32 %v165, %v1242
    %v1244 = vrot.slane %v1243, 2
    %v1245 = vadd.f32 %v1243, %v1244
    %v1246 = vrot.slane %v1245, 1
    %v1247 = vadd.f32 %v1245, %v1246
    %v1248 = vrot.slane %v166, 4
    %v1249 = vadd.f32 %v166, %v1248
    %v1250 = vrot.slane %v1249, 2
    %v1251 = vadd.f32 %v1249, %v1250
    %v1252 = vrot.slane %v1251, 1
    %v1253 = vadd.f32 %v1251, %v1252
    %v1254 = vrot.slane %v167, 4
    %v1255 = vadd.f32 %v167, %v1254
    %v1256 = vrot.slane %v1255, 2
    %v1257 = vadd.f32 %v1255, %v1256
    %v1258 = vrot.slane %v1257, 1
    %v1259 = vadd.f32 %v1257, %v1258
    %v1260 = vrot.slane %v168, 4
    %v1261 = vadd.f32 %v168, %v1260
    %v1262 = vrot.slane %v1261, 2
    %v1263 = vadd.f32 %v1261, %v1262
    %v1264 = vrot.slane %v1263, 1
    %v1265 = vadd.f32 %v1263, %v1264
    %v1266 = vrot.slane %v169, 4
    %v1267 = vadd.f32 %v169, %v1266
    %v1268 = vrot.slane %v1267, 2
    %v1269 = vadd.f32 %v1267, %v1268
    %v1270 = vrot.slane %v1269, 1
    %v1271 = vadd.f32 %v1269, %v1270
    %v1272 = vrot.slane %v170, 4
    %v1273 = vadd.f32 %v170, %v1272
    %v1274 = vrot.slane %v1273, 2
    %v1275 = vadd.f32 %v1273, %v1274
    %v1276 = vrot.slane %v1275, 1
    %v1277 = vadd.f32 %v1275, %v1276
    %v1278 = vrot.slane %v171, 4
    %v1279 = vadd.f32 %v171, %v1278
    %v1280 = vrot.slane %v1279, 2
    %v1281 = vadd.f32 %v1279, %v1280
    %v1282 = vrot.slane %v1281, 1
    %v1283 = vadd.f32 %v1281, %v1282
    %v1284 = vrot.slane %v172, 4
    %v1285 = vadd.f32 %v172, %v1284
    %v1286 = vrot.slane %v1285, 2
    %v1287 = vadd.f32 %v1285, %v1286
    %v1288 = vrot.slane %v1287, 1
    %v1289 = vadd.f32 %v1287, %v1288
    %v1290 = vrot.slane %v173, 4
    %v1291 = vadd.f32 %v173, %v1290
    %v1292 = vrot.slane %v1291, 2
    %v1293 = vadd.f32 %v1291, %v1292
    %v1294 = vrot.slane %v1293, 1
    %v1295 = vadd.f32 %v1293, %v1294
    %v1296 = vrot.slane %v174, 4
    %v1297 = vadd.f32 %v174, %v1296
    %v1298 = vrot.slane %v1297, 2
    %v1299 = vadd.f32 %v1297, %v1298
    %v1300 = vrot.slane %v1299, 1
    %v1301 = vadd.f32 %v1299, %v1300
    %v1302 = vrot.slane %v175, 4
    %v1303 = vadd.f32 %v175, %v1302
    %v1304 = vrot.slane %v1303, 2
    %v1305 = vadd.f32 %v1303, %v1304
    %v1306 = vrot.slane %v1305, 1
    %v1307 = vadd.f32 %v1305, %v1306
    %v1308 = vrot.slane %v176, 4
    %v1309 = vadd.f32 %v176, %v1308
    %v1310 = vrot.slane %v1309, 2
    %v1311 = vadd.f32 %v1309, %v1310
    %v1312 = vrot.slane %v1311, 1
    %v1313 = vadd.f32 %v1311, %v1312
    %v1314 = vrot.slane %v177, 4
    %v1315 = vadd.f32 %v177, %v1314
    %v1316 = vrot.slane %v1315, 2
    %v1317 = vadd.f32 %v1315, %v1316
    %v1318 = vrot.slane %v1317, 1
    %v1319 = vadd.f32 %v1317, %v1318
    %v1320 = vrot.slane %v178, 4
    %v1321 = vadd.f32 %v178, %v1320
    %v1322 = vrot.slane %v1321, 2
    %v1323 = vadd.f32 %v1321, %v1322
    %v1324 = vrot.slane %v1323, 1
    %v1325 = vadd.f32 %v1323, %v1324
    %v1326 = vrot.slane %v179, 4
    %v1327 = vadd.f32 %v179, %v1326
    %v1328 = vrot.slane %v1327, 2
    %v1329 = vadd.f32 %v1327, %v1328
    %v1330 = vrot.slane %v1329, 1
    %v1331 = vadd.f32 %v1329, %v1330
    %v1332 = vrot.slane %v180, 4
    %v1333 = vadd.f32 %v180, %v1332
    %v1334 = vrot.slane %v1333, 2
    %v1335 = vadd.f32 %v1333, %v1334
    %v1336 = vrot.slane %v1335, 1
    %v1337 = vadd.f32 %v1335, %v1336
    %v1338 = vrot.slane %v181, 4
    %v1339 = vadd.f32 %v181, %v1338
    %v1340 = vrot.slane %v1339, 2
    %v1341 = vadd.f32 %v1339, %v1340
    %v1342 = vrot.slane %v1341, 1
    %v1343 = vadd.f32 %v1341, %v1342
    %v1344 = vrot.slane %v182, 4
    %v1345 = vadd.f32 %v182, %v1344
    %v1346 = vrot.slane %v1345, 2
    %v1347 = vadd.f32 %v1345, %v1346
    %v1348 = vrot.slane %v1347, 1
    %v1349 = vadd.f32 %v1347, %v1348
    %v1350 = vrot.slane %v183, 4
    %v1351 = vadd.f32 %v183, %v1350
    %v1352 = vrot.slane %v1351, 2
    %v1353 = vadd.f32 %v1351, %v1352
    %v1354 = vrot.slane %v1353, 1
    %v1355 = vadd.f32 %v1353, %v1354
    %v1356 = vrot.slane %v184, 4
    %v1357 = vadd.f32 %v184, %v1356
    %v1358 = vrot.slane %v1357, 2
    %v1359 = vadd.f32 %v1357, %v1358
    %v1360 = vrot.slane %v1359, 1
    %v1361 = vadd.f32 %v1359, %v1360
    %v1362 = vrot.slane %v185, 4
    %v1363 = vadd.f32 %v185, %v1362
    %v1364 = vrot.slane %v1363, 2
    %v1365 = vadd.f32 %v1363, %v1364
    %v1366 = vrot.slane %v1365, 1
    %v1367 = vadd.f32 %v1365, %v1366
    %v1368 = vrot.slane %v186, 4
    %v1369 = vadd.f32 %v186, %v1368
    %v1370 = vrot.slane %v1369, 2
    %v1371 = vadd.f32 %v1369, %v1370
    %v1372 = vrot.slane %v1371, 1
    %v1373 = vadd.f32 %v1371, %v1372
    %v1374 = vrot.slane %v187, 4
    %v1375 = vadd.f32 %v187, %v1374
    %v1376 = vrot.slane %v1375, 2
    %v1377 = vadd.f32 %v1375, %v1376
    %v1378 = vrot.slane %v1377, 1
    %v1379 = vadd.f32 %v1377, %v1378
    %v1380 = vrot.slane %v188, 4
    %v1381 = vadd.f32 %v188, %v1380
    %v1382 = vrot.slane %v1381, 2
    %v1383 = vadd.f32 %v1381, %v1382
    %v1384 = vrot.slane %v1383, 1
    %v1385 = vadd.f32 %v1383, %v1384
    %v1386 = vrot.slane %v189, 4
    %v1387 = vadd.f32 %v189, %v1386
    %v1388 = vrot.slane %v1387, 2
    %v1389 = vadd.f32 %v1387, %v1388
    %v1390 = vrot.slane %v1389, 1
    %v1391 = vadd.f32 %v1389, %v1390
    %v1392 = vrot.slane %v190, 4
    %v1393 = vadd.f32 %v190, %v1392
    %v1394 = vrot.slane %v1393, 2
    %v1395 = vadd.f32 %v1393, %v1394
    %v1396 = vrot.slane %v1395, 1
    %v1397 = vadd.f32 %v1395, %v1396
    %v1398 = vrot.slane %v191, 4
    %v1399 = vadd.f32 %v191, %v1398
    %v1400 = vrot.slane %v1399, 2
    %v1401 = vadd.f32 %v1399, %v1400
    %v1402 = vrot.slane %v1401, 1
    %v1403 = vadd.f32 %v1401, %v1402
    %v1404 = vrot.slane %v192, 4
    %v1405 = vadd.f32 %v192, %v1404
    %v1406 = vrot.slane %v1405, 2
    %v1407 = vadd.f32 %v1405, %v1406
    %v1408 = vrot.slane %v1407, 1
    %v1409 = vadd.f32 %v1407, %v1408
    %v1410 = vrot.slane %v193, 4
    %v1411 = vadd.f32 %v193, %v1410
    %v1412 = vrot.slane %v1411, 2
    %v1413 = vadd.f32 %v1411, %v1412
    %v1414 = vrot.slane %v1413, 1
    %v1415 = vadd.f32 %v1413, %v1414
    %v1416 = vrot.slane %v194, 4
    %v1417 = vadd.f32 %v194, %v1416
    %v1418 = vrot.slane %v1417, 2
    %v1419 = vadd.f32 %v1417, %v1418
    %v1420 = vrot.slane %v1419, 1
    %v1421 = vadd.f32 %v1419, %v1420
    %v1422 = vrot.slane %v195, 4
    %v1423 = vadd.f32 %v195, %v1422
    %v1424 = vrot.slane %v1423, 2
    %v1425 = vadd.f32 %v1423, %v1424
    %v1426 = vrot.slane %v1425, 1
    %v1427 = vadd.f32 %v1425, %v1426
    %v1428 = vrot.slane %v196, 4
    %v1429 = vadd.f32 %v196, %v1428
    %v1430 = vrot.slane %v1429, 2
    %v1431 = vadd.f32 %v1429, %v1430
    %v1432 = vrot.slane %v1431, 1
    %v1433 = vadd.f32 %v1431, %v1432
    %v1434 = vrot.slane %v197, 4
    %v1435 = vadd.f32 %v197, %v1434
    %v1436 = vrot.slane %v1435, 2
    %v1437 = vadd.f32 %v1435, %v1436
    %v1438 = vrot.slane %v1437, 1
    %v1439 = vadd.f32 %v1437, %v1438
    %v1440 = vrot.slane %v198, 4
    %v1441 = vadd.f32 %v198, %v1440
    %v1442 = vrot.slane %v1441, 2
    %v1443 = vadd.f32 %v1441, %v1442
    %v1444 = vrot.slane %v1443, 1
    %v1445 = vadd.f32 %v1443, %v1444
    %v1446 = vrot.slane %v199, 4
    %v1447 = vadd.f32 %v199, %v1446
    %v1448 = vrot.slane %v1447, 2
    %v1449 = vadd.f32 %v1447, %v1448
    %v1450 = vrot.slane %v1449, 1
    %v1451 = vadd.f32 %v1449, %v1450
    %v1452 = vrot.slane %v200, 4
    %v1453 = vadd.f32 %v200, %v1452
    %v1454 = vrot.slane %v1453, 2
    %v1455 = vadd.f32 %v1453, %v1454
    %v1456 = vrot.slane %v1455, 1
    %v1457 = vadd.f32 %v1455, %v1456
    %v1458 = vrot.slane %v201, 4
    %v1459 = vadd.f32 %v201, %v1458
    %v1460 = vrot.slane %v1459, 2
    %v1461 = vadd.f32 %v1459, %v1460
    %v1462 = vrot.slane %v1461, 1
    %v1463 = vadd.f32 %v1461, %v1462
    %v1464 = vrot.slane %v202, 4
    %v1465 = vadd.f32 %v202, %v1464
    %v1466 = vrot.slane %v1465, 2
    %v1467 = vadd.f32 %v1465, %v1466
    %v1468 = vrot.slane %v1467, 1
    %v1469 = vadd.f32 %v1467, %v1468
    %v1470 = vrot.slane %v203, 4
    %v1471 = vadd.f32 %v203, %v1470
    %v1472 = vrot.slane %v1471, 2
    %v1473 = vadd.f32 %v1471, %v1472
    %v1474 = vrot.slane %v1473, 1
    %v1475 = vadd.f32 %v1473, %v1474
    %v1476 = vrot.slane %v204, 4
    %v1477 = vadd.f32 %v204, %v1476
    %v1478 = vrot.slane %v1477, 2
    %v1479 = vadd.f32 %v1477, %v1478
    %v1480 = vrot.slane %v1479, 1
    %v1481 = vadd.f32 %v1479, %v1480
    %v1482 = vrot.slane %v205, 4
    %v1483 = vadd.f32 %v205, %v1482
    %v1484 = vrot.slane %v1483, 2
    %v1485 = vadd.f32 %v1483, %v1484
    %v1486 = vrot.slane %v1485, 1
    %v1487 = vadd.f32 %v1485, %v1486
    %v1488 = vrot.slane %v206, 4
    %v1489 = vadd.f32 %v206, %v1488
    %v1490 = vrot.slane %v1489, 2
    %v1491 = vadd.f32 %v1489, %v1490
    %v1492 = vrot.slane %v1491, 1
    %v1493 = vadd.f32 %v1491, %v1492
    %v1494 = vrot.slane %v207, 4
    %v1495 = vadd.f32 %v207, %v1494
    %v1496 = vrot.slane %v1495, 2
    %v1497 = vadd.f32 %v1495, %v1496
    %v1498 = vrot.slane %v1497, 1
    %v1499 = vadd.f32 %v1497, %v1498
    %v1500 = vrot.slane %v208, 4
    %v1501 = vadd.f32 %v208, %v1500
    %v1502 = vrot.slane %v1501, 2
    %v1503 = vadd.f32 %v1501, %v1502
    %v1504 = vrot.slane %v1503, 1
    %v1505 = vadd.f32 %v1503, %v1504
    %v1506 = vrot.slane %v209, 4
    %v1507 = vadd.f32 %v209, %v1506
    %v1508 = vrot.slane %v1507, 2
    %v1509 = vadd.f32 %v1507, %v1508
    %v1510 = vrot.slane %v1509, 1
    %v1511 = vadd.f32 %v1509, %v1510
    %v1512 = vrot.slane %v210, 4
    %v1513 = vadd.f32 %v210, %v1512
    %v1514 = vrot.slane %v1513, 2
    %v1515 = vadd.f32 %v1513, %v1514
    %v1516 = vrot.slane %v1515, 1
    %v1517 = vadd.f32 %v1515, %v1516
    %v1518 = vrot.slane %v211, 4
    %v1519 = vadd.f32 %v211, %v1518
    %v1520 = vrot.slane %v1519, 2
    %v1521 = vadd.f32 %v1519, %v1520
    %v1522 = vrot.slane %v1521, 1
    %v1523 = vadd.f32 %v1521, %v1522
    %v1524 = vrot.slane %v212, 4
    %v1525 = vadd.f32 %v212, %v1524
    %v1526 = vrot.slane %v1525, 2
    %v1527 = vadd.f32 %v1525, %v1526
    %v1528 = vrot.slane %v1527, 1
    %v1529 = vadd.f32 %v1527, %v1528
    %v1530 = vrot.slane %v213, 4
    %v1531 = vadd.f32 %v213, %v1530
    %v1532 = vrot.slane %v1531, 2
    %v1533 = vadd.f32 %v1531, %v1532
    %v1534 = vrot.slane %v1533, 1
    %v1535 = vadd.f32 %v1533, %v1534
    %v1536 = vrot.slane %v214, 4
    %v1537 = vadd.f32 %v214, %v1536
    %v1538 = vrot.slane %v1537, 2
    %v1539 = vadd.f32 %v1537, %v1538
    %v1540 = vrot.slane %v1539, 1
    %v1541 = vadd.f32 %v1539, %v1540
    %v1542 = vrot.slane %v215, 4
    %v1543 = vadd.f32 %v215, %v1542
    %v1544 = vrot.slane %v1543, 2
    %v1545 = vadd.f32 %v1543, %v1544
    %v1546 = vrot.slane %v1545, 1
    %v1547 = vadd.f32 %v1545, %v1546
    %v1548 = vrot.slane %v216, 4
    %v1549 = vadd.f32 %v216, %v1548
    %v1550 = vrot.slane %v1549, 2
    %v1551 = vadd.f32 %v1549, %v1550
    %v1552 = vrot.slane %v1551, 1
    %v1553 = vadd.f32 %v1551, %v1552
    %v1554 = vrot.slane %v217, 4
    %v1555 = vadd.f32 %v217, %v1554
    %v1556 = vrot.slane %v1555, 2
    %v1557 = vadd.f32 %v1555, %v1556
    %v1558 = vrot.slane %v1557, 1
    %v1559 = vadd.f32 %v1557, %v1558
    %v1560 = vrot.slane %v218, 4
    %v1561 = vadd.f32 %v218, %v1560
    %v1562 = vrot.slane %v1561, 2
    %v1563 = vadd.f32 %v1561, %v1562
    %v1564 = vrot.slane %v1563, 1
    %v1565 = vadd.f32 %v1563, %v1564
    %v1566 = vrot.slane %v219, 4
    %v1567 = vadd.f32 %v219, %v1566
    %v1568 = vrot.slane %v1567, 2
    %v1569 = vadd.f32 %v1567, %v1568
    %v1570 = vrot.slane %v1569, 1
    %v1571 = vadd.f32 %v1569, %v1570
    %v1572 = vrot.slane %v220, 4
    %v1573 = vadd.f32 %v220, %v1572
    %v1574 = vrot.slane %v1573, 2
    %v1575 = vadd.f32 %v1573, %v1574
    %v1576 = vrot.slane %v1575, 1
    %v1577 = vadd.f32 %v1575, %v1576
    %v1578 = vrot.slane %v221, 4
    %v1579 = vadd.f32 %v221, %v1578
    %v1580 = vrot.slane %v1579, 2
    %v1581 = vadd.f32 %v1579, %v1580
    %v1582 = vrot.slane %v1581, 1
    %v1583 = vadd.f32 %v1581, %v1582
    %v1584 = vrot.slane %v222, 4
    %v1585 = vadd.f32 %v222, %v1584
    %v1586 = vrot.slane %v1585, 2
    %v1587 = vadd.f32 %v1585, %v1586
    %v1588 = vrot.slane %v1587, 1
    %v1589 = vadd.f32 %v1587, %v1588
    %v1590 = vrot.slane %v223, 4
    %v1591 = vadd.f32 %v223, %v1590
    %v1592 = vrot.slane %v1591, 2
    %v1593 = vadd.f32 %v1591, %v1592
    %v1594 = vrot.slane %v1593, 1
    %v1595 = vadd.f32 %v1593, %v1594
    %v1596 = vrot.slane %v224, 4
    %v1597 = vadd.f32 %v224, %v1596
    %v1598 = vrot.slane %v1597, 2
    %v1599 = vadd.f32 %v1597, %v1598
    %v1600 = vrot.slane %v1599, 1
    %v1601 = vadd.f32 %v1599, %v1600
    %v1602 = vrot.slane %v225, 4
    %v1603 = vadd.f32 %v225, %v1602
    %v1604 = vrot.slane %v1603, 2
    %v1605 = vadd.f32 %v1603, %v1604
    %v1606 = vrot.slane %v1605, 1
    %v1607 = vadd.f32 %v1605, %v1606
    %v1608 = vrot.slane %v226, 4
    %v1609 = vadd.f32 %v226, %v1608
    %v1610 = vrot.slane %v1609, 2
    %v1611 = vadd.f32 %v1609, %v1610
    %v1612 = vrot.slane %v1611, 1
    %v1613 = vadd.f32 %v1611, %v1612
    %v1614 = vrot.slane %v227, 4
    %v1615 = vadd.f32 %v227, %v1614
    %v1616 = vrot.slane %v1615, 2
    %v1617 = vadd.f32 %v1615, %v1616
    %v1618 = vrot.slane %v1617, 1
    %v1619 = vadd.f32 %v1617, %v1618
    %v1620 = vrot.slane %v228, 4
    %v1621 = vadd.f32 %v228, %v1620
    %v1622 = vrot.slane %v1621, 2
    %v1623 = vadd.f32 %v1621, %v1622
    %v1624 = vrot.slane %v1623, 1
    %v1625 = vadd.f32 %v1623, %v1624
    %v1626 = vrot.slane %v229, 4
    %v1627 = vadd.f32 %v229, %v1626
    %v1628 = vrot.slane %v1627, 2
    %v1629 = vadd.f32 %v1627, %v1628
    %v1630 = vrot.slane %v1629, 1
    %v1631 = vadd.f32 %v1629, %v1630
    %v1632 = vrot.slane %v230, 4
    %v1633 = vadd.f32 %v230, %v1632
    %v1634 = vrot.slane %v1633, 2
    %v1635 = vadd.f32 %v1633, %v1634
    %v1636 = vrot.slane %v1635, 1
    %v1637 = vadd.f32 %v1635, %v1636
    %v1638 = vrot.slane %v231, 4
    %v1639 = vadd.f32 %v231, %v1638
    %v1640 = vrot.slane %v1639, 2
    %v1641 = vadd.f32 %v1639, %v1640
    %v1642 = vrot.slane %v1641, 1
    %v1643 = vadd.f32 %v1641, %v1642
    %v1644 = vrot.slane %v232, 4
    %v1645 = vadd.f32 %v232, %v1644
    %v1646 = vrot.slane %v1645, 2
    %v1647 = vadd.f32 %v1645, %v1646
    %v1648 = vrot.slane %v1647, 1
    %v1649 = vadd.f32 %v1647, %v1648
    %v1650 = vrot.slane %v233, 4
    %v1651 = vadd.f32 %v233, %v1650
    %v1652 = vrot.slane %v1651, 2
    %v1653 = vadd.f32 %v1651, %v1652
    %v1654 = vrot.slane %v1653, 1
    %v1655 = vadd.f32 %v1653, %v1654
    %v1656 = vrot.slane %v234, 4
    %v1657 = vadd.f32 %v234, %v1656
    %v1658 = vrot.slane %v1657, 2
    %v1659 = vadd.f32 %v1657, %v1658
    %v1660 = vrot.slane %v1659, 1
    %v1661 = vadd.f32 %v1659, %v1660
    %v1662 = vrot.slane %v235, 4
    %v1663 = vadd.f32 %v235, %v1662
    %v1664 = vrot.slane %v1663, 2
    %v1665 = vadd.f32 %v1663, %v1664
    %v1666 = vrot.slane %v1665, 1
    %v1667 = vadd.f32 %v1665, %v1666
    %v1668 = vrot.slane %v236, 4
    %v1669 = vadd.f32 %v236, %v1668
    %v1670 = vrot.slane %v1669, 2
    %v1671 = vadd.f32 %v1669, %v1670
    %v1672 = vrot.slane %v1671, 1
    %v1673 = vadd.f32 %v1671, %v1672
    %v1674 = vrot.slane %v237, 4
    %v1675 = vadd.f32 %v237, %v1674
    %v1676 = vrot.slane %v1675, 2
    %v1677 = vadd.f32 %v1675, %v1676
    %v1678 = vrot.slane %v1677, 1
    %v1679 = vadd.f32 %v1677, %v1678
    %v1680 = vrot.slane %v238, 4
    %v1681 = vadd.f32 %v238, %v1680
    %v1682 = vrot.slane %v1681, 2
    %v1683 = vadd.f32 %v1681, %v1682
    %v1684 = vrot.slane %v1683, 1
    %v1685 = vadd.f32 %v1683, %v1684
    %v1686 = vrot.slane %v239, 4
    %v1687 = vadd.f32 %v239, %v1686
    %v1688 = vrot.slane %v1687, 2
    %v1689 = vadd.f32 %v1687, %v1688
    %v1690 = vrot.slane %v1689, 1
    %v1691 = vadd.f32 %v1689, %v1690
    %v1692 = vrot.slane %v240, 4
    %v1693 = vadd.f32 %v240, %v1692
    %v1694 = vrot.slane %v1693, 2
    %v1695 = vadd.f32 %v1693, %v1694
    %v1696 = vrot.slane %v1695, 1
    %v1697 = vadd.f32 %v1695, %v1696
    %v1698 = vrot.slane %v241, 4
    %v1699 = vadd.f32 %v241, %v1698
    %v1700 = vrot.slane %v1699, 2
    %v1701 = vadd.f32 %v1699, %v1700
    %v1702 = vrot.slane %v1701, 1
    %v1703 = vadd.f32 %v1701, %v1702
    %v1704 = vrot.slane %v242, 4
    %v1705 = vadd.f32 %v242, %v1704
    %v1706 = vrot.slane %v1705, 2
    %v1707 = vadd.f32 %v1705, %v1706
    %v1708 = vrot.slane %v1707, 1
    %v1709 = vadd.f32 %v1707, %v1708
    %v1710 = vrot.slane %v243, 4
    %v1711 = vadd.f32 %v243, %v1710
    %v1712 = vrot.slane %v1711, 2
    %v1713 = vadd.f32 %v1711, %v1712
    %v1714 = vrot.slane %v1713, 1
    %v1715 = vadd.f32 %v1713, %v1714
    %v1716 = vrot.slane %v244, 4
    %v1717 = vadd.f32 %v244, %v1716
    %v1718 = vrot.slane %v1717, 2
    %v1719 = vadd.f32 %v1717, %v1718
    %v1720 = vrot.slane %v1719, 1
    %v1721 = vadd.f32 %v1719, %v1720
    %v1722 = vrot.slane %v245, 4
    %v1723 = vadd.f32 %v245, %v1722
    %v1724 = vrot.slane %v1723, 2
    %v1725 = vadd.f32 %v1723, %v1724
    %v1726 = vrot.slane %v1725, 1
    %v1727 = vadd.f32 %v1725, %v1726
    %v1728 = vrot.slane %v246, 4
    %v1729 = vadd.f32 %v246, %v1728
    %v1730 = vrot.slane %v1729, 2
    %v1731 = vadd.f32 %v1729, %v1730
    %v1732 = vrot.slane %v1731, 1
    %v1733 = vadd.f32 %v1731, %v1732
    %v1734 = vrot.slane %v247, 4
    %v1735 = vadd.f32 %v247, %v1734
    %v1736 = vrot.slane %v1735, 2
    %v1737 = vadd.f32 %v1735, %v1736
    %v1738 = vrot.slane %v1737, 1
    %v1739 = vadd.f32 %v1737, %v1738
    %v1740 = vrot.slane %v248, 4
    %v1741 = vadd.f32 %v248, %v1740
    %v1742 = vrot.slane %v1741, 2
    %v1743 = vadd.f32 %v1741, %v1742
    %v1744 = vrot.slane %v1743, 1
    %v1745 = vadd.f32 %v1743, %v1744
    %v1746 = vrot.slane %v249, 4
    %v1747 = vadd.f32 %v249, %v1746
    %v1748 = vrot.slane %v1747, 2
    %v1749 = vadd.f32 %v1747, %v1748
    %v1750 = vrot.slane %v1749, 1
    %v1751 = vadd.f32 %v1749, %v1750
    %v1752 = vrot.slane %v250, 4
    %v1753 = vadd.f32 %v250, %v1752
    %v1754 = vrot.slane %v1753, 2
    %v1755 = vadd.f32 %v1753, %v1754
    %v1756 = vrot.slane %v1755, 1
    %v1757 = vadd.f32 %v1755, %v1756
    %v1758 = vrot.slane %v251, 4
    %v1759 = vadd.f32 %v251, %v1758
    %v1760 = vrot.slane %v1759, 2
    %v1761 = vadd.f32 %v1759, %v1760
    %v1762 = vrot.slane %v1761, 1
    %v1763 = vadd.f32 %v1761, %v1762
    %v1764 = vrot.slane %v252, 4
    %v1765 = vadd.f32 %v252, %v1764
    %v1766 = vrot.slane %v1765, 2
    %v1767 = vadd.f32 %v1765, %v1766
    %v1768 = vrot.slane %v1767, 1
    %v1769 = vadd.f32 %v1767, %v1768
    %v1770 = vrot.slane %v253, 4
    %v1771 = vadd.f32 %v253, %v1770
    %v1772 = vrot.slane %v1771, 2
    %v1773 = vadd.f32 %v1771, %v1772
    %v1774 = vrot.slane %v1773, 1
    %v1775 = vadd.f32 %v1773, %v1774
    %v1776 = vrot.slane %v254, 4
    %v1777 = vadd.f32 %v254, %v1776
    %v1778 = vrot.slane %v1777, 2
    %v1779 = vadd.f32 %v1777, %v1778
    %v1780 = vrot.slane %v1779, 1
    %v1781 = vadd.f32 %v1779, %v1780
    %v1782 = vrot.slane %v255, 4
    %v1783 = vadd.f32 %v255, %v1782
    %v1784 = vrot.slane %v1783, 2
    %v1785 = vadd.f32 %v1783, %v1784
    %v1786 = vrot.slane %v1785, 1
    %v1787 = vadd.f32 %v1785, %v1786
    %v1788 = vrot.slane %v256, 4
    %v1789 = vadd.f32 %v256, %v1788
    %v1790 = vrot.slane %v1789, 2
    %v1791 = vadd.f32 %v1789, %v1790
    %v1792 = vrot.slane %v1791, 1
    %v1793 = vadd.f32 %v1791, %v1792
    %v1794 = vrot.slane %v257, 4
    %v1795 = vadd.f32 %v257, %v1794
    %v1796 = vrot.slane %v1795, 2
    %v1797 = vadd.f32 %v1795, %v1796
    %v1798 = vrot.slane %v1797, 1
    %v1799 = vadd.f32 %v1797, %v1798
    %v1800 = vrot.slane %v258, 4
    %v1801 = vadd.f32 %v258, %v1800
    %v1802 = vrot.slane %v1801, 2
    %v1803 = vadd.f32 %v1801, %v1802
    %v1804 = vrot.slane %v1803, 1
    %v1805 = vadd.f32 %v1803, %v1804
    %v1806 = vrot.slane %v259, 4
    %v1807 = vadd.f32 %v259, %v1806
    %v1808 = vrot.slane %v1807, 2
    %v1809 = vadd.f32 %v1807, %v1808
    %v1810 = vrot.slane %v1809, 1
    %v1811 = vadd.f32 %v1809, %v1810
    %v1812 = vrot.slane %v260, 4
    %v1813 = vadd.f32 %v260, %v1812
    %v1814 = vrot.slane %v1813, 2
    %v1815 = vadd.f32 %v1813, %v1814
    %v1816 = vrot.slane %v1815, 1
    %v1817 = vadd.f32 %v1815, %v1816
    %v1818 = vrot.slane %v261, 4
    %v1819 = vadd.f32 %v261, %v1818
    %v1820 = vrot.slane %v1819, 2
    %v1821 = vadd.f32 %v1819, %v1820
    %v1822 = vrot.slane %v1821, 1
    %v1823 = vadd.f32 %v1821, %v1822
    %v1824 = vrot.slane %v262, 4
    %v1825 = vadd.f32 %v262, %v1824
    %v1826 = vrot.slane %v1825, 2
    %v1827 = vadd.f32 %v1825, %v1826
    %v1828 = vrot.slane %v1827, 1
    %v1829 = vadd.f32 %v1827, %v1828
    %v1830 = vrot.slane %v263, 4
    %v1831 = vadd.f32 %v263, %v1830
    %v1832 = vrot.slane %v1831, 2
    %v1833 = vadd.f32 %v1831, %v1832
    %v1834 = vrot.slane %v1833, 1
    %v1835 = vadd.f32 %v1833, %v1834
    %v1836 = vrot.slane %v264, 4
    %v1837 = vadd.f32 %v264, %v1836
    %v1838 = vrot.slane %v1837, 2
    %v1839 = vadd.f32 %v1837, %v1838
    %v1840 = vrot.slane %v1839, 1
    %v1841 = vadd.f32 %v1839, %v1840
    %v1842 = vrot.slane %v265, 4
    %v1843 = vadd.f32 %v265, %v1842
    %v1844 = vrot.slane %v1843, 2
    %v1845 = vadd.f32 %v1843, %v1844
    %v1846 = vrot.slane %v1845, 1
    %v1847 = vadd.f32 %v1845, %v1846
    %v1848 = vrot.slane %v266, 4
    %v1849 = vadd.f32 %v266, %v1848
    %v1850 = vrot.slane %v1849, 2
    %v1851 = vadd.f32 %v1849, %v1850
    %v1852 = vrot.slane %v1851, 1
    %v1853 = vadd.f32 %v1851, %v1852
    %v1854 = vrot.slane %v267, 4
    %v1855 = vadd.f32 %v267, %v1854
    %v1856 = vrot.slane %v1855, 2
    %v1857 = vadd.f32 %v1855, %v1856
    %v1858 = vrot.slane %v1857, 1
    %v1859 = vadd.f32 %v1857, %v1858
    %v1860 = vrot.slane %v268, 4
    %v1861 = vadd.f32 %v268, %v1860
    %v1862 = vrot.slane %v1861, 2
    %v1863 = vadd.f32 %v1861, %v1862
    %v1864 = vrot.slane %v1863, 1
    %v1865 = vadd.f32 %v1863, %v1864
    %v1866 = vrot.slane %v269, 4
    %v1867 = vadd.f32 %v269, %v1866
    %v1868 = vrot.slane %v1867, 2
    %v1869 = vadd.f32 %v1867, %v1868
    %v1870 = vrot.slane %v1869, 1
    %v1871 = vadd.f32 %v1869, %v1870
    %v1872 = vrot.slane %v270, 4
    %v1873 = vadd.f32 %v270, %v1872
    %v1874 = vrot.slane %v1873, 2
    %v1875 = vadd.f32 %v1873, %v1874
    %v1876 = vrot.slane %v1875, 1
    %v1877 = vadd.f32 %v1875, %v1876
    %v1878 = vrot.slane %v271, 4
    %v1879 = vadd.f32 %v271, %v1878
    %v1880 = vrot.slane %v1879, 2
    %v1881 = vadd.f32 %v1879, %v1880
    %v1882 = vrot.slane %v1881, 1
    %v1883 = vadd.f32 %v1881, %v1882
    %v1884 = vrot.slane %v272, 4
    %v1885 = vadd.f32 %v272, %v1884
    %v1886 = vrot.slane %v1885, 2
    %v1887 = vadd.f32 %v1885, %v1886
    %v1888 = vrot.slane %v1887, 1
    %v1889 = vadd.f32 %v1887, %v1888
    %v1890 = vrot.slane %v273, 4
    %v1891 = vadd.f32 %v273, %v1890
    %v1892 = vrot.slane %v1891, 2
    %v1893 = vadd.f32 %v1891, %v1892
    %v1894 = vrot.slane %v1893, 1
    %v1895 = vadd.f32 %v1893, %v1894
    %v1896 = vrot.slane %v274, 4
    %v1897 = vadd.f32 %v274, %v1896
    %v1898 = vrot.slane %v1897, 2
    %v1899 = vadd.f32 %v1897, %v1898
    %v1900 = vrot.slane %v1899, 1
    %v1901 = vadd.f32 %v1899, %v1900
    %v1902 = vrot.slane %v275, 4
    %v1903 = vadd.f32 %v275, %v1902
    %v1904 = vrot.slane %v1903, 2
    %v1905 = vadd.f32 %v1903, %v1904
    %v1906 = vrot.slane %v1905, 1
    %v1907 = vadd.f32 %v1905, %v1906
    %v1908 = vrot.slane %v276, 4
    %v1909 = vadd.f32 %v276, %v1908
    %v1910 = vrot.slane %v1909, 2
    %v1911 = vadd.f32 %v1909, %v1910
    %v1912 = vrot.slane %v1911, 1
    %v1913 = vadd.f32 %v1911, %v1912
    %v1914 = vrot.slane %v277, 4
    %v1915 = vadd.f32 %v277, %v1914
    %v1916 = vrot.slane %v1915, 2
    %v1917 = vadd.f32 %v1915, %v1916
    %v1918 = vrot.slane %v1917, 1
    %v1919 = vadd.f32 %v1917, %v1918
    %v1920 = vrot.slane %v278, 4
    %v1921 = vadd.f32 %v278, %v1920
    %v1922 = vrot.slane %v1921, 2
    %v1923 = vadd.f32 %v1921, %v1922
    %v1924 = vrot.slane %v1923, 1
    %v1925 = vadd.f32 %v1923, %v1924
    %v1926 = vrot.slane %v279, 4
    %v1927 = vadd.f32 %v279, %v1926
    %v1928 = vrot.slane %v1927, 2
    %v1929 = vadd.f32 %v1927, %v1928
    %v1930 = vrot.slane %v1929, 1
    %v1931 = vadd.f32 %v1929, %v1930
    %v1932 = vrot.slane %v280, 4
    %v1933 = vadd.f32 %v280, %v1932
    %v1934 = vrot.slane %v1933, 2
    %v1935 = vadd.f32 %v1933, %v1934
    %v1936 = vrot.slane %v1935, 1
    %v1937 = vadd.f32 %v1935, %v1936
    %v1938 = vrot.slane %v281, 4
    %v1939 = vadd.f32 %v281, %v1938
    %v1940 = vrot.slane %v1939, 2
    %v1941 = vadd.f32 %v1939, %v1940
    %v1942 = vrot.slane %v1941, 1
    %v1943 = vadd.f32 %v1941, %v1942
    %v1944 = vrot.slane %v282, 4
    %v1945 = vadd.f32 %v282, %v1944
    %v1946 = vrot.slane %v1945, 2
    %v1947 = vadd.f32 %v1945, %v1946
    %v1948 = vrot.slane %v1947, 1
    %v1949 = vadd.f32 %v1947, %v1948
    %v1950 = vrot.slane %v283, 4
    %v1951 = vadd.f32 %v283, %v1950
    %v1952 = vrot.slane %v1951, 2
    %v1953 = vadd.f32 %v1951, %v1952
    %v1954 = vrot.slane %v1953, 1
    %v1955 = vadd.f32 %v1953, %v1954
    %v1956 = vrot.slane %v284, 4
    %v1957 = vadd.f32 %v284, %v1956
    %v1958 = vrot.slane %v1957, 2
    %v1959 = vadd.f32 %v1957, %v1958
    %v1960 = vrot.slane %v1959, 1
    %v1961 = vadd.f32 %v1959, %v1960
    %v1962 = vrot.slane %v285, 4
    %v1963 = vadd.f32 %v285, %v1962
    %v1964 = vrot.slane %v1963, 2
    %v1965 = vadd.f32 %v1963, %v1964
    %v1966 = vrot.slane %v1965, 1
    %v1967 = vadd.f32 %v1965, %v1966
    %v1968 = vrot.slane %v286, 4
    %v1969 = vadd.f32 %v286, %v1968
    %v1970 = vrot.slane %v1969, 2
    %v1971 = vadd.f32 %v1969, %v1970
    %v1972 = vrot.slane %v1971, 1
    %v1973 = vadd.f32 %v1971, %v1972
    %v1974 = vrot.slane %v287, 4
    %v1975 = vadd.f32 %v287, %v1974
    %v1976 = vrot.slane %v1975, 2
    %v1977 = vadd.f32 %v1975, %v1976
    %v1978 = vrot.slane %v1977, 1
    %v1979 = vadd.f32 %v1977, %v1978
    %v1980 = vrot.slane %v288, 4
    %v1981 = vadd.f32 %v288, %v1980
    %v1982 = vrot.slane %v1981, 2
    %v1983 = vadd.f32 %v1981, %v1982
    %v1984 = vrot.slane %v1983, 1
    %v1985 = vadd.f32 %v1983, %v1984
    %v1986 = vrot.slane %v289, 4
    %v1987 = vadd.f32 %v289, %v1986
    %v1988 = vrot.slane %v1987, 2
    %v1989 = vadd.f32 %v1987, %v1988
    %v1990 = vrot.slane %v1989, 1
    %v1991 = vadd.f32 %v1989, %v1990
    %v1992 = vrot.slane %v290, 4
    %v1993 = vadd.f32 %v290, %v1992
    %v1994 = vrot.slane %v1993, 2
    %v1995 = vadd.f32 %v1993, %v1994
    %v1996 = vrot.slane %v1995, 1
    %v1997 = vadd.f32 %v1995, %v1996
    %v1998 = vrot.slane %v291, 4
    %v1999 = vadd.f32 %v291, %v1998
    %v2000 = vrot.slane %v1999, 2
    %v2001 = vadd.f32 %v1999, %v2000
    %v2002 = vrot.slane %v2001, 1
    %v2003 = vadd.f32 %v2001, %v2002
    %v2004 = vrot.slane %v292, 4
    %v2005 = vadd.f32 %v292, %v2004
    %v2006 = vrot.slane %v2005, 2
    %v2007 = vadd.f32 %v2005, %v2006
    %v2008 = vrot.slane %v2007, 1
    %v2009 = vadd.f32 %v2007, %v2008
    %v2010 = vrot.slane %v293, 4
    %v2011 = vadd.f32 %v293, %v2010
    %v2012 = vrot.slane %v2011, 2
    %v2013 = vadd.f32 %v2011, %v2012
    %v2014 = vrot.slane %v2013, 1
    %v2015 = vadd.f32 %v2013, %v2014
    %v2016 = vrot.slane %v294, 4
    %v2017 = vadd.f32 %v294, %v2016
    %v2018 = vrot.slane %v2017, 2
    %v2019 = vadd.f32 %v2017, %v2018
    %v2020 = vrot.slane %v2019, 1
    %v2021 = vadd.f32 %v2019, %v2020
    %v2022 = vrot.slane %v295, 4
    %v2023 = vadd.f32 %v295, %v2022
    %v2024 = vrot.slane %v2023, 2
    %v2025 = vadd.f32 %v2023, %v2024
    %v2026 = vrot.slane %v2025, 1
    %v2027 = vadd.f32 %v2025, %v2026
    %v2028 = vrot.slane %v296, 4
    %v2029 = vadd.f32 %v296, %v2028
    %v2030 = vrot.slane %v2029, 2
    %v2031 = vadd.f32 %v2029, %v2030
    %v2032 = vrot.slane %v2031, 1
    %v2033 = vadd.f32 %v2031, %v2032
    %v2034 = vrot.slane %v297, 4
    %v2035 = vadd.f32 %v297, %v2034
    %v2036 = vrot.slane %v2035, 2
    %v2037 = vadd.f32 %v2035, %v2036
    %v2038 = vrot.slane %v2037, 1
    %v2039 = vadd.f32 %v2037, %v2038
    %v2040 = vrot.slane %v298, 4
    %v2041 = vadd.f32 %v298, %v2040
    %v2042 = vrot.slane %v2041, 2
    %v2043 = vadd.f32 %v2041, %v2042
    %v2044 = vrot.slane %v2043, 1
    %v2045 = vadd.f32 %v2043, %v2044
    %v2046 = vrot.slane %v299, 4
    %v2047 = vadd.f32 %v299, %v2046
    %v2048 = vrot.slane %v2047, 2
    %v2049 = vadd.f32 %v2047, %v2048
    %v2050 = vrot.slane %v2049, 1
    %v2051 = vadd.f32 %v2049, %v2050
    %v2052 = vrot.slane %v300, 4
    %v2053 = vadd.f32 %v300, %v2052
    %v2054 = vrot.slane %v2053, 2
    %v2055 = vadd.f32 %v2053, %v2054
    %v2056 = vrot.slane %v2055, 1
    %v2057 = vadd.f32 %v2055, %v2056
    %v2058 = vrot.slane %v301, 4
    %v2059 = vadd.f32 %v301, %v2058
    %v2060 = vrot.slane %v2059, 2
    %v2061 = vadd.f32 %v2059, %v2060
    %v2062 = vrot.slane %v2061, 1
    %v2063 = vadd.f32 %v2061, %v2062
    %v2064 = vrot.slane %v302, 4
    %v2065 = vadd.f32 %v302, %v2064
    %v2066 = vrot.slane %v2065, 2
    %v2067 = vadd.f32 %v2065, %v2066
    %v2068 = vrot.slane %v2067, 1
    %v2069 = vadd.f32 %v2067, %v2068
    %v2070 = vrot.slane %v303, 4
    %v2071 = vadd.f32 %v303, %v2070
    %v2072 = vrot.slane %v2071, 2
    %v2073 = vadd.f32 %v2071, %v2072
    %v2074 = vrot.slane %v2073, 1
    %v2075 = vadd.f32 %v2073, %v2074
    %v2076 = vrot.slane %v304, 4
    %v2077 = vadd.f32 %v304, %v2076
    %v2078 = vrot.slane %v2077, 2
    %v2079 = vadd.f32 %v2077, %v2078
    %v2080 = vrot.slane %v2079, 1
    %v2081 = vadd.f32 %v2079, %v2080
    %v2082 = vrot.slane %v305, 4
    %v2083 = vadd.f32 %v305, %v2082
    %v2084 = vrot.slane %v2083, 2
    %v2085 = vadd.f32 %v2083, %v2084
    %v2086 = vrot.slane %v2085, 1
    %v2087 = vadd.f32 %v2085, %v2086
    %v2088 = vrot.slane %v306, 4
    %v2089 = vadd.f32 %v306, %v2088
    %v2090 = vrot.slane %v2089, 2
    %v2091 = vadd.f32 %v2089, %v2090
    %v2092 = vrot.slane %v2091, 1
    %v2093 = vadd.f32 %v2091, %v2092
    %v2094 = vrot.slane %v307, 4
    %v2095 = vadd.f32 %v307, %v2094
    %v2096 = vrot.slane %v2095, 2
    %v2097 = vadd.f32 %v2095, %v2096
    %v2098 = vrot.slane %v2097, 1
    %v2099 = vadd.f32 %v2097, %v2098
    %v2100 = vrot.slane %v308, 4
    %v2101 = vadd.f32 %v308, %v2100
    %v2102 = vrot.slane %v2101, 2
    %v2103 = vadd.f32 %v2101, %v2102
    %v2104 = vrot.slane %v2103, 1
    %v2105 = vadd.f32 %v2103, %v2104
    %v2106 = vrot.slane %v309, 4
    %v2107 = vadd.f32 %v309, %v2106
    %v2108 = vrot.slane %v2107, 2
    %v2109 = vadd.f32 %v2107, %v2108
    %v2110 = vrot.slane %v2109, 1
    %v2111 = vadd.f32 %v2109, %v2110
    %v2112 = vrot.slane %v310, 4
    %v2113 = vadd.f32 %v310, %v2112
    %v2114 = vrot.slane %v2113, 2
    %v2115 = vadd.f32 %v2113, %v2114
    %v2116 = vrot.slane %v2115, 1
    %v2117 = vadd.f32 %v2115, %v2116
    %v2118 = vrot.slane %v311, 4
    %v2119 = vadd.f32 %v311, %v2118
    %v2120 = vrot.slane %v2119, 2
    %v2121 = vadd.f32 %v2119, %v2120
    %v2122 = vrot.slane %v2121, 1
    %v2123 = vadd.f32 %v2121, %v2122
    %v2124 = vrot.slane %v312, 4
    %v2125 = vadd.f32 %v312, %v2124
    %v2126 = vrot.slane %v2125, 2
    %v2127 = vadd.f32 %v2125, %v2126
    %v2128 = vrot.slane %v2127, 1
    %v2129 = vadd.f32 %v2127, %v2128
    %v2130 = vrot.slane %v313, 4
    %v2131 = vadd.f32 %v313, %v2130
    %v2132 = vrot.slane %v2131, 2
    %v2133 = vadd.f32 %v2131, %v2132
    %v2134 = vrot.slane %v2133, 1
    %v2135 = vadd.f32 %v2133, %v2134
    %v2136 = vrot.slane %v314, 4
    %v2137 = vadd.f32 %v314, %v2136
    %v2138 = vrot.slane %v2137, 2
    %v2139 = vadd.f32 %v2137, %v2138
    %v2140 = vrot.slane %v2139, 1
    %v2141 = vadd.f32 %v2139, %v2140
    %v2142 = vrot.slane %v315, 4
    %v2143 = vadd.f32 %v315, %v2142
    %v2144 = vrot.slane %v2143, 2
    %v2145 = vadd.f32 %v2143, %v2144
    %v2146 = vrot.slane %v2145, 1
    %v2147 = vadd.f32 %v2145, %v2146
    %v2148 = vrot.slane %v316, 4
    %v2149 = vadd.f32 %v316, %v2148
    %v2150 = vrot.slane %v2149, 2
    %v2151 = vadd.f32 %v2149, %v2150
    %v2152 = vrot.slane %v2151, 1
    %v2153 = vadd.f32 %v2151, %v2152
    %v2154 = vrot.slane %v317, 4
    %v2155 = vadd.f32 %v317, %v2154
    %v2156 = vrot.slane %v2155, 2
    %v2157 = vadd.f32 %v2155, %v2156
    %v2158 = vrot.slane %v2157, 1
    %v2159 = vadd.f32 %v2157, %v2158
    %v2160 = vrot.slane %v318, 4
    %v2161 = vadd.f32 %v318, %v2160
    %v2162 = vrot.slane %v2161, 2
    %v2163 = vadd.f32 %v2161, %v2162
    %v2164 = vrot.slane %v2163, 1
    %v2165 = vadd.f32 %v2163, %v2164
    %v2166 = vrot.slane %v319, 4
    %v2167 = vadd.f32 %v319, %v2166
    %v2168 = vrot.slane %v2167, 2
    %v2169 = vadd.f32 %v2167, %v2168
    %v2170 = vrot.slane %v2169, 1
    %v2171 = vadd.f32 %v2169, %v2170
    %v2172 = vrot.slane %v320, 4
    %v2173 = vadd.f32 %v320, %v2172
    %v2174 = vrot.slane %v2173, 2
    %v2175 = vadd.f32 %v2173, %v2174
    %v2176 = vrot.slane %v2175, 1
    %v2177 = vadd.f32 %v2175, %v2176
    %v2178 = vrot.slane %v321, 4
    %v2179 = vadd.f32 %v321, %v2178
    %v2180 = vrot.slane %v2179, 2
    %v2181 = vadd.f32 %v2179, %v2180
    %v2182 = vrot.slane %v2181, 1
    %v2183 = vadd.f32 %v2181, %v2182
    %v2184 = vrot.slane %v322, 4
    %v2185 = vadd.f32 %v322, %v2184
    %v2186 = vrot.slane %v2185, 2
    %v2187 = vadd.f32 %v2185, %v2186
    %v2188 = vrot.slane %v2187, 1
    %v2189 = vadd.f32 %v2187, %v2188
    %v2190 = vrot.slane %v323, 4
    %v2191 = vadd.f32 %v323, %v2190
    %v2192 = vrot.slane %v2191, 2
    %v2193 = vadd.f32 %v2191, %v2192
    %v2194 = vrot.slane %v2193, 1
    %v2195 = vadd.f32 %v2193, %v2194
    %v2196 = vrot.slane %v324, 4
    %v2197 = vadd.f32 %v324, %v2196
    %v2198 = vrot.slane %v2197, 2
    %v2199 = vadd.f32 %v2197, %v2198
    %v2200 = vrot.slane %v2199, 1
    %v2201 = vadd.f32 %v2199, %v2200
    %v2202 = vrot.slane %v325, 4
    %v2203 = vadd.f32 %v325, %v2202
    %v2204 = vrot.slane %v2203, 2
    %v2205 = vadd.f32 %v2203, %v2204
    %v2206 = vrot.slane %v2205, 1
    %v2207 = vadd.f32 %v2205, %v2206
    %v2208 = vrot.slane %v326, 4
    %v2209 = vadd.f32 %v326, %v2208
    %v2210 = vrot.slane %v2209, 2
    %v2211 = vadd.f32 %v2209, %v2210
    %v2212 = vrot.slane %v2211, 1
    %v2213 = vadd.f32 %v2211, %v2212
    %v2214 = vrot.slane %v327, 4
    %v2215 = vadd.f32 %v327, %v2214
    %v2216 = vrot.slane %v2215, 2
    %v2217 = vadd.f32 %v2215, %v2216
    %v2218 = vrot.slane %v2217, 1
    %v2219 = vadd.f32 %v2217, %v2218
    %v2220 = vrot.slane %v328, 4
    %v2221 = vadd.f32 %v328, %v2220
    %v2222 = vrot.slane %v2221, 2
    %v2223 = vadd.f32 %v2221, %v2222
    %v2224 = vrot.slane %v2223, 1
    %v2225 = vadd.f32 %v2223, %v2224
    %v2226 = vrot.slane %v329, 4
    %v2227 = vadd.f32 %v329, %v2226
    %v2228 = vrot.slane %v2227, 2
    %v2229 = vadd.f32 %v2227, %v2228
    %v2230 = vrot.slane %v2229, 1
    %v2231 = vadd.f32 %v2229, %v2230
    %v2232 = vrot.slane %v330, 4
    %v2233 = vadd.f32 %v330, %v2232
    %v2234 = vrot.slane %v2233, 2
    %v2235 = vadd.f32 %v2233, %v2234
    %v2236 = vrot.slane %v2235, 1
    %v2237 = vadd.f32 %v2235, %v2236
    %v2238 = vrot.slane %v331, 4
    %v2239 = vadd.f32 %v331, %v2238
    %v2240 = vrot.slane %v2239, 2
    %v2241 = vadd.f32 %v2239, %v2240
    %v2242 = vrot.slane %v2241, 1
    %v2243 = vadd.f32 %v2241, %v2242
    %v2244 = vrot.slane %v332, 4
    %v2245 = vadd.f32 %v332, %v2244
    %v2246 = vrot.slane %v2245, 2
    %v2247 = vadd.f32 %v2245, %v2246
    %v2248 = vrot.slane %v2247, 1
    %v2249 = vadd.f32 %v2247, %v2248
    %v2250 = vrot.slane %v333, 4
    %v2251 = vadd.f32 %v333, %v2250
    %v2252 = vrot.slane %v2251, 2
    %v2253 = vadd.f32 %v2251, %v2252
    %v2254 = vrot.slane %v2253, 1
    %v2255 = vadd.f32 %v2253, %v2254
    %v2256 = vrot.slane %v334, 4
    %v2257 = vadd.f32 %v334, %v2256
    %v2258 = vrot.slane %v2257, 2
    %v2259 = vadd.f32 %v2257, %v2258
    %v2260 = vrot.slane %v2259, 1
    %v2261 = vadd.f32 %v2259, %v2260
    %v2262 = vrot.slane %v335, 4
    %v2263 = vadd.f32 %v335, %v2262
    %v2264 = vrot.slane %v2263, 2
    %v2265 = vadd.f32 %v2263, %v2264
    %v2266 = vrot.slane %v2265, 1
    %v2267 = vadd.f32 %v2265, %v2266
    %v2268 = vrot.slane %v336, 4
    %v2269 = vadd.f32 %v336, %v2268
    %v2270 = vrot.slane %v2269, 2
    %v2271 = vadd.f32 %v2269, %v2270
    %v2272 = vrot.slane %v2271, 1
    %v2273 = vadd.f32 %v2271, %v2272
    %v2274 = vrot.slane %v337, 4
    %v2275 = vadd.f32 %v337, %v2274
    %v2276 = vrot.slane %v2275, 2
    %v2277 = vadd.f32 %v2275, %v2276
    %v2278 = vrot.slane %v2277, 1
    %v2279 = vadd.f32 %v2277, %v2278
    %v2280 = vrot.slane %v338, 4
    %v2281 = vadd.f32 %v338, %v2280
    %v2282 = vrot.slane %v2281, 2
    %v2283 = vadd.f32 %v2281, %v2282
    %v2284 = vrot.slane %v2283, 1
    %v2285 = vadd.f32 %v2283, %v2284
    %v2286 = vrot.slane %v339, 4
    %v2287 = vadd.f32 %v339, %v2286
    %v2288 = vrot.slane %v2287, 2
    %v2289 = vadd.f32 %v2287, %v2288
    %v2290 = vrot.slane %v2289, 1
    %v2291 = vadd.f32 %v2289, %v2290
    %v2292 = vrot.slane %v340, 4
    %v2293 = vadd.f32 %v340, %v2292
    %v2294 = vrot.slane %v2293, 2
    %v2295 = vadd.f32 %v2293, %v2294
    %v2296 = vrot.slane %v2295, 1
    %v2297 = vadd.f32 %v2295, %v2296
    %v2298 = vrot.slane %v341, 4
    %v2299 = vadd.f32 %v341, %v2298
    %v2300 = vrot.slane %v2299, 2
    %v2301 = vadd.f32 %v2299, %v2300
    %v2302 = vrot.slane %v2301, 1
    %v2303 = vadd.f32 %v2301, %v2302
    %v2304 = vrot.slane %v342, 4
    %v2305 = vadd.f32 %v342, %v2304
    %v2306 = vrot.slane %v2305, 2
    %v2307 = vadd.f32 %v2305, %v2306
    %v2308 = vrot.slane %v2307, 1
    %v2309 = vadd.f32 %v2307, %v2308
    %v2310 = vrot.slane %v343, 4
    %v2311 = vadd.f32 %v343, %v2310
    %v2312 = vrot.slane %v2311, 2
    %v2313 = vadd.f32 %v2311, %v2312
    %v2314 = vrot.slane %v2313, 1
    %v2315 = vadd.f32 %v2313, %v2314
    %v2316 = vrot.slane %v344, 4
    %v2317 = vadd.f32 %v344, %v2316
    %v2318 = vrot.slane %v2317, 2
    %v2319 = vadd.f32 %v2317, %v2318
    %v2320 = vrot.slane %v2319, 1
    %v2321 = vadd.f32 %v2319, %v2320
    %v2322 = vrot.slane %v345, 4
    %v2323 = vadd.f32 %v345, %v2322
    %v2324 = vrot.slane %v2323, 2
    %v2325 = vadd.f32 %v2323, %v2324
    %v2326 = vrot.slane %v2325, 1
    %v2327 = vadd.f32 %v2325, %v2326
    %v2328 = vrot.slane %v346, 4
    %v2329 = vadd.f32 %v346, %v2328
    %v2330 = vrot.slane %v2329, 2
    %v2331 = vadd.f32 %v2329, %v2330
    %v2332 = vrot.slane %v2331, 1
    %v2333 = vadd.f32 %v2331, %v2332
    %v2334 = vrot.slane %v347, 4
    %v2335 = vadd.f32 %v347, %v2334
    %v2336 = vrot.slane %v2335, 2
    %v2337 = vadd.f32 %v2335, %v2336
    %v2338 = vrot.slane %v2337, 1
    %v2339 = vadd.f32 %v2337, %v2338
    %v2340 = vrot.slane %v348, 4
    %v2341 = vadd.f32 %v348, %v2340
    %v2342 = vrot.slane %v2341, 2
    %v2343 = vadd.f32 %v2341, %v2342
    %v2344 = vrot.slane %v2343, 1
    %v2345 = vadd.f32 %v2343, %v2344
    %v2346 = vrot.slane %v349, 4
    %v2347 = vadd.f32 %v349, %v2346
    %v2348 = vrot.slane %v2347, 2
    %v2349 = vadd.f32 %v2347, %v2348
    %v2350 = vrot.slane %v2349, 1
    %v2351 = vadd.f32 %v2349, %v2350
    %v2352 = vrot.slane %v350, 4
    %v2353 = vadd.f32 %v350, %v2352
    %v2354 = vrot.slane %v2353, 2
    %v2355 = vadd.f32 %v2353, %v2354
    %v2356 = vrot.slane %v2355, 1
    %v2357 = vadd.f32 %v2355, %v2356
    %v2358 = vrot.slane %v351, 4
    %v2359 = vadd.f32 %v351, %v2358
    %v2360 = vrot.slane %v2359, 2
    %v2361 = vadd.f32 %v2359, %v2360
    %v2362 = vrot.slane %v2361, 1
    %v2363 = vadd.f32 %v2361, %v2362
    %v2364 = vrot.slane %v352, 4
    %v2365 = vadd.f32 %v352, %v2364
    %v2366 = vrot.slane %v2365, 2
    %v2367 = vadd.f32 %v2365, %v2366
    %v2368 = vrot.slane %v2367, 1
    %v2369 = vadd.f32 %v2367, %v2368
    %v2370 = vrot.slane %v353, 4
    %v2371 = vadd.f32 %v353, %v2370
    %v2372 = vrot.slane %v2371, 2
    %v2373 = vadd.f32 %v2371, %v2372
    %v2374 = vrot.slane %v2373, 1
    %v2375 = vadd.f32 %v2373, %v2374
    %v2376 = vrot.slane %v354, 4
    %v2377 = vadd.f32 %v354, %v2376
    %v2378 = vrot.slane %v2377, 2
    %v2379 = vadd.f32 %v2377, %v2378
    %v2380 = vrot.slane %v2379, 1
    %v2381 = vadd.f32 %v2379, %v2380
    %v2382 = vrot.slane %v355, 4
    %v2383 = vadd.f32 %v355, %v2382
    %v2384 = vrot.slane %v2383, 2
    %v2385 = vadd.f32 %v2383, %v2384
    %v2386 = vrot.slane %v2385, 1
    %v2387 = vadd.f32 %v2385, %v2386
    %v2388 = vrot.slane %v356, 4
    %v2389 = vadd.f32 %v356, %v2388
    %v2390 = vrot.slane %v2389, 2
    %v2391 = vadd.f32 %v2389, %v2390
    %v2392 = vrot.slane %v2391, 1
    %v2393 = vadd.f32 %v2391, %v2392
    %v2394 = vrot.slane %v357, 4
    %v2395 = vadd.f32 %v357, %v2394
    %v2396 = vrot.slane %v2395, 2
    %v2397 = vadd.f32 %v2395, %v2396
    %v2398 = vrot.slane %v2397, 1
    %v2399 = vadd.f32 %v2397, %v2398
    %v2400 = vrot.slane %v358, 4
    %v2401 = vadd.f32 %v358, %v2400
    %v2402 = vrot.slane %v2401, 2
    %v2403 = vadd.f32 %v2401, %v2402
    %v2404 = vrot.slane %v2403, 1
    %v2405 = vadd.f32 %v2403, %v2404
    %v2406 = vrot.slane %v359, 4
    %v2407 = vadd.f32 %v359, %v2406
    %v2408 = vrot.slane %v2407, 2
    %v2409 = vadd.f32 %v2407, %v2408
    %v2410 = vrot.slane %v2409, 1
    %v2411 = vadd.f32 %v2409, %v2410
    %v2412 = vrot.slane %v360, 4
    %v2413 = vadd.f32 %v360, %v2412
    %v2414 = vrot.slane %v2413, 2
    %v2415 = vadd.f32 %v2413, %v2414
    %v2416 = vrot.slane %v2415, 1
    %v2417 = vadd.f32 %v2415, %v2416
    %v2418 = vrot.slane %v361, 4
    %v2419 = vadd.f32 %v361, %v2418
    %v2420 = vrot.slane %v2419, 2
    %v2421 = vadd.f32 %v2419, %v2420
    %v2422 = vrot.slane %v2421, 1
    %v2423 = vadd.f32 %v2421, %v2422
    %v2424 = vrot.slane %v362, 4
    %v2425 = vadd.f32 %v362, %v2424
    %v2426 = vrot.slane %v2425, 2
    %v2427 = vadd.f32 %v2425, %v2426
    %v2428 = vrot.slane %v2427, 1
    %v2429 = vadd.f32 %v2427, %v2428
    %v2430 = vrot.slane %v363, 4
    %v2431 = vadd.f32 %v363, %v2430
    %v2432 = vrot.slane %v2431, 2
    %v2433 = vadd.f32 %v2431, %v2432
    %v2434 = vrot.slane %v2433, 1
    %v2435 = vadd.f32 %v2433, %v2434
    %v2436 = vrot.slane %v364, 4
    %v2437 = vadd.f32 %v364, %v2436
    %v2438 = vrot.slane %v2437, 2
    %v2439 = vadd.f32 %v2437, %v2438
    %v2440 = vrot.slane %v2439, 1
    %v2441 = vadd.f32 %v2439, %v2440
    %v2442 = vrot.slane %v365, 4
    %v2443 = vadd.f32 %v365, %v2442
    %v2444 = vrot.slane %v2443, 2
    %v2445 = vadd.f32 %v2443, %v2444
    %v2446 = vrot.slane %v2445, 1
    %v2447 = vadd.f32 %v2445, %v2446
    %v2448 = vrot.slane %v366, 4
    %v2449 = vadd.f32 %v366, %v2448
    %v2450 = vrot.slane %v2449, 2
    %v2451 = vadd.f32 %v2449, %v2450
    %v2452 = vrot.slane %v2451, 1
    %v2453 = vadd.f32 %v2451, %v2452
    %v2454 = vrot.slane %v367, 4
    %v2455 = vadd.f32 %v367, %v2454
    %v2456 = vrot.slane %v2455, 2
    %v2457 = vadd.f32 %v2455, %v2456
    %v2458 = vrot.slane %v2457, 1
    %v2459 = vadd.f32 %v2457, %v2458
    %v2460 = vrot.slane %v368, 4
    %v2461 = vadd.f32 %v368, %v2460
    %v2462 = vrot.slane %v2461, 2
    %v2463 = vadd.f32 %v2461, %v2462
    %v2464 = vrot.slane %v2463, 1
    %v2465 = vadd.f32 %v2463, %v2464
    %v2466 = vrot.slane %v369, 4
    %v2467 = vadd.f32 %v369, %v2466
    %v2468 = vrot.slane %v2467, 2
    %v2469 = vadd.f32 %v2467, %v2468
    %v2470 = vrot.slane %v2469, 1
    %v2471 = vadd.f32 %v2469, %v2470
    %v2472 = vrot.slane %v370, 4
    %v2473 = vadd.f32 %v370, %v2472
    %v2474 = vrot.slane %v2473, 2
    %v2475 = vadd.f32 %v2473, %v2474
    %v2476 = vrot.slane %v2475, 1
    %v2477 = vadd.f32 %v2475, %v2476
    %v2478 = vrot.slane %v371, 4
    %v2479 = vadd.f32 %v371, %v2478
    %v2480 = vrot.slane %v2479, 2
    %v2481 = vadd.f32 %v2479, %v2480
    %v2482 = vrot.slane %v2481, 1
    %v2483 = vadd.f32 %v2481, %v2482
    %v2484 = vrot.slane %v372, 4
    %v2485 = vadd.f32 %v372, %v2484
    %v2486 = vrot.slane %v2485, 2
    %v2487 = vadd.f32 %v2485, %v2486
    %v2488 = vrot.slane %v2487, 1
    %v2489 = vadd.f32 %v2487, %v2488
    %v2490 = vrot.slane %v373, 4
    %v2491 = vadd.f32 %v373, %v2490
    %v2492 = vrot.slane %v2491, 2
    %v2493 = vadd.f32 %v2491, %v2492
    %v2494 = vrot.slane %v2493, 1
    %v2495 = vadd.f32 %v2493, %v2494
    %v2496 = vrot.slane %v374, 4
    %v2497 = vadd.f32 %v374, %v2496
    %v2498 = vrot.slane %v2497, 2
    %v2499 = vadd.f32 %v2497, %v2498
    %v2500 = vrot.slane %v2499, 1
    %v2501 = vadd.f32 %v2499, %v2500
    %v2502 = vrot.slane %v375, 4
    %v2503 = vadd.f32 %v375, %v2502
    %v2504 = vrot.slane %v2503, 2
    %v2505 = vadd.f32 %v2503, %v2504
    %v2506 = vrot.slane %v2505, 1
    %v2507 = vadd.f32 %v2505, %v2506
    %v2508 = vrot.slane %v376, 4
    %v2509 = vadd.f32 %v376, %v2508
    %v2510 = vrot.slane %v2509, 2
    %v2511 = vadd.f32 %v2509, %v2510
    %v2512 = vrot.slane %v2511, 1
    %v2513 = vadd.f32 %v2511, %v2512
    %v2514 = vrot.slane %v377, 4
    %v2515 = vadd.f32 %v377, %v2514
    %v2516 = vrot.slane %v2515, 2
    %v2517 = vadd.f32 %v2515, %v2516
    %v2518 = vrot.slane %v2517, 1
    %v2519 = vadd.f32 %v2517, %v2518
    %v2520 = vrot.slane %v378, 4
    %v2521 = vadd.f32 %v378, %v2520
    %v2522 = vrot.slane %v2521, 2
    %v2523 = vadd.f32 %v2521, %v2522
    %v2524 = vrot.slane %v2523, 1
    %v2525 = vadd.f32 %v2523, %v2524
    %v2526 = vrot.slane %v379, 4
    %v2527 = vadd.f32 %v379, %v2526
    %v2528 = vrot.slane %v2527, 2
    %v2529 = vadd.f32 %v2527, %v2528
    %v2530 = vrot.slane %v2529, 1
    %v2531 = vadd.f32 %v2529, %v2530
    %v2532 = vrot.slane %v380, 4
    %v2533 = vadd.f32 %v380, %v2532
    %v2534 = vrot.slane %v2533, 2
    %v2535 = vadd.f32 %v2533, %v2534
    %v2536 = vrot.slane %v2535, 1
    %v2537 = vadd.f32 %v2535, %v2536
    %v2538 = vrot.slane %v381, 4
    %v2539 = vadd.f32 %v381, %v2538
    %v2540 = vrot.slane %v2539, 2
    %v2541 = vadd.f32 %v2539, %v2540
    %v2542 = vrot.slane %v2541, 1
    %v2543 = vadd.f32 %v2541, %v2542
    %v2544 = vrot.slane %v382, 4
    %v2545 = vadd.f32 %v382, %v2544
    %v2546 = vrot.slane %v2545, 2
    %v2547 = vadd.f32 %v2545, %v2546
    %v2548 = vrot.slane %v2547, 1
    %v2549 = vadd.f32 %v2547, %v2548
    %v2550 = vrot.slane %v383, 4
    %v2551 = vadd.f32 %v383, %v2550
    %v2552 = vrot.slane %v2551, 2
    %v2553 = vadd.f32 %v2551, %v2552
    %v2554 = vrot.slane %v2553, 1
    %v2555 = vadd.f32 %v2553, %v2554
    %v2556 = vrot.slane %v384, 4
    %v2557 = vadd.f32 %v384, %v2556
    %v2558 = vrot.slane %v2557, 2
    %v2559 = vadd.f32 %v2557, %v2558
    %v2560 = vrot.slane %v2559, 1
    %v2561 = vadd.f32 %v2559, %v2560
    %v2562 = vrot.slane %v385, 4
    %v2563 = vadd.f32 %v385, %v2562
    %v2564 = vrot.slane %v2563, 2
    %v2565 = vadd.f32 %v2563, %v2564
    %v2566 = vrot.slane %v2565, 1
    %v2567 = vadd.f32 %v2565, %v2566
    %v2568 = vrot.slane %v386, 4
    %v2569 = vadd.f32 %v386, %v2568
    %v2570 = vrot.slane %v2569, 2
    %v2571 = vadd.f32 %v2569, %v2570
    %v2572 = vrot.slane %v2571, 1
    %v2573 = vadd.f32 %v2571, %v2572
    %v2574 = vrot.slane %v387, 4
    %v2575 = vadd.f32 %v387, %v2574
    %v2576 = vrot.slane %v2575, 2
    %v2577 = vadd.f32 %v2575, %v2576
    %v2578 = vrot.slane %v2577, 1
    %v2579 = vadd.f32 %v2577, %v2578
    %v2580 = vrot.slane %v388, 4
    %v2581 = vadd.f32 %v388, %v2580
    %v2582 = vrot.slane %v2581, 2
    %v2583 = vadd.f32 %v2581, %v2582
    %v2584 = vrot.slane %v2583, 1
    %v2585 = vadd.f32 %v2583, %v2584
    %v2586 = vrot.slane %v389, 4
    %v2587 = vadd.f32 %v389, %v2586
    %v2588 = vrot.slane %v2587, 2
    %v2589 = vadd.f32 %v2587, %v2588
    %v2590 = vrot.slane %v2589, 1
    %v2591 = vadd.f32 %v2589, %v2590
    %v2592 = vrot.slane %v390, 4
    %v2593 = vadd.f32 %v390, %v2592
    %v2594 = vrot.slane %v2593, 2
    %v2595 = vadd.f32 %v2593, %v2594
    %v2596 = vrot.slane %v2595, 1
    %v2597 = vadd.f32 %v2595, %v2596
    %v2598 = vrot.slane %v391, 4
    %v2599 = vadd.f32 %v391, %v2598
    %v2600 = vrot.slane %v2599, 2
    %v2601 = vadd.f32 %v2599, %v2600
    %v2602 = vrot.slane %v2601, 1
    %v2603 = vadd.f32 %v2601, %v2602
    %v2604 = vrot.slane %v392, 4
    %v2605 = vadd.f32 %v392, %v2604
    %v2606 = vrot.slane %v2605, 2
    %v2607 = vadd.f32 %v2605, %v2606
    %v2608 = vrot.slane %v2607, 1
    %v2609 = vadd.f32 %v2607, %v2608
    %v2610 = vrot.slane %v393, 4
    %v2611 = vadd.f32 %v393, %v2610
    %v2612 = vrot.slane %v2611, 2
    %v2613 = vadd.f32 %v2611, %v2612
    %v2614 = vrot.slane %v2613, 1
    %v2615 = vadd.f32 %v2613, %v2614
    %v2616 = vrot.slane %v394, 4
    %v2617 = vadd.f32 %v394, %v2616
    %v2618 = vrot.slane %v2617, 2
    %v2619 = vadd.f32 %v2617, %v2618
    %v2620 = vrot.slane %v2619, 1
    %v2621 = vadd.f32 %v2619, %v2620
    %v2622 = vrot.slane %v395, 4
    %v2623 = vadd.f32 %v395, %v2622
    %v2624 = vrot.slane %v2623, 2
    %v2625 = vadd.f32 %v2623, %v2624
    %v2626 = vrot.slane %v2625, 1
    %v2627 = vadd.f32 %v2625, %v2626
    %v2628 = vrot.slane %v396, 4
    %v2629 = vadd.f32 %v396, %v2628
    %v2630 = vrot.slane %v2629, 2
    %v2631 = vadd.f32 %v2629, %v2630
    %v2632 = vrot.slane %v2631, 1
    %v2633 = vadd.f32 %v2631, %v2632
    %v2634 = vrot.slane %v397, 4
    %v2635 = vadd.f32 %v397, %v2634
    %v2636 = vrot.slane %v2635, 2
    %v2637 = vadd.f32 %v2635, %v2636
    %v2638 = vrot.slane %v2637, 1
    %v2639 = vadd.f32 %v2637, %v2638
    %v2640 = vrot.slane %v398, 4
    %v2641 = vadd.f32 %v398, %v2640
    %v2642 = vrot.slane %v2641, 2
    %v2643 = vadd.f32 %v2641, %v2642
    %v2644 = vrot.slane %v2643, 1
    %v2645 = vadd.f32 %v2643, %v2644
    %v2646 = vrot.slane %v399, 4
    %v2647 = vadd.f32 %v399, %v2646
    %v2648 = vrot.slane %v2647, 2
    %v2649 = vadd.f32 %v2647, %v2648
    %v2650 = vrot.slane %v2649, 1
    %v2651 = vadd.f32 %v2649, %v2650
    %v2652 = vrot.slane %v400, 4
    %v2653 = vadd.f32 %v400, %v2652
    %v2654 = vrot.slane %v2653, 2
    %v2655 = vadd.f32 %v2653, %v2654
    %v2656 = vrot.slane %v2655, 1
    %v2657 = vadd.f32 %v2655, %v2656
    %v2658 = vrot.slane %v401, 4
    %v2659 = vadd.f32 %v401, %v2658
    %v2660 = vrot.slane %v2659, 2
    %v2661 = vadd.f32 %v2659, %v2660
    %v2662 = vrot.slane %v2661, 1
    %v2663 = vadd.f32 %v2661, %v2662
    %v2664 = vrot.slane %v402, 4
    %v2665 = vadd.f32 %v402, %v2664
    %v2666 = vrot.slane %v2665, 2
    %v2667 = vadd.f32 %v2665, %v2666
    %v2668 = vrot.slane %v2667, 1
    %v2669 = vadd.f32 %v2667, %v2668
    %v2670 = vrot.slane %v403, 4
    %v2671 = vadd.f32 %v403, %v2670
    %v2672 = vrot.slane %v2671, 2
    %v2673 = vadd.f32 %v2671, %v2672
    %v2674 = vrot.slane %v2673, 1
    %v2675 = vadd.f32 %v2673, %v2674
    %v2676 = vrot.slane %v404, 4
    %v2677 = vadd.f32 %v404, %v2676
    %v2678 = vrot.slane %v2677, 2
    %v2679 = vadd.f32 %v2677, %v2678
    %v2680 = vrot.slane %v2679, 1
    %v2681 = vadd.f32 %v2679, %v2680
    %v2682 = vrot.slane %v405, 4
    %v2683 = vadd.f32 %v405, %v2682
    %v2684 = vrot.slane %v2683, 2
    %v2685 = vadd.f32 %v2683, %v2684
    %v2686 = vrot.slane %v2685, 1
    %v2687 = vadd.f32 %v2685, %v2686
    %v2688 = vrot.slane %v406, 4
    %v2689 = vadd.f32 %v406, %v2688
    %v2690 = vrot.slane %v2689, 2
    %v2691 = vadd.f32 %v2689, %v2690
    %v2692 = vrot.slane %v2691, 1
    %v2693 = vadd.f32 %v2691, %v2692
    %v2694 = vrot.slane %v407, 4
    %v2695 = vadd.f32 %v407, %v2694
    %v2696 = vrot.slane %v2695, 2
    %v2697 = vadd.f32 %v2695, %v2696
    %v2698 = vrot.slane %v2697, 1
    %v2699 = vadd.f32 %v2697, %v2698
    %v2700 = vrot.slane %v408, 4
    %v2701 = vadd.f32 %v408, %v2700
    %v2702 = vrot.slane %v2701, 2
    %v2703 = vadd.f32 %v2701, %v2702
    %v2704 = vrot.slane %v2703, 1
    %v2705 = vadd.f32 %v2703, %v2704
    %v2706 = vrot.slane %v409, 4
    %v2707 = vadd.f32 %v409, %v2706
    %v2708 = vrot.slane %v2707, 2
    %v2709 = vadd.f32 %v2707, %v2708
    %v2710 = vrot.slane %v2709, 1
    %v2711 = vadd.f32 %v2709, %v2710
    %v2712 = vrot.slane %v410, 4
    %v2713 = vadd.f32 %v410, %v2712
    %v2714 = vrot.slane %v2713, 2
    %v2715 = vadd.f32 %v2713, %v2714
    %v2716 = vrot.slane %v2715, 1
    %v2717 = vadd.f32 %v2715, %v2716
    %v2718 = vrot.slane %v411, 4
    %v2719 = vadd.f32 %v411, %v2718
    %v2720 = vrot.slane %v2719, 2
    %v2721 = vadd.f32 %v2719, %v2720
    %v2722 = vrot.slane %v2721, 1
    %v2723 = vadd.f32 %v2721, %v2722
    %v2724 = vrot.slane %v412, 4
    %v2725 = vadd.f32 %v412, %v2724
    %v2726 = vrot.slane %v2725, 2
    %v2727 = vadd.f32 %v2725, %v2726
    %v2728 = vrot.slane %v2727, 1
    %v2729 = vadd.f32 %v2727, %v2728
    %v2730 = vrot.slane %v413, 4
    %v2731 = vadd.f32 %v413, %v2730
    %v2732 = vrot.slane %v2731, 2
    %v2733 = vadd.f32 %v2731, %v2732
    %v2734 = vrot.slane %v2733, 1
    %v2735 = vadd.f32 %v2733, %v2734
    %v2736 = vrot.slane %v414, 4
    %v2737 = vadd.f32 %v414, %v2736
    %v2738 = vrot.slane %v2737, 2
    %v2739 = vadd.f32 %v2737, %v2738
    %v2740 = vrot.slane %v2739, 1
    %v2741 = vadd.f32 %v2739, %v2740
    %v2742 = vrot.slane %v415, 4
    %v2743 = vadd.f32 %v415, %v2742
    %v2744 = vrot.slane %v2743, 2
    %v2745 = vadd.f32 %v2743, %v2744
    %v2746 = vrot.slane %v2745, 1
    %v2747 = vadd.f32 %v2745, %v2746
    %v2748 = vrot.slane %v416, 4
    %v2749 = vadd.f32 %v416, %v2748
    %v2750 = vrot.slane %v2749, 2
    %v2751 = vadd.f32 %v2749, %v2750
    %v2752 = vrot.slane %v2751, 1
    %v2753 = vadd.f32 %v2751, %v2752
    %v2754 = vrot.slane %v417, 4
    %v2755 = vadd.f32 %v417, %v2754
    %v2756 = vrot.slane %v2755, 2
    %v2757 = vadd.f32 %v2755, %v2756
    %v2758 = vrot.slane %v2757, 1
    %v2759 = vadd.f32 %v2757, %v2758
    %v2760 = vrot.slane %v418, 4
    %v2761 = vadd.f32 %v418, %v2760
    %v2762 = vrot.slane %v2761, 2
    %v2763 = vadd.f32 %v2761, %v2762
    %v2764 = vrot.slane %v2763, 1
    %v2765 = vadd.f32 %v2763, %v2764
    %v2766 = vrot.slane %v419, 4
    %v2767 = vadd.f32 %v419, %v2766
    %v2768 = vrot.slane %v2767, 2
    %v2769 = vadd.f32 %v2767, %v2768
    %v2770 = vrot.slane %v2769, 1
    %v2771 = vadd.f32 %v2769, %v2770
    %v2772 = vrot.slane %v420, 4
    %v2773 = vadd.f32 %v420, %v2772
    %v2774 = vrot.slane %v2773, 2
    %v2775 = vadd.f32 %v2773, %v2774
    %v2776 = vrot.slane %v2775, 1
    %v2777 = vadd.f32 %v2775, %v2776
    %v2778 = vrot.slane %v421, 4
    %v2779 = vadd.f32 %v421, %v2778
    %v2780 = vrot.slane %v2779, 2
    %v2781 = vadd.f32 %v2779, %v2780
    %v2782 = vrot.slane %v2781, 1
    %v2783 = vadd.f32 %v2781, %v2782
    %v2784 = vrot.slane %v422, 4
    %v2785 = vadd.f32 %v422, %v2784
    %v2786 = vrot.slane %v2785, 2
    %v2787 = vadd.f32 %v2785, %v2786
    %v2788 = vrot.slane %v2787, 1
    %v2789 = vadd.f32 %v2787, %v2788
    %v2790 = vrot.slane %v423, 4
    %v2791 = vadd.f32 %v423, %v2790
    %v2792 = vrot.slane %v2791, 2
    %v2793 = vadd.f32 %v2791, %v2792
    %v2794 = vrot.slane %v2793, 1
    %v2795 = vadd.f32 %v2793, %v2794
    %v2796 = vrot.slane %v424, 4
    %v2797 = vadd.f32 %v424, %v2796
    %v2798 = vrot.slane %v2797, 2
    %v2799 = vadd.f32 %v2797, %v2798
    %v2800 = vrot.slane %v2799, 1
    %v2801 = vadd.f32 %v2799, %v2800
    %v2802 = vrot.slane %v425, 4
    %v2803 = vadd.f32 %v425, %v2802
    %v2804 = vrot.slane %v2803, 2
    %v2805 = vadd.f32 %v2803, %v2804
    %v2806 = vrot.slane %v2805, 1
    %v2807 = vadd.f32 %v2805, %v2806
    %v2808 = vrot.slane %v426, 4
    %v2809 = vadd.f32 %v426, %v2808
    %v2810 = vrot.slane %v2809, 2
    %v2811 = vadd.f32 %v2809, %v2810
    %v2812 = vrot.slane %v2811, 1
    %v2813 = vadd.f32 %v2811, %v2812
    %v2814 = vrot.slane %v427, 4
    %v2815 = vadd.f32 %v427, %v2814
    %v2816 = vrot.slane %v2815, 2
    %v2817 = vadd.f32 %v2815, %v2816
    %v2818 = vrot.slane %v2817, 1
    %v2819 = vadd.f32 %v2817, %v2818
    %v2820 = vrot.slane %v428, 4
    %v2821 = vadd.f32 %v428, %v2820
    %v2822 = vrot.slane %v2821, 2
    %v2823 = vadd.f32 %v2821, %v2822
    %v2824 = vrot.slane %v2823, 1
    %v2825 = vadd.f32 %v2823, %v2824
    %v2826 = vrot.slane %v429, 4
    %v2827 = vadd.f32 %v429, %v2826
    %v2828 = vrot.slane %v2827, 2
    %v2829 = vadd.f32 %v2827, %v2828
    %v2830 = vrot.slane %v2829, 1
    %v2831 = vadd.f32 %v2829, %v2830
    %v2832 = vrot.slane %v430, 4
    %v2833 = vadd.f32 %v430, %v2832
    %v2834 = vrot.slane %v2833, 2
    %v2835 = vadd.f32 %v2833, %v2834
    %v2836 = vrot.slane %v2835, 1
    %v2837 = vadd.f32 %v2835, %v2836
    %v2838 = vrot.slane %v431, 4
    %v2839 = vadd.f32 %v431, %v2838
    %v2840 = vrot.slane %v2839, 2
    %v2841 = vadd.f32 %v2839, %v2840
    %v2842 = vrot.slane %v2841, 1
    %v2843 = vadd.f32 %v2841, %v2842
    %v2844 = vrot.slane %v432, 4
    %v2845 = vadd.f32 %v432, %v2844
    %v2846 = vrot.slane %v2845, 2
    %v2847 = vadd.f32 %v2845, %v2846
    %v2848 = vrot.slane %v2847, 1
    %v2849 = vadd.f32 %v2847, %v2848
    %v2850 = vrot.slane %v433, 4
    %v2851 = vadd.f32 %v433, %v2850
    %v2852 = vrot.slane %v2851, 2
    %v2853 = vadd.f32 %v2851, %v2852
    %v2854 = vrot.slane %v2853, 1
    %v2855 = vadd.f32 %v2853, %v2854
    %v2856 = vrot.slane %v434, 4
    %v2857 = vadd.f32 %v434, %v2856
    %v2858 = vrot.slane %v2857, 2
    %v2859 = vadd.f32 %v2857, %v2858
    %v2860 = vrot.slane %v2859, 1
    %v2861 = vadd.f32 %v2859, %v2860
    %v2862 = vrot.slane %v435, 4
    %v2863 = vadd.f32 %v435, %v2862
    %v2864 = vrot.slane %v2863, 2
    %v2865 = vadd.f32 %v2863, %v2864
    %v2866 = vrot.slane %v2865, 1
    %v2867 = vadd.f32 %v2865, %v2866
    %v2868 = vrot.slane %v436, 4
    %v2869 = vadd.f32 %v436, %v2868
    %v2870 = vrot.slane %v2869, 2
    %v2871 = vadd.f32 %v2869, %v2870
    %v2872 = vrot.slane %v2871, 1
    %v2873 = vadd.f32 %v2871, %v2872
    %v2874 = vrot.slane %v437, 4
    %v2875 = vadd.f32 %v437, %v2874
    %v2876 = vrot.slane %v2875, 2
    %v2877 = vadd.f32 %v2875, %v2876
    %v2878 = vrot.slane %v2877, 1
    %v2879 = vadd.f32 %v2877, %v2878
    %v2880 = vrot.slane %v438, 4
    %v2881 = vadd.f32 %v438, %v2880
    %v2882 = vrot.slane %v2881, 2
    %v2883 = vadd.f32 %v2881, %v2882
    %v2884 = vrot.slane %v2883, 1
    %v2885 = vadd.f32 %v2883, %v2884
    %v2886 = vrot.slane %v439, 4
    %v2887 = vadd.f32 %v439, %v2886
    %v2888 = vrot.slane %v2887, 2
    %v2889 = vadd.f32 %v2887, %v2888
    %v2890 = vrot.slane %v2889, 1
    %v2891 = vadd.f32 %v2889, %v2890
    %v2892 = vrot.slane %v440, 4
    %v2893 = vadd.f32 %v440, %v2892
    %v2894 = vrot.slane %v2893, 2
    %v2895 = vadd.f32 %v2893, %v2894
    %v2896 = vrot.slane %v2895, 1
    %v2897 = vadd.f32 %v2895, %v2896
    %v2898 = vrot.slane %v441, 4
    %v2899 = vadd.f32 %v441, %v2898
    %v2900 = vrot.slane %v2899, 2
    %v2901 = vadd.f32 %v2899, %v2900
    %v2902 = vrot.slane %v2901, 1
    %v2903 = vadd.f32 %v2901, %v2902
    %v2904 = vrot.slane %v442, 4
    %v2905 = vadd.f32 %v442, %v2904
    %v2906 = vrot.slane %v2905, 2
    %v2907 = vadd.f32 %v2905, %v2906
    %v2908 = vrot.slane %v2907, 1
    %v2909 = vadd.f32 %v2907, %v2908
    %v2910 = vrot.slane %v443, 4
    %v2911 = vadd.f32 %v443, %v2910
    %v2912 = vrot.slane %v2911, 2
    %v2913 = vadd.f32 %v2911, %v2912
    %v2914 = vrot.slane %v2913, 1
    %v2915 = vadd.f32 %v2913, %v2914
    %v2916 = vrot.slane %v444, 4
    %v2917 = vadd.f32 %v444, %v2916
    %v2918 = vrot.slane %v2917, 2
    %v2919 = vadd.f32 %v2917, %v2918
    %v2920 = vrot.slane %v2919, 1
    %v2921 = vadd.f32 %v2919, %v2920
    %v2922 = vrot.slane %v445, 4
    %v2923 = vadd.f32 %v445, %v2922
    %v2924 = vrot.slane %v2923, 2
    %v2925 = vadd.f32 %v2923, %v2924
    %v2926 = vrot.slane %v2925, 1
    %v2927 = vadd.f32 %v2925, %v2926
    %v2928 = vrot.slane %v446, 4
    %v2929 = vadd.f32 %v446, %v2928
    %v2930 = vrot.slane %v2929, 2
    %v2931 = vadd.f32 %v2929, %v2930
    %v2932 = vrot.slane %v2931, 1
    %v2933 = vadd.f32 %v2931, %v2932
    %v2934 = vrot.slane %v447, 4
    %v2935 = vadd.f32 %v447, %v2934
    %v2936 = vrot.slane %v2935, 2
    %v2937 = vadd.f32 %v2935, %v2936
    %v2938 = vrot.slane %v2937, 1
    %v2939 = vadd.f32 %v2937, %v2938
    %v2940 = vrot.slane %v448, 4
    %v2941 = vadd.f32 %v448, %v2940
    %v2942 = vrot.slane %v2941, 2
    %v2943 = vadd.f32 %v2941, %v2942
    %v2944 = vrot.slane %v2943, 1
    %v2945 = vadd.f32 %v2943, %v2944
    %v2946 = vrot.slane %v449, 4
    %v2947 = vadd.f32 %v449, %v2946
    %v2948 = vrot.slane %v2947, 2
    %v2949 = vadd.f32 %v2947, %v2948
    %v2950 = vrot.slane %v2949, 1
    %v2951 = vadd.f32 %v2949, %v2950
    %v2952 = vrot.slane %v450, 4
    %v2953 = vadd.f32 %v450, %v2952
    %v2954 = vrot.slane %v2953, 2
    %v2955 = vadd.f32 %v2953, %v2954
    %v2956 = vrot.slane %v2955, 1
    %v2957 = vadd.f32 %v2955, %v2956
    %v2958 = vrot.slane %v451, 4
    %v2959 = vadd.f32 %v451, %v2958
    %v2960 = vrot.slane %v2959, 2
    %v2961 = vadd.f32 %v2959, %v2960
    %v2962 = vrot.slane %v2961, 1
    %v2963 = vadd.f32 %v2961, %v2962
    %v2964 = vrot.slane %v452, 4
    %v2965 = vadd.f32 %v452, %v2964
    %v2966 = vrot.slane %v2965, 2
    %v2967 = vadd.f32 %v2965, %v2966
    %v2968 = vrot.slane %v2967, 1
    %v2969 = vadd.f32 %v2967, %v2968
    %v2970 = vrot.slane %v453, 4
    %v2971 = vadd.f32 %v453, %v2970
    %v2972 = vrot.slane %v2971, 2
    %v2973 = vadd.f32 %v2971, %v2972
    %v2974 = vrot.slane %v2973, 1
    %v2975 = vadd.f32 %v2973, %v2974
    %v2976 = vrot.slane %v454, 4
    %v2977 = vadd.f32 %v454, %v2976
    %v2978 = vrot.slane %v2977, 2
    %v2979 = vadd.f32 %v2977, %v2978
    %v2980 = vrot.slane %v2979, 1
    %v2981 = vadd.f32 %v2979, %v2980
    %v2982 = vrot.slane %v455, 4
    %v2983 = vadd.f32 %v455, %v2982
    %v2984 = vrot.slane %v2983, 2
    %v2985 = vadd.f32 %v2983, %v2984
    %v2986 = vrot.slane %v2985, 1
    %v2987 = vadd.f32 %v2985, %v2986
    %v2988 = vrot.slane %v456, 4
    %v2989 = vadd.f32 %v456, %v2988
    %v2990 = vrot.slane %v2989, 2
    %v2991 = vadd.f32 %v2989, %v2990
    %v2992 = vrot.slane %v2991, 1
    %v2993 = vadd.f32 %v2991, %v2992
    %v2994 = vrot.slane %v457, 4
    %v2995 = vadd.f32 %v457, %v2994
    %v2996 = vrot.slane %v2995, 2
    %v2997 = vadd.f32 %v2995, %v2996
    %v2998 = vrot.slane %v2997, 1
    %v2999 = vadd.f32 %v2997, %v2998
    %v3000 = vrot.slane %v458, 4
    %v3001 = vadd.f32 %v458, %v3000
    %v3002 = vrot.slane %v3001, 2
    %v3003 = vadd.f32 %v3001, %v3002
    %v3004 = vrot.slane %v3003, 1
    %v3005 = vadd.f32 %v3003, %v3004
    %v3006 = vrot.slane %v459, 4
    %v3007 = vadd.f32 %v459, %v3006
    %v3008 = vrot.slane %v3007, 2
    %v3009 = vadd.f32 %v3007, %v3008
    %v3010 = vrot.slane %v3009, 1
    %v3011 = vadd.f32 %v3009, %v3010
    %v3012 = vrot.slane %v460, 4
    %v3013 = vadd.f32 %v460, %v3012
    %v3014 = vrot.slane %v3013, 2
    %v3015 = vadd.f32 %v3013, %v3014
    %v3016 = vrot.slane %v3015, 1
    %v3017 = vadd.f32 %v3015, %v3016
    %v3018 = vrot.slane %v461, 4
    %v3019 = vadd.f32 %v461, %v3018
    %v3020 = vrot.slane %v3019, 2
    %v3021 = vadd.f32 %v3019, %v3020
    %v3022 = vrot.slane %v3021, 1
    %v3023 = vadd.f32 %v3021, %v3022
    %v3024 = vrot.slane %v462, 4
    %v3025 = vadd.f32 %v462, %v3024
    %v3026 = vrot.slane %v3025, 2
    %v3027 = vadd.f32 %v3025, %v3026
    %v3028 = vrot.slane %v3027, 1
    %v3029 = vadd.f32 %v3027, %v3028
    %v3030 = vrot.slane %v463, 4
    %v3031 = vadd.f32 %v463, %v3030
    %v3032 = vrot.slane %v3031, 2
    %v3033 = vadd.f32 %v3031, %v3032
    %v3034 = vrot.slane %v3033, 1
    %v3035 = vadd.f32 %v3033, %v3034
    %v3036 = vrot.slane %v464, 4
    %v3037 = vadd.f32 %v464, %v3036
    %v3038 = vrot.slane %v3037, 2
    %v3039 = vadd.f32 %v3037, %v3038
    %v3040 = vrot.slane %v3039, 1
    %v3041 = vadd.f32 %v3039, %v3040
    %v3042 = vrot.slane %v465, 4
    %v3043 = vadd.f32 %v465, %v3042
    %v3044 = vrot.slane %v3043, 2
    %v3045 = vadd.f32 %v3043, %v3044
    %v3046 = vrot.slane %v3045, 1
    %v3047 = vadd.f32 %v3045, %v3046
    %v3048 = vrot.slane %v466, 4
    %v3049 = vadd.f32 %v466, %v3048
    %v3050 = vrot.slane %v3049, 2
    %v3051 = vadd.f32 %v3049, %v3050
    %v3052 = vrot.slane %v3051, 1
    %v3053 = vadd.f32 %v3051, %v3052
    %v3054 = vrot.slane %v467, 4
    %v3055 = vadd.f32 %v467, %v3054
    %v3056 = vrot.slane %v3055, 2
    %v3057 = vadd.f32 %v3055, %v3056
    %v3058 = vrot.slane %v3057, 1
    %v3059 = vadd.f32 %v3057, %v3058
    %v3060 = vrot.slane %v468, 4
    %v3061 = vadd.f32 %v468, %v3060
    %v3062 = vrot.slane %v3061, 2
    %v3063 = vadd.f32 %v3061, %v3062
    %v3064 = vrot.slane %v3063, 1
    %v3065 = vadd.f32 %v3063, %v3064
    %v3066 = vrot.slane %v469, 4
    %v3067 = vadd.f32 %v469, %v3066
    %v3068 = vrot.slane %v3067, 2
    %v3069 = vadd.f32 %v3067, %v3068
    %v3070 = vrot.slane %v3069, 1
    %v3071 = vadd.f32 %v3069, %v3070
    %v3072 = vrot.slane %v470, 4
    %v3073 = vadd.f32 %v470, %v3072
    %v3074 = vrot.slane %v3073, 2
    %v3075 = vadd.f32 %v3073, %v3074
    %v3076 = vrot.slane %v3075, 1
    %v3077 = vadd.f32 %v3075, %v3076
    %v3078 = vrot.slane %v471, 4
    %v3079 = vadd.f32 %v471, %v3078
    %v3080 = vrot.slane %v3079, 2
    %v3081 = vadd.f32 %v3079, %v3080
    %v3082 = vrot.slane %v3081, 1
    %v3083 = vadd.f32 %v3081, %v3082
    %v3084 = vrot.slane %v472, 4
    %v3085 = vadd.f32 %v472, %v3084
    %v3086 = vrot.slane %v3085, 2
    %v3087 = vadd.f32 %v3085, %v3086
    %v3088 = vrot.slane %v3087, 1
    %v3089 = vadd.f32 %v3087, %v3088
    %v3090 = vrot.slane %v473, 4
    %v3091 = vadd.f32 %v473, %v3090
    %v3092 = vrot.slane %v3091, 2
    %v3093 = vadd.f32 %v3091, %v3092
    %v3094 = vrot.slane %v3093, 1
    %v3095 = vadd.f32 %v3093, %v3094
    %v3096 = vrot.slane %v474, 4
    %v3097 = vadd.f32 %v474, %v3096
    %v3098 = vrot.slane %v3097, 2
    %v3099 = vadd.f32 %v3097, %v3098
    %v3100 = vrot.slane %v3099, 1
    %v3101 = vadd.f32 %v3099, %v3100
    %v3102 = vrot.slane %v475, 4
    %v3103 = vadd.f32 %v475, %v3102
    %v3104 = vrot.slane %v3103, 2
    %v3105 = vadd.f32 %v3103, %v3104
    %v3106 = vrot.slane %v3105, 1
    %v3107 = vadd.f32 %v3105, %v3106
    %v3108 = vrot.slane %v476, 4
    %v3109 = vadd.f32 %v476, %v3108
    %v3110 = vrot.slane %v3109, 2
    %v3111 = vadd.f32 %v3109, %v3110
    %v3112 = vrot.slane %v3111, 1
    %v3113 = vadd.f32 %v3111, %v3112
    %v3114 = vrot.slane %v477, 4
    %v3115 = vadd.f32 %v477, %v3114
    %v3116 = vrot.slane %v3115, 2
    %v3117 = vadd.f32 %v3115, %v3116
    %v3118 = vrot.slane %v3117, 1
    %v3119 = vadd.f32 %v3117, %v3118
    %v3120 = vrot.slane %v478, 4
    %v3121 = vadd.f32 %v478, %v3120
    %v3122 = vrot.slane %v3121, 2
    %v3123 = vadd.f32 %v3121, %v3122
    %v3124 = vrot.slane %v3123, 1
    %v3125 = vadd.f32 %v3123, %v3124
    %v3126 = vrot.slane %v479, 4
    %v3127 = vadd.f32 %v479, %v3126
    %v3128 = vrot.slane %v3127, 2
    %v3129 = vadd.f32 %v3127, %v3128
    %v3130 = vrot.slane %v3129, 1
    %v3131 = vadd.f32 %v3129, %v3130
    %v3132 = vrot.slane %v480, 4
    %v3133 = vadd.f32 %v480, %v3132
    %v3134 = vrot.slane %v3133, 2
    %v3135 = vadd.f32 %v3133, %v3134
    %v3136 = vrot.slane %v3135, 1
    %v3137 = vadd.f32 %v3135, %v3136
    %v3138 = vrot.slane %v481, 4
    %v3139 = vadd.f32 %v481, %v3138
    %v3140 = vrot.slane %v3139, 2
    %v3141 = vadd.f32 %v3139, %v3140
    %v3142 = vrot.slane %v3141, 1
    %v3143 = vadd.f32 %v3141, %v3142
    %v3144 = vrot.slane %v482, 4
    %v3145 = vadd.f32 %v482, %v3144
    %v3146 = vrot.slane %v3145, 2
    %v3147 = vadd.f32 %v3145, %v3146
    %v3148 = vrot.slane %v3147, 1
    %v3149 = vadd.f32 %v3147, %v3148
    %v3150 = vrot.slane %v483, 4
    %v3151 = vadd.f32 %v483, %v3150
    %v3152 = vrot.slane %v3151, 2
    %v3153 = vadd.f32 %v3151, %v3152
    %v3154 = vrot.slane %v3153, 1
    %v3155 = vadd.f32 %v3153, %v3154
    %v3156 = vrot.slane %v484, 4
    %v3157 = vadd.f32 %v484, %v3156
    %v3158 = vrot.slane %v3157, 2
    %v3159 = vadd.f32 %v3157, %v3158
    %v3160 = vrot.slane %v3159, 1
    %v3161 = vadd.f32 %v3159, %v3160
    %v3162 = vrot.slane %v485, 4
    %v3163 = vadd.f32 %v485, %v3162
    %v3164 = vrot.slane %v3163, 2
    %v3165 = vadd.f32 %v3163, %v3164
    %v3166 = vrot.slane %v3165, 1
    %v3167 = vadd.f32 %v3165, %v3166
    %v3168 = vrot.slane %v486, 4
    %v3169 = vadd.f32 %v486, %v3168
    %v3170 = vrot.slane %v3169, 2
    %v3171 = vadd.f32 %v3169, %v3170
    %v3172 = vrot.slane %v3171, 1
    %v3173 = vadd.f32 %v3171, %v3172
    %v3174 = vrot.slane %v487, 4
    %v3175 = vadd.f32 %v487, %v3174
    %v3176 = vrot.slane %v3175, 2
    %v3177 = vadd.f32 %v3175, %v3176
    %v3178 = vrot.slane %v3177, 1
    %v3179 = vadd.f32 %v3177, %v3178
    %v3180 = vrot.slane %v488, 4
    %v3181 = vadd.f32 %v488, %v3180
    %v3182 = vrot.slane %v3181, 2
    %v3183 = vadd.f32 %v3181, %v3182
    %v3184 = vrot.slane %v3183, 1
    %v3185 = vadd.f32 %v3183, %v3184
    %v3186 = vrot.slane %v489, 4
    %v3187 = vadd.f32 %v489, %v3186
    %v3188 = vrot.slane %v3187, 2
    %v3189 = vadd.f32 %v3187, %v3188
    %v3190 = vrot.slane %v3189, 1
    %v3191 = vadd.f32 %v3189, %v3190
    %v3192 = vrot.slane %v490, 4
    %v3193 = vadd.f32 %v490, %v3192
    %v3194 = vrot.slane %v3193, 2
    %v3195 = vadd.f32 %v3193, %v3194
    %v3196 = vrot.slane %v3195, 1
    %v3197 = vadd.f32 %v3195, %v3196
    %v3198 = vrot.slane %v491, 4
    %v3199 = vadd.f32 %v491, %v3198
    %v3200 = vrot.slane %v3199, 2
    %v3201 = vadd.f32 %v3199, %v3200
    %v3202 = vrot.slane %v3201, 1
    %v3203 = vadd.f32 %v3201, %v3202
    %v3204 = vrot.slane %v492, 4
    %v3205 = vadd.f32 %v492, %v3204
    %v3206 = vrot.slane %v3205, 2
    %v3207 = vadd.f32 %v3205, %v3206
    %v3208 = vrot.slane %v3207, 1
    %v3209 = vadd.f32 %v3207, %v3208
    %v3210 = vrot.slane %v493, 4
    %v3211 = vadd.f32 %v493, %v3210
    %v3212 = vrot.slane %v3211, 2
    %v3213 = vadd.f32 %v3211, %v3212
    %v3214 = vrot.slane %v3213, 1
    %v3215 = vadd.f32 %v3213, %v3214
    %v3216 = vrot.slane %v494, 4
    %v3217 = vadd.f32 %v494, %v3216
    %v3218 = vrot.slane %v3217, 2
    %v3219 = vadd.f32 %v3217, %v3218
    %v3220 = vrot.slane %v3219, 1
    %v3221 = vadd.f32 %v3219, %v3220
    %v3222 = vrot.slane %v495, 4
    %v3223 = vadd.f32 %v495, %v3222
    %v3224 = vrot.slane %v3223, 2
    %v3225 = vadd.f32 %v3223, %v3224
    %v3226 = vrot.slane %v3225, 1
    %v3227 = vadd.f32 %v3225, %v3226
    %v3228 = vrot.slane %v496, 4
    %v3229 = vadd.f32 %v496, %v3228
    %v3230 = vrot.slane %v3229, 2
    %v3231 = vadd.f32 %v3229, %v3230
    %v3232 = vrot.slane %v3231, 1
    %v3233 = vadd.f32 %v3231, %v3232
    %v3234 = vrot.slane %v497, 4
    %v3235 = vadd.f32 %v497, %v3234
    %v3236 = vrot.slane %v3235, 2
    %v3237 = vadd.f32 %v3235, %v3236
    %v3238 = vrot.slane %v3237, 1
    %v3239 = vadd.f32 %v3237, %v3238
    %v3240 = vrot.slane %v498, 4
    %v3241 = vadd.f32 %v498, %v3240
    %v3242 = vrot.slane %v3241, 2
    %v3243 = vadd.f32 %v3241, %v3242
    %v3244 = vrot.slane %v3243, 1
    %v3245 = vadd.f32 %v3243, %v3244
    %v3246 = vrot.slane %v499, 4
    %v3247 = vadd.f32 %v499, %v3246
    %v3248 = vrot.slane %v3247, 2
    %v3249 = vadd.f32 %v3247, %v3248
    %v3250 = vrot.slane %v3249, 1
    %v3251 = vadd.f32 %v3249, %v3250
    %v3252 = vrot.slane %v500, 4
    %v3253 = vadd.f32 %v500, %v3252
    %v3254 = vrot.slane %v3253, 2
    %v3255 = vadd.f32 %v3253, %v3254
    %v3256 = vrot.slane %v3255, 1
    %v3257 = vadd.f32 %v3255, %v3256
    %v3258 = vrot.slane %v501, 4
    %v3259 = vadd.f32 %v501, %v3258
    %v3260 = vrot.slane %v3259, 2
    %v3261 = vadd.f32 %v3259, %v3260
    %v3262 = vrot.slane %v3261, 1
    %v3263 = vadd.f32 %v3261, %v3262
    %v3264 = vrot.slane %v502, 4
    %v3265 = vadd.f32 %v502, %v3264
    %v3266 = vrot.slane %v3265, 2
    %v3267 = vadd.f32 %v3265, %v3266
    %v3268 = vrot.slane %v3267, 1
    %v3269 = vadd.f32 %v3267, %v3268
    %v3270 = vrot.slane %v503, 4
    %v3271 = vadd.f32 %v503, %v3270
    %v3272 = vrot.slane %v3271, 2
    %v3273 = vadd.f32 %v3271, %v3272
    %v3274 = vrot.slane %v3273, 1
    %v3275 = vadd.f32 %v3273, %v3274
    %v3276 = vrot.slane %v504, 4
    %v3277 = vadd.f32 %v504, %v3276
    %v3278 = vrot.slane %v3277, 2
    %v3279 = vadd.f32 %v3277, %v3278
    %v3280 = vrot.slane %v3279, 1
    %v3281 = vadd.f32 %v3279, %v3280
    %v3282 = vrot.slane %v505, 4
    %v3283 = vadd.f32 %v505, %v3282
    %v3284 = vrot.slane %v3283, 2
    %v3285 = vadd.f32 %v3283, %v3284
    %v3286 = vrot.slane %v3285, 1
    %v3287 = vadd.f32 %v3285, %v3286
    %v3288 = vrot.slane %v506, 4
    %v3289 = vadd.f32 %v506, %v3288
    %v3290 = vrot.slane %v3289, 2
    %v3291 = vadd.f32 %v3289, %v3290
    %v3292 = vrot.slane %v3291, 1
    %v3293 = vadd.f32 %v3291, %v3292
    %v3294 = vrot.slane %v507, 4
    %v3295 = vadd.f32 %v507, %v3294
    %v3296 = vrot.slane %v3295, 2
    %v3297 = vadd.f32 %v3295, %v3296
    %v3298 = vrot.slane %v3297, 1
    %v3299 = vadd.f32 %v3297, %v3298
    %v3300 = vrot.slane %v508, 4
    %v3301 = vadd.f32 %v508, %v3300
    %v3302 = vrot.slane %v3301, 2
    %v3303 = vadd.f32 %v3301, %v3302
    %v3304 = vrot.slane %v3303, 1
    %v3305 = vadd.f32 %v3303, %v3304
    %v3306 = vrot.slane %v509, 4
    %v3307 = vadd.f32 %v509, %v3306
    %v3308 = vrot.slane %v3307, 2
    %v3309 = vadd.f32 %v3307, %v3308
    %v3310 = vrot.slane %v3309, 1
    %v3311 = vadd.f32 %v3309, %v3310
    %v3312 = vrot.slane %v510, 4
    %v3313 = vadd.f32 %v510, %v3312
    %v3314 = vrot.slane %v3313, 2
    %v3315 = vadd.f32 %v3313, %v3314
    %v3316 = vrot.slane %v3315, 1
    %v3317 = vadd.f32 %v3315, %v3316
    %v3318 = vrot.slane %v511, 4
    %v3319 = vadd.f32 %v511, %v3318
    %v3320 = vrot.slane %v3319, 2
    %v3321 = vadd.f32 %v3319, %v3320
    %v3322 = vrot.slane %v3321, 1
    %v3323 = vadd.f32 %v3321, %v3322
    %v3324 = vrot.slane %v512, 4
    %v3325 = vadd.f32 %v512, %v3324
    %v3326 = vrot.slane %v3325, 2
    %v3327 = vadd.f32 %v3325, %v3326
    %v3328 = vrot.slane %v3327, 1
    %v3329 = vadd.f32 %v3327, %v3328
    %v3330 = vrot.slane %v513, 4
    %v3331 = vadd.f32 %v513, %v3330
    %v3332 = vrot.slane %v3331, 2
    %v3333 = vadd.f32 %v3331, %v3332
    %v3334 = vrot.slane %v3333, 1
    %v3335 = vadd.f32 %v3333, %v3334
    %v3336 = vrot.slane %v514, 4
    %v3337 = vadd.f32 %v514, %v3336
    %v3338 = vrot.slane %v3337, 2
    %v3339 = vadd.f32 %v3337, %v3338
    %v3340 = vrot.slane %v3339, 1
    %v3341 = vadd.f32 %v3339, %v3340
    %v3342 = vrot.slane %v515, 4
    %v3343 = vadd.f32 %v515, %v3342
    %v3344 = vrot.slane %v3343, 2
    %v3345 = vadd.f32 %v3343, %v3344
    %v3346 = vrot.slane %v3345, 1
    %v3347 = vadd.f32 %v3345, %v3346
    %v3348 = vrot.slane %v516, 4
    %v3349 = vadd.f32 %v516, %v3348
    %v3350 = vrot.slane %v3349, 2
    %v3351 = vadd.f32 %v3349, %v3350
    %v3352 = vrot.slane %v3351, 1
    %v3353 = vadd.f32 %v3351, %v3352
    %v3354 = vrot.slane %v517, 4
    %v3355 = vadd.f32 %v517, %v3354
    %v3356 = vrot.slane %v3355, 2
    %v3357 = vadd.f32 %v3355, %v3356
    %v3358 = vrot.slane %v3357, 1
    %v3359 = vadd.f32 %v3357, %v3358
    %v3360 = vrot.slane %v518, 4
    %v3361 = vadd.f32 %v518, %v3360
    %v3362 = vrot.slane %v3361, 2
    %v3363 = vadd.f32 %v3361, %v3362
    %v3364 = vrot.slane %v3363, 1
    %v3365 = vadd.f32 %v3363, %v3364
    %v3366 = vrot.slane %v519, 4
    %v3367 = vadd.f32 %v519, %v3366
    %v3368 = vrot.slane %v3367, 2
    %v3369 = vadd.f32 %v3367, %v3368
    %v3370 = vrot.slane %v3369, 1
    %v3371 = vadd.f32 %v3369, %v3370
    %v3372 = vrot.slane %v520, 4
    %v3373 = vadd.f32 %v520, %v3372
    %v3374 = vrot.slane %v3373, 2
    %v3375 = vadd.f32 %v3373, %v3374
    %v3376 = vrot.slane %v3375, 1
    %v3377 = vadd.f32 %v3375, %v3376
    %v3378 = vrot.slane %v521, 4
    %v3379 = vadd.f32 %v521, %v3378
    %v3380 = vrot.slane %v3379, 2
    %v3381 = vadd.f32 %v3379, %v3380
    %v3382 = vrot.slane %v3381, 1
    %v3383 = vadd.f32 %v3381, %v3382
    %v3384 = vrot.slane %v522, 4
    %v3385 = vadd.f32 %v522, %v3384
    %v3386 = vrot.slane %v3385, 2
    %v3387 = vadd.f32 %v3385, %v3386
    %v3388 = vrot.slane %v3387, 1
    %v3389 = vadd.f32 %v3387, %v3388
    %v3390 = vrot.slane %v523, 4
    %v3391 = vadd.f32 %v523, %v3390
    %v3392 = vrot.slane %v3391, 2
    %v3393 = vadd.f32 %v3391, %v3392
    %v3394 = vrot.slane %v3393, 1
    %v3395 = vadd.f32 %v3393, %v3394
    %v3396 = vrot.slane %v524, 4
    %v3397 = vadd.f32 %v524, %v3396
    %v3398 = vrot.slane %v3397, 2
    %v3399 = vadd.f32 %v3397, %v3398
    %v3400 = vrot.slane %v3399, 1
    %v3401 = vadd.f32 %v3399, %v3400
    %v3402 = vrot.slane %v525, 4
    %v3403 = vadd.f32 %v525, %v3402
    %v3404 = vrot.slane %v3403, 2
    %v3405 = vadd.f32 %v3403, %v3404
    %v3406 = vrot.slane %v3405, 1
    %v3407 = vadd.f32 %v3405, %v3406
    %v3408 = vrot.slane %v526, 4
    %v3409 = vadd.f32 %v526, %v3408
    %v3410 = vrot.slane %v3409, 2
    %v3411 = vadd.f32 %v3409, %v3410
    %v3412 = vrot.slane %v3411, 1
    %v3413 = vadd.f32 %v3411, %v3412
    %v3414 = vrot.slane %v527, 4
    %v3415 = vadd.f32 %v527, %v3414
    %v3416 = vrot.slane %v3415, 2
    %v3417 = vadd.f32 %v3415, %v3416
    %v3418 = vrot.slane %v3417, 1
    %v3419 = vadd.f32 %v3417, %v3418
    %v3420 = vrot.slane %v528, 4
    %v3421 = vadd.f32 %v528, %v3420
    %v3422 = vrot.slane %v3421, 2
    %v3423 = vadd.f32 %v3421, %v3422
    %v3424 = vrot.slane %v3423, 1
    %v3425 = vadd.f32 %v3423, %v3424
    %v3426 = vrot.slane %v529, 4
    %v3427 = vadd.f32 %v529, %v3426
    %v3428 = vrot.slane %v3427, 2
    %v3429 = vadd.f32 %v3427, %v3428
    %v3430 = vrot.slane %v3429, 1
    %v3431 = vadd.f32 %v3429, %v3430
    %v3432 = vrot.slane %v530, 4
    %v3433 = vadd.f32 %v530, %v3432
    %v3434 = vrot.slane %v3433, 2
    %v3435 = vadd.f32 %v3433, %v3434
    %v3436 = vrot.slane %v3435, 1
    %v3437 = vadd.f32 %v3435, %v3436
    %v3438 = vrot.slane %v531, 4
    %v3439 = vadd.f32 %v531, %v3438
    %v3440 = vrot.slane %v3439, 2
    %v3441 = vadd.f32 %v3439, %v3440
    %v3442 = vrot.slane %v3441, 1
    %v3443 = vadd.f32 %v3441, %v3442
    %v3444 = vrot.slane %v532, 4
    %v3445 = vadd.f32 %v532, %v3444
    %v3446 = vrot.slane %v3445, 2
    %v3447 = vadd.f32 %v3445, %v3446
    %v3448 = vrot.slane %v3447, 1
    %v3449 = vadd.f32 %v3447, %v3448
    %v3450 = vrot.slane %v533, 4
    %v3451 = vadd.f32 %v533, %v3450
    %v3452 = vrot.slane %v3451, 2
    %v3453 = vadd.f32 %v3451, %v3452
    %v3454 = vrot.slane %v3453, 1
    %v3455 = vadd.f32 %v3453, %v3454
    %v3456 = vrot.slane %v534, 4
    %v3457 = vadd.f32 %v534, %v3456
    %v3458 = vrot.slane %v3457, 2
    %v3459 = vadd.f32 %v3457, %v3458
    %v3460 = vrot.slane %v3459, 1
    %v3461 = vadd.f32 %v3459, %v3460
    %v3462 = vrot.slane %v535, 4
    %v3463 = vadd.f32 %v535, %v3462
    %v3464 = vrot.slane %v3463, 2
    %v3465 = vadd.f32 %v3463, %v3464
    %v3466 = vrot.slane %v3465, 1
    %v3467 = vadd.f32 %v3465, %v3466
    %v3468 = vrot.slane %v536, 4
    %v3469 = vadd.f32 %v536, %v3468
    %v3470 = vrot.slane %v3469, 2
    %v3471 = vadd.f32 %v3469, %v3470
    %v3472 = vrot.slane %v3471, 1
    %v3473 = vadd.f32 %v3471, %v3472
    %v3474 = vrot.slane %v537, 4
    %v3475 = vadd.f32 %v537, %v3474
    %v3476 = vrot.slane %v3475, 2
    %v3477 = vadd.f32 %v3475, %v3476
    %v3478 = vrot.slane %v3477, 1
    %v3479 = vadd.f32 %v3477, %v3478
    %v3480 = vrot.slane %v538, 4
    %v3481 = vadd.f32 %v538, %v3480
    %v3482 = vrot.slane %v3481, 2
    %v3483 = vadd.f32 %v3481, %v3482
    %v3484 = vrot.slane %v3483, 1
    %v3485 = vadd.f32 %v3483, %v3484
    %v3486 = vrot.slane %v539, 4
    %v3487 = vadd.f32 %v539, %v3486
    %v3488 = vrot.slane %v3487, 2
    %v3489 = vadd.f32 %v3487, %v3488
    %v3490 = vrot.slane %v3489, 1
    %v3491 = vadd.f32 %v3489, %v3490
    %v3492 = vrot.slane %v540, 4
    %v3493 = vadd.f32 %v540, %v3492
    %v3494 = vrot.slane %v3493, 2
    %v3495 = vadd.f32 %v3493, %v3494
    %v3496 = vrot.slane %v3495, 1
    %v3497 = vadd.f32 %v3495, %v3496
    %v3498 = vrot.slane %v541, 4
    %v3499 = vadd.f32 %v541, %v3498
    %v3500 = vrot.slane %v3499, 2
    %v3501 = vadd.f32 %v3499, %v3500
    %v3502 = vrot.slane %v3501, 1
    %v3503 = vadd.f32 %v3501, %v3502
    %v3504 = vrot.slane %v542, 4
    %v3505 = vadd.f32 %v542, %v3504
    %v3506 = vrot.slane %v3505, 2
    %v3507 = vadd.f32 %v3505, %v3506
    %v3508 = vrot.slane %v3507, 1
    %v3509 = vadd.f32 %v3507, %v3508
    %v3510 = vrot.slane %v543, 4
    %v3511 = vadd.f32 %v543, %v3510
    %v3512 = vrot.slane %v3511, 2
    %v3513 = vadd.f32 %v3511, %v3512
    %v3514 = vrot.slane %v3513, 1
    %v3515 = vadd.f32 %v3513, %v3514
    %v3516 = vrot.slane %v544, 4
    %v3517 = vadd.f32 %v544, %v3516
    %v3518 = vrot.slane %v3517, 2
    %v3519 = vadd.f32 %v3517, %v3518
    %v3520 = vrot.slane %v3519, 1
    %v3521 = vadd.f32 %v3519, %v3520
    %v3522 = vrot.slane %v545, 4
    %v3523 = vadd.f32 %v545, %v3522
    %v3524 = vrot.slane %v3523, 2
    %v3525 = vadd.f32 %v3523, %v3524
    %v3526 = vrot.slane %v3525, 1
    %v3527 = vadd.f32 %v3525, %v3526
    %v3528 = vrot.slane %v546, 4
    %v3529 = vadd.f32 %v546, %v3528
    %v3530 = vrot.slane %v3529, 2
    %v3531 = vadd.f32 %v3529, %v3530
    %v3532 = vrot.slane %v3531, 1
    %v3533 = vadd.f32 %v3531, %v3532
    %v3534 = vrot.slane %v547, 4
    %v3535 = vadd.f32 %v547, %v3534
    %v3536 = vrot.slane %v3535, 2
    %v3537 = vadd.f32 %v3535, %v3536
    %v3538 = vrot.slane %v3537, 1
    %v3539 = vadd.f32 %v3537, %v3538
    %v3540 = vrot.slane %v548, 4
    %v3541 = vadd.f32 %v548, %v3540
    %v3542 = vrot.slane %v3541, 2
    %v3543 = vadd.f32 %v3541, %v3542
    %v3544 = vrot.slane %v3543, 1
    %v3545 = vadd.f32 %v3543, %v3544
    %v3546 = vrot.slane %v549, 4
    %v3547 = vadd.f32 %v549, %v3546
    %v3548 = vrot.slane %v3547, 2
    %v3549 = vadd.f32 %v3547, %v3548
    %v3550 = vrot.slane %v3549, 1
    %v3551 = vadd.f32 %v3549, %v3550
    %v3552 = vrot.slane %v550, 4
    %v3553 = vadd.f32 %v550, %v3552
    %v3554 = vrot.slane %v3553, 2
    %v3555 = vadd.f32 %v3553, %v3554
    %v3556 = vrot.slane %v3555, 1
    %v3557 = vadd.f32 %v3555, %v3556
    %v3558 = vrot.slane %v551, 4
    %v3559 = vadd.f32 %v551, %v3558
    %v3560 = vrot.slane %v3559, 2
    %v3561 = vadd.f32 %v3559, %v3560
    %v3562 = vrot.slane %v3561, 1
    %v3563 = vadd.f32 %v3561, %v3562
    %v3564 = vrot.slane %v552, 4
    %v3565 = vadd.f32 %v552, %v3564
    %v3566 = vrot.slane %v3565, 2
    %v3567 = vadd.f32 %v3565, %v3566
    %v3568 = vrot.slane %v3567, 1
    %v3569 = vadd.f32 %v3567, %v3568
    %v3570 = vrot.slane %v553, 4
    %v3571 = vadd.f32 %v553, %v3570
    %v3572 = vrot.slane %v3571, 2
    %v3573 = vadd.f32 %v3571, %v3572
    %v3574 = vrot.slane %v3573, 1
    %v3575 = vadd.f32 %v3573, %v3574
    %v3576 = vrot.slane %v554, 4
    %v3577 = vadd.f32 %v554, %v3576
    %v3578 = vrot.slane %v3577, 2
    %v3579 = vadd.f32 %v3577, %v3578
    %v3580 = vrot.slane %v3579, 1
    %v3581 = vadd.f32 %v3579, %v3580
    %v3582 = vrot.slane %v555, 4
    %v3583 = vadd.f32 %v555, %v3582
    %v3584 = vrot.slane %v3583, 2
    %v3585 = vadd.f32 %v3583, %v3584
    %v3586 = vrot.slane %v3585, 1
    %v3587 = vadd.f32 %v3585, %v3586
    %v3588 = vrot.slane %v556, 4
    %v3589 = vadd.f32 %v556, %v3588
    %v3590 = vrot.slane %v3589, 2
    %v3591 = vadd.f32 %v3589, %v3590
    %v3592 = vrot.slane %v3591, 1
    %v3593 = vadd.f32 %v3591, %v3592
    %v3594 = vrot.slane %v557, 4
    %v3595 = vadd.f32 %v557, %v3594
    %v3596 = vrot.slane %v3595, 2
    %v3597 = vadd.f32 %v3595, %v3596
    %v3598 = vrot.slane %v3597, 1
    %v3599 = vadd.f32 %v3597, %v3598
    %v3600 = vrot.slane %v558, 4
    %v3601 = vadd.f32 %v558, %v3600
    %v3602 = vrot.slane %v3601, 2
    %v3603 = vadd.f32 %v3601, %v3602
    %v3604 = vrot.slane %v3603, 1
    %v3605 = vadd.f32 %v3603, %v3604
    %v3606 = vrot.slane %v559, 4
    %v3607 = vadd.f32 %v559, %v3606
    %v3608 = vrot.slane %v3607, 2
    %v3609 = vadd.f32 %v3607, %v3608
    %v3610 = vrot.slane %v3609, 1
    %v3611 = vadd.f32 %v3609, %v3610
    %v3612 = vrot.slane %v560, 4
    %v3613 = vadd.f32 %v560, %v3612
    %v3614 = vrot.slane %v3613, 2
    %v3615 = vadd.f32 %v3613, %v3614
    %v3616 = vrot.slane %v3615, 1
    %v3617 = vadd.f32 %v3615, %v3616
    %v3618 = vrot.slane %v561, 4
    %v3619 = vadd.f32 %v561, %v3618
    %v3620 = vrot.slane %v3619, 2
    %v3621 = vadd.f32 %v3619, %v3620
    %v3622 = vrot.slane %v3621, 1
    %v3623 = vadd.f32 %v3621, %v3622
    %v3624 = vrot.slane %v562, 4
    %v3625 = vadd.f32 %v562, %v3624
    %v3626 = vrot.slane %v3625, 2
    %v3627 = vadd.f32 %v3625, %v3626
    %v3628 = vrot.slane %v3627, 1
    %v3629 = vadd.f32 %v3627, %v3628
    %v3630 = vrot.slane %v563, 4
    %v3631 = vadd.f32 %v563, %v3630
    %v3632 = vrot.slane %v3631, 2
    %v3633 = vadd.f32 %v3631, %v3632
    %v3634 = vrot.slane %v3633, 1
    %v3635 = vadd.f32 %v3633, %v3634
    %v3636 = vld [vmem:[#allocation5] sm:$0xff]
    %v3637 = vld [vmem:[#allocation5 + $0x8] sm:$0xff]
    %v3638 = vld [vmem:[#allocation5 + $0x10] sm:$0xff]
    %v3639 = vld [vmem:[#allocation5 + $0x18] sm:$0xff]
    %v3640 = vld [vmem:[#allocation5 + $0x20] sm:$0xff]
    %v3641 = vld [vmem:[#allocation5 + $0x28] sm:$0xff]
    %v3642 = vld [vmem:[#allocation5 + $0x30] sm:$0xff]
    %v3643 = vld [vmem:[#allocation5 + $0x38] sm:$0xff]
    %v3644 = vld [vmem:[#allocation5 + $0x40] sm:$0xff]
    %v3645 = vld [vmem:[#allocation5 + $0x48] sm:$0xff]
    %v3646 = vld [vmem:[#allocation5 + $0x50] sm:$0xff]
    %v3647 = vld [vmem:[#allocation5 + $0x58] sm:$0xff]
    %v3648 = vld [vmem:[#allocation5 + $0x60] sm:$0xff]
    %v3649 = vld [vmem:[#allocation5 + $0x68] sm:$0xff]
    %v3650 = vld [vmem:[#allocation5 + $0x70] sm:$0xff]
    %v3651 = vld [vmem:[#allocation5 + $0x78] sm:$0xff]
    %v3652 = vld [vmem:[#allocation5 + $0x80] sm:$0xff]
    %v3653 = vld [vmem:[#allocation5 + $0x88] sm:$0xff]
    %v3654 = vld [vmem:[#allocation5 + $0x90] sm:$0xff]
    %v3655 = vld [vmem:[#allocation5 + $0x98] sm:$0xff]
    %v3656 = vld [vmem:[#allocation5 + $0xa0] sm:$0xff]
    %v3657 = vld [vmem:[#allocation5 + $0xa8] sm:$0xff]
    %v3658 = vld [vmem:[#allocation5 + $0xb0] sm:$0xff]
    %v3659 = vld [vmem:[#allocation5 + $0xb8] sm:$0xff]
    %v3660 = vld [vmem:[#allocation5 + $0xc0] sm:$0xff]
    %v3661 = vld [vmem:[#allocation5 + $0xc8] sm:$0xff]
    %v3662 = vld [vmem:[#allocation5 + $0xd0] sm:$0xff]
    %v3663 = vld [vmem:[#allocation5 + $0xd8] sm:$0xff]
    %v3664 = vld [vmem:[#allocation5 + $0xe0] sm:$0xff]
    %v3665 = vld [vmem:[#allocation5 + $0xe8] sm:$0xff]
    %v3666 = vld [vmem:[#allocation5 + $0xf0] sm:$0xff]
    %v3667 = vld [vmem:[#allocation5 + $0xf8] sm:$0xff]
    %v3668 = vld [vmem:[#allocation5 + $0x100] sm:$0xff]
    %v3669 = vld [vmem:[#allocation5 + $0x108] sm:$0xff]
    %v3670 = vld [vmem:[#allocation5 + $0x110] sm:$0xff]
    %v3671 = vld [vmem:[#allocation5 + $0x118] sm:$0xff]
    %v3672 = vld [vmem:[#allocation5 + $0x120] sm:$0xff]
    %v3673 = vld [vmem:[#allocation5 + $0x128] sm:$0xff]
    %v3674 = vld [vmem:[#allocation5 + $0x130] sm:$0xff]
    %v3675 = vld [vmem:[#allocation5 + $0x138] sm:$0xff]
    %v3676 = vld [vmem:[#allocation5 + $0x140] sm:$0xff]
    %v3677 = vld [vmem:[#allocation5 + $0x148] sm:$0xff]
    %v3678 = vld [vmem:[#allocation5 + $0x150] sm:$0xff]
    %v3679 = vld [vmem:[#allocation5 + $0x158] sm:$0xff]
    %v3680 = vld [vmem:[#allocation5 + $0x160] sm:$0xff]
    %v3681 = vld [vmem:[#allocation5 + $0x168] sm:$0xff]
    %v3682 = vld [vmem:[#allocation5 + $0x170] sm:$0xff]
    %v3683 = vld [vmem:[#allocation5 + $0x178] sm:$0xff]
    %v3684 = vld [vmem:[#allocation5 + $0x180] sm:$0xff]
    %v3685 = vld [vmem:[#allocation5 + $0x188] sm:$0xff]
    %v3686 = vld [vmem:[#allocation5 + $0x190] sm:$0xff]
    %v3687 = vld [vmem:[#allocation5 + $0x198] sm:$0xff]
    %v3688 = vld [vmem:[#allocation5 + $0x1a0] sm:$0xff]
    %v3689 = vld [vmem:[#allocation5 + $0x1a8] sm:$0xff]
    %v3690 = vld [vmem:[#allocation5 + $0x1b0] sm:$0xff]
    %v3691 = vld [vmem:[#allocation5 + $0x1b8] sm:$0xff]
    %v3692 = vld [vmem:[#allocation5 + $0x1c0] sm:$0xff]
    %v3693 = vld [vmem:[#allocation5 + $0x1c8] sm:$0xff]
    %v3694 = vld [vmem:[#allocation5 + $0x1d0] sm:$0xff]
    %v3695 = vld [vmem:[#allocation5 + $0x1d8] sm:$0xff]
    %v3696 = vld [vmem:[#allocation5 + $0x1e0] sm:$0xff]
    %v3697 = vld [vmem:[#allocation5 + $0x1e8] sm:$0xff]
    %v3698 = vld [vmem:[#allocation5 + $0x1f0] sm:$0xff]
    %v3699 = vld [vmem:[#allocation5 + $0x1f8] sm:$0xff]
    %v3700 = vld [vmem:[#allocation5 + $0x200] sm:$0xff]
    %v3701 = vld [vmem:[#allocation5 + $0x208] sm:$0xff]
    %v3702 = vld [vmem:[#allocation5 + $0x210] sm:$0xff]
    %v3703 = vld [vmem:[#allocation5 + $0x218] sm:$0xff]
    %v3704 = vld [vmem:[#allocation5 + $0x220] sm:$0xff]
    %v3705 = vld [vmem:[#allocation5 + $0x228] sm:$0xff]
    %v3706 = vld [vmem:[#allocation5 + $0x230] sm:$0xff]
    %v3707 = vld [vmem:[#allocation5 + $0x238] sm:$0xff]
    %v3708 = vld [vmem:[#allocation5 + $0x240] sm:$0xff]
    %v3709 = vld [vmem:[#allocation5 + $0x248] sm:$0xff]
    %v3710 = vld [vmem:[#allocation5 + $0x250] sm:$0xff]
    %v3711 = vld [vmem:[#allocation5 + $0x258] sm:$0xff]
    %v3712 = vld [vmem:[#allocation5 + $0x260] sm:$0xff]
    %v3713 = vld [vmem:[#allocation5 + $0x268] sm:$0xff]
    %v3714 = vld [vmem:[#allocation5 + $0x270] sm:$0xff]
    %v3715 = vld [vmem:[#allocation5 + $0x278] sm:$0xff]
    %v3716 = vld [vmem:[#allocation5 + $0x280] sm:$0xff]
    %v3717 = vld [vmem:[#allocation5 + $0x288] sm:$0xff]
    %v3718 = vld [vmem:[#allocation5 + $0x290] sm:$0xff]
    %v3719 = vld [vmem:[#allocation5 + $0x298] sm:$0xff]
    %v3720 = vld [vmem:[#allocation5 + $0x2a0] sm:$0xff]
    %v3721 = vld [vmem:[#allocation5 + $0x2a8] sm:$0xff]
    %v3722 = vld [vmem:[#allocation5 + $0x2b0] sm:$0xff]
    %v3723 = vld [vmem:[#allocation5 + $0x2b8] sm:$0xff]
    %v3724 = vld [vmem:[#allocation5 + $0x2c0] sm:$0xff]
    %v3725 = vld [vmem:[#allocation5 + $0x2c8] sm:$0xff]
    %v3726 = vld [vmem:[#allocation5 + $0x2d0] sm:$0xff]
    %v3727 = vld [vmem:[#allocation5 + $0x2d8] sm:$0xff]
    %v3728 = vld [vmem:[#allocation5 + $0x2e0] sm:$0xff]
    %v3729 = vld [vmem:[#allocation5 + $0x2e8] sm:$0xff]
    %v3730 = vld [vmem:[#allocation5 + $0x2f0] sm:$0xff]
    %v3731 = vld [vmem:[#allocation5 + $0x2f8] sm:$0xff]
    %v3732 = vld [vmem:[#allocation5 + $0x300] sm:$0xff]
    %v3733 = vld [vmem:[#allocation5 + $0x308] sm:$0xff]
    %v3734 = vld [vmem:[#allocation5 + $0x310] sm:$0xff]
    %v3735 = vld [vmem:[#allocation5 + $0x318] sm:$0xff]
    %v3736 = vld [vmem:[#allocation5 + $0x320] sm:$0xff]
    %v3737 = vld [vmem:[#allocation5 + $0x328] sm:$0xff]
    %v3738 = vld [vmem:[#allocation5 + $0x330] sm:$0xff]
    %v3739 = vld [vmem:[#allocation5 + $0x338] sm:$0xff]
    %v3740 = vld [vmem:[#allocation5 + $0x340] sm:$0xff]
    %v3741 = vld [vmem:[#allocation5 + $0x348] sm:$0xff]
    %v3742 = vld [vmem:[#allocation5 + $0x350] sm:$0xff]
    %v3743 = vld [vmem:[#allocation5 + $0x358] sm:$0xff]
    %v3744 = vld [vmem:[#allocation5 + $0x360] sm:$0xff]
    %v3745 = vld [vmem:[#allocation5 + $0x368] sm:$0xff]
    %v3746 = vld [vmem:[#allocation5 + $0x370] sm:$0xff]
    %v3747 = vld [vmem:[#allocation5 + $0x378] sm:$0xff]
    %v3748 = vld [vmem:[#allocation5 + $0x380] sm:$0xff]
    %v3749 = vld [vmem:[#allocation5 + $0x388] sm:$0xff]
    %v3750 = vld [vmem:[#allocation5 + $0x390] sm:$0xff]
    %v3751 = vld [vmem:[#allocation5 + $0x398] sm:$0xff]
    %v3752 = vld [vmem:[#allocation5 + $0x3a0] sm:$0xff]
    %v3753 = vld [vmem:[#allocation5 + $0x3a8] sm:$0xff]
    %v3754 = vld [vmem:[#allocation5 + $0x3b0] sm:$0xff]
    %v3755 = vld [vmem:[#allocation5 + $0x3b8] sm:$0xff]
    %v3756 = vld [vmem:[#allocation5 + $0x3c0] sm:$0xff]
    %v3757 = vld [vmem:[#allocation5 + $0x3c8] sm:$0xff]
    %v3758 = vld [vmem:[#allocation5 + $0x3d0] sm:$0xff]
    %v3759 = vld [vmem:[#allocation5 + $0x3d8] sm:$0xff]
    %v3760 = vld [vmem:[#allocation5 + $0x3e0] sm:$0xff]
    %v3761 = vld [vmem:[#allocation5 + $0x3e8] sm:$0xff]
    %v3762 = vld [vmem:[#allocation5 + $0x3f0] sm:$0xff]
    %v3763 = vld [vmem:[#allocation5 + $0x3f8] sm:$0xff]
    %v3892 = vcombine.high %v3636, %v3636
    %v3893 = vcombine.high %v3637, %v3637
    %v3894 = vcombine.high %v3638, %v3638
    %v3895 = vcombine.high %v3639, %v3639
    %v3896 = vcombine.high %v3640, %v3640
    %v3897 = vcombine.high %v3641, %v3641
    %v3898 = vcombine.high %v3642, %v3642
    %v3899 = vcombine.high %v3643, %v3643
    %v3900 = vcombine.high %v3644, %v3644
    %v3901 = vcombine.high %v3645, %v3645
    %v3902 = vcombine.high %v3646, %v3646
    %v3903 = vcombine.high %v3647, %v3647
    %v3904 = vcombine.high %v3648, %v3648
    %v3905 = vcombine.high %v3649, %v3649
    %v3906 = vcombine.high %v3650, %v3650
    %v3907 = vcombine.high %v3651, %v3651
    %v3908 = vcombine.high %v3652, %v3652
    %v3909 = vcombine.high %v3653, %v3653
    %v3910 = vcombine.high %v3654, %v3654
    %v3911 = vcombine.high %v3655, %v3655
    %v3912 = vcombine.high %v3656, %v3656
    %v3913 = vcombine.high %v3657, %v3657
    %v3914 = vcombine.high %v3658, %v3658
    %v3915 = vcombine.high %v3659, %v3659
    %v3916 = vcombine.high %v3660, %v3660
    %v3917 = vcombine.high %v3661, %v3661
    %v3918 = vcombine.high %v3662, %v3662
    %v3919 = vcombine.high %v3663, %v3663
    %v3920 = vcombine.high %v3664, %v3664
    %v3921 = vcombine.high %v3665, %v3665
    %v3922 = vcombine.high %v3666, %v3666
    %v3923 = vcombine.high %v3667, %v3667
    %v3924 = vcombine.high %v3668, %v3668
    %v3925 = vcombine.high %v3669, %v3669
    %v3926 = vcombine.high %v3670, %v3670
    %v3927 = vcombine.high %v3671, %v3671
    %v3928 = vcombine.high %v3672, %v3672
    %v3929 = vcombine.high %v3673, %v3673
    %v3930 = vcombine.high %v3674, %v3674
    %v3931 = vcombine.high %v3675, %v3675
    %v3932 = vcombine.high %v3676, %v3676
    %v3933 = vcombine.high %v3677, %v3677
    %v3934 = vcombine.high %v3678, %v3678
    %v3935 = vcombine.high %v3679, %v3679
    %v3936 = vcombine.high %v3680, %v3680
    %v3937 = vcombine.high %v3681, %v3681
    %v3938 = vcombine.high %v3682, %v3682
    %v3939 = vcombine.high %v3683, %v3683
    %v3940 = vcombine.high %v3684, %v3684
    %v3941 = vcombine.high %v3685, %v3685
    %v3942 = vcombine.high %v3686, %v3686
    %v3943 = vcombine.high %v3687, %v3687
    %v3944 = vcombine.high %v3688, %v3688
    %v3945 = vcombine.high %v3689, %v3689
    %v3946 = vcombine.high %v3690, %v3690
    %v3947 = vcombine.high %v3691, %v3691
    %v3948 = vcombine.high %v3692, %v3692
    %v3949 = vcombine.high %v3693, %v3693
    %v3950 = vcombine.high %v3694, %v3694
    %v3951 = vcombine.high %v3695, %v3695
    %v3952 = vcombine.high %v3696, %v3696
    %v3953 = vcombine.high %v3697, %v3697
    %v3954 = vcombine.high %v3698, %v3698
    %v3955 = vcombine.high %v3699, %v3699
    %v3956 = vcombine.high %v3700, %v3700
    %v3957 = vcombine.high %v3701, %v3701
    %v3958 = vcombine.high %v3702, %v3702
    %v3959 = vcombine.high %v3703, %v3703
    %v3960 = vcombine.high %v3704, %v3704
    %v3961 = vcombine.high %v3705, %v3705
    %v3962 = vcombine.high %v3706, %v3706
    %v3963 = vcombine.high %v3707, %v3707
    %v3964 = vcombine.high %v3708, %v3708
    %v3965 = vcombine.high %v3709, %v3709
    %v3966 = vcombine.high %v3710, %v3710
    %v3967 = vcombine.high %v3711, %v3711
    %v3968 = vcombine.high %v3712, %v3712
    %v3969 = vcombine.high %v3713, %v3713
    %v3970 = vcombine.high %v3714, %v3714
    %v3971 = vcombine.high %v3715, %v3715
    %v3972 = vcombine.high %v3716, %v3716
    %v3973 = vcombine.high %v3717, %v3717
    %v3974 = vcombine.high %v3718, %v3718
    %v3975 = vcombine.high %v3719, %v3719
    %v3976 = vcombine.high %v3720, %v3720
    %v3977 = vcombine.high %v3721, %v3721
    %v3978 = vcombine.high %v3722, %v3722
    %v3979 = vcombine.high %v3723, %v3723
    %v3980 = vcombine.high %v3724, %v3724
    %v3981 = vcombine.high %v3725, %v3725
    %v3982 = vcombine.high %v3726, %v3726
    %v3983 = vcombine.high %v3727, %v3727
    %v3984 = vcombine.high %v3728, %v3728
    %v3985 = vcombine.high %v3729, %v3729
    %v3986 = vcombine.high %v3730, %v3730
    %v3987 = vcombine.high %v3731, %v3731
    %v3988 = vcombine.high %v3732, %v3732
    %v3989 = vcombine.high %v3733, %v3733
    %v3990 = vcombine.high %v3734, %v3734
    %v3991 = vcombine.high %v3735, %v3735
    %v3992 = vcombine.high %v3736, %v3736
    %v3993 = vcombine.high %v3737, %v3737
    %v3994 = vcombine.high %v3738, %v3738
    %v3995 = vcombine.high %v3739, %v3739
    %v3996 = vcombine.high %v3740, %v3740
    %v3997 = vcombine.high %v3741, %v3741
    %v3998 = vcombine.high %v3742, %v3742
    %v3999 = vcombine.high %v3743, %v3743
    %v4000 = vcombine.high %v3744, %v3744
    %v4001 = vcombine.high %v3745, %v3745
    %v4002 = vcombine.high %v3746, %v3746
    %v4003 = vcombine.high %v3747, %v3747
    %v4004 = vcombine.high %v3748, %v3748
    %v4005 = vcombine.high %v3749, %v3749
    %v4006 = vcombine.high %v3750, %v3750
    %v4007 = vcombine.high %v3751, %v3751
    %v4008 = vcombine.high %v3752, %v3752
    %v4009 = vcombine.high %v3753, %v3753
    %v4010 = vcombine.high %v3754, %v3754
    %v4011 = vcombine.high %v3755, %v3755
    %v4012 = vcombine.high %v3756, %v3756
    %v4013 = vcombine.high %v3757, %v3757
    %v4014 = vcombine.high %v3758, %v3758
    %v4015 = vcombine.high %v3759, %v3759
    %v4016 = vcombine.high %v3760, %v3760
    %v4017 = vcombine.high %v3761, %v3761
    %v4018 = vcombine.high %v3762, %v3762
    %v4019 = vcombine.high %v3763, %v3763
    %v4148 = vmul.f32 %v569, %v3636
    %v4149 = vmul.f32 %v575, %v3892
    %v4150 = vmul.f32 %v581, %v3637
    %v4151 = vmul.f32 %v587, %v3893
    %v4152 = vmul.f32 %v593, %v3638
    %v4153 = vmul.f32 %v599, %v3894
    %v4154 = vmul.f32 %v605, %v3639
    %v4155 = vmul.f32 %v611, %v3895
    %v4156 = vmul.f32 %v617, %v3640
    %v4157 = vmul.f32 %v623, %v3896
    %v4158 = vmul.f32 %v629, %v3641
    %v4159 = vmul.f32 %v635, %v3897
    %v4160 = vmul.f32 %v641, %v3642
    %v4161 = vmul.f32 %v647, %v3898
    %v4162 = vmul.f32 %v653, %v3643
    %v4163 = vmul.f32 %v659, %v3899
    %v4164 = vmul.f32 %v665, %v3644
    %v4165 = vmul.f32 %v671, %v3900
    %v4166 = vmul.f32 %v677, %v3645
    %v4167 = vmul.f32 %v683, %v3901
    %v4168 = vmul.f32 %v689, %v3646
    %v4169 = vmul.f32 %v695, %v3902
    %v4170 = vmul.f32 %v701, %v3647
    %v4171 = vmul.f32 %v707, %v3903
    %v4172 = vmul.f32 %v713, %v3648
    %v4173 = vmul.f32 %v719, %v3904
    %v4174 = vmul.f32 %v725, %v3649
    %v4175 = vmul.f32 %v731, %v3905
    %v4176 = vmul.f32 %v737, %v3650
    %v4177 = vmul.f32 %v743, %v3906
    %v4178 = vmul.f32 %v749, %v3651
    %v4179 = vmul.f32 %v755, %v3907
    %v4180 = vmul.f32 %v761, %v3652
    %v4181 = vmul.f32 %v767, %v3908
    %v4182 = vmul.f32 %v773, %v3653
    %v4183 = vmul.f32 %v779, %v3909
    %v4184 = vmul.f32 %v785, %v3654
    %v4185 = vmul.f32 %v791, %v3910
    %v4186 = vmul.f32 %v797, %v3655
    %v4187 = vmul.f32 %v803, %v3911
    %v4188 = vmul.f32 %v809, %v3656
    %v4189 = vmul.f32 %v815, %v3912
    %v4190 = vmul.f32 %v821, %v3657
    %v4191 = vmul.f32 %v827, %v3913
    %v4192 = vmul.f32 %v833, %v3658
    %v4193 = vmul.f32 %v839, %v3914
    %v4194 = vmul.f32 %v845, %v3659
    %v4195 = vmul.f32 %v851, %v3915
    %v4196 = vmul.f32 %v857, %v3660
    %v4197 = vmul.f32 %v863, %v3916
    %v4198 = vmul.f32 %v869, %v3661
    %v4199 = vmul.f32 %v875, %v3917
    %v4200 = vmul.f32 %v881, %v3662
    %v4201 = vmul.f32 %v887, %v3918
    %v4202 = vmul.f32 %v893, %v3663
    %v4203 = vmul.f32 %v899, %v3919
    %v4204 = vmul.f32 %v905, %v3664
    %v4205 = vmul.f32 %v911, %v3920
    %v4206 = vmul.f32 %v917, %v3665
    %v4207 = vmul.f32 %v923, %v3921
    %v4208 = vmul.f32 %v929, %v3666
    %v4209 = vmul.f32 %v935, %v3922
    %v4210 = vmul.f32 %v941, %v3667
    %v4211 = vmul.f32 %v947, %v3923
    %v4212 = vmul.f32 %v953, %v3668
    %v4213 = vmul.f32 %v959, %v3924
    %v4214 = vmul.f32 %v965, %v3669
    %v4215 = vmul.f32 %v971, %v3925
    %v4216 = vmul.f32 %v977, %v3670
    %v4217 = vmul.f32 %v983, %v3926
    %v4218 = vmul.f32 %v989, %v3671
    %v4219 = vmul.f32 %v995, %v3927
    %v4220 = vmul.f32 %v1001, %v3672
    %v4221 = vmul.f32 %v1007, %v3928
    %v4222 = vmul.f32 %v1013, %v3673
    %v4223 = vmul.f32 %v1019, %v3929
    %v4224 = vmul.f32 %v1025, %v3674
    %v4225 = vmul.f32 %v1031, %v3930
    %v4226 = vmul.f32 %v1037, %v3675
    %v4227 = vmul.f32 %v1043, %v3931
    %v4228 = vmul.f32 %v1049, %v3676
    %v4229 = vmul.f32 %v1055, %v3932
    %v4230 = vmul.f32 %v1061, %v3677
    %v4231 = vmul.f32 %v1067, %v3933
    %v4232 = vmul.f32 %v1073, %v3678
    %v4233 = vmul.f32 %v1079, %v3934
    %v4234 = vmul.f32 %v1085, %v3679
    %v4235 = vmul.f32 %v1091, %v3935
    %v4236 = vmul.f32 %v1097, %v3680
    %v4237 = vmul.f32 %v1103, %v3936
    %v4238 = vmul.f32 %v1109, %v3681
    %v4239 = vmul.f32 %v1115, %v3937
    %v4240 = vmul.f32 %v1121, %v3682
    %v4241 = vmul.f32 %v1127, %v3938
    %v4242 = vmul.f32 %v1133, %v3683
    %v4243 = vmul.f32 %v1139, %v3939
    %v4244 = vmul.f32 %v1145, %v3684
    %v4245 = vmul.f32 %v1151, %v3940
    %v4246 = vmul.f32 %v1157, %v3685
    %v4247 = vmul.f32 %v1163, %v3941
    %v4248 = vmul.f32 %v1169, %v3686
    %v4249 = vmul.f32 %v1175, %v3942
    %v4250 = vmul.f32 %v1181, %v3687
    %v4251 = vmul.f32 %v1187, %v3943
    %v4252 = vmul.f32 %v1193, %v3688
    %v4253 = vmul.f32 %v1199, %v3944
    %v4254 = vmul.f32 %v1205, %v3689
    %v4255 = vmul.f32 %v1211, %v3945
    %v4256 = vmul.f32 %v1217, %v3690
    %v4257 = vmul.f32 %v1223, %v3946
    %v4258 = vmul.f32 %v1229, %v3691
    %v4259 = vmul.f32 %v1235, %v3947
    %v4260 = vmul.f32 %v1241, %v3692
    %v4261 = vmul.f32 %v1247, %v3948
    %v4262 = vmul.f32 %v1253, %v3693
    %v4263 = vmul.f32 %v1259, %v3949
    %v4264 = vmul.f32 %v1265, %v3694
    %v4265 = vmul.f32 %v1271, %v3950
    %v4266 = vmul.f32 %v1277, %v3695
    %v4267 = vmul.f32 %v1283, %v3951
    %v4268 = vmul.f32 %v1289, %v3696
    %v4269 = vmul.f32 %v1295, %v3952
    %v4270 = vmul.f32 %v1301, %v3697
    %v4271 = vmul.f32 %v1307, %v3953
    %v4272 = vmul.f32 %v1313, %v3698
    %v4273 = vmul.f32 %v1319, %v3954
    %v4274 = vmul.f32 %v1325, %v3699
    %v4275 = vmul.f32 %v1331, %v3955
    %v4276 = vmul.f32 %v1337, %v3700
    %v4277 = vmul.f32 %v1343, %v3956
    %v4278 = vmul.f32 %v1349, %v3701
    %v4279 = vmul.f32 %v1355, %v3957
    %v4280 = vmul.f32 %v1361, %v3702
    %v4281 = vmul.f32 %v1367, %v3958
    %v4282 = vmul.f32 %v1373, %v3703
    %v4283 = vmul.f32 %v1379, %v3959
    %v4284 = vmul.f32 %v1385, %v3704
    %v4285 = vmul.f32 %v1391, %v3960
    %v4286 = vmul.f32 %v1397, %v3705
    %v4287 = vmul.f32 %v1403, %v3961
    %v4288 = vmul.f32 %v1409, %v3706
    %v4289 = vmul.f32 %v1415, %v3962
    %v4290 = vmul.f32 %v1421, %v3707
    %v4291 = vmul.f32 %v1427, %v3963
    %v4292 = vmul.f32 %v1433, %v3708
    %v4293 = vmul.f32 %v1439, %v3964
    %v4294 = vmul.f32 %v1445, %v3709
    %v4295 = vmul.f32 %v1451, %v3965
    %v4296 = vmul.f32 %v1457, %v3710
    %v4297 = vmul.f32 %v1463, %v3966
    %v4298 = vmul.f32 %v1469, %v3711
    %v4299 = vmul.f32 %v1475, %v3967
    %v4300 = vmul.f32 %v1481, %v3712
    %v4301 = vmul.f32 %v1487, %v3968
    %v4302 = vmul.f32 %v1493, %v3713
    %v4303 = vmul.f32 %v1499, %v3969
    %v4304 = vmul.f32 %v1505, %v3714
    %v4305 = vmul.f32 %v1511, %v3970
    %v4306 = vmul.f32 %v1517, %v3715
    %v4307 = vmul.f32 %v1523, %v3971
    %v4308 = vmul.f32 %v1529, %v3716
    %v4309 = vmul.f32 %v1535, %v3972
    %v4310 = vmul.f32 %v1541, %v3717
    %v4311 = vmul.f32 %v1547, %v3973
    %v4312 = vmul.f32 %v1553, %v3718
    %v4313 = vmul.f32 %v1559, %v3974
    %v4314 = vmul.f32 %v1565, %v3719
    %v4315 = vmul.f32 %v1571, %v3975
    %v4316 = vmul.f32 %v1577, %v3720
    %v4317 = vmul.f32 %v1583, %v3976
    %v4318 = vmul.f32 %v1589, %v3721
    %v4319 = vmul.f32 %v1595, %v3977
    %v4320 = vmul.f32 %v1601, %v3722
    %v4321 = vmul.f32 %v1607, %v3978
    %v4322 = vmul.f32 %v1613, %v3723
    %v4323 = vmul.f32 %v1619, %v3979
    %v4324 = vmul.f32 %v1625, %v3724
    %v4325 = vmul.f32 %v1631, %v3980
    %v4326 = vmul.f32 %v1637, %v3725
    %v4327 = vmul.f32 %v1643, %v3981
    %v4328 = vmul.f32 %v1649, %v3726
    %v4329 = vmul.f32 %v1655, %v3982
    %v4330 = vmul.f32 %v1661, %v3727
    %v4331 = vmul.f32 %v1667, %v3983
    %v4332 = vmul.f32 %v1673, %v3728
    %v4333 = vmul.f32 %v1679, %v3984
    %v4334 = vmul.f32 %v1685, %v3729
    %v4335 = vmul.f32 %v1691, %v3985
    %v4336 = vmul.f32 %v1697, %v3730
    %v4337 = vmul.f32 %v1703, %v3986
    %v4338 = vmul.f32 %v1709, %v3731
    %v4339 = vmul.f32 %v1715, %v3987
    %v4340 = vmul.f32 %v1721, %v3732
    %v4341 = vmul.f32 %v1727, %v3988
    %v4342 = vmul.f32 %v1733, %v3733
    %v4343 = vmul.f32 %v1739, %v3989
    %v4344 = vmul.f32 %v1745, %v3734
    %v4345 = vmul.f32 %v1751, %v3990
    %v4346 = vmul.f32 %v1757, %v3735
    %v4347 = vmul.f32 %v1763, %v3991
    %v4348 = vmul.f32 %v1769, %v3736
    %v4349 = vmul.f32 %v1775, %v3992
    %v4350 = vmul.f32 %v1781, %v3737
    %v4351 = vmul.f32 %v1787, %v3993
    %v4352 = vmul.f32 %v1793, %v3738
    %v4353 = vmul.f32 %v1799, %v3994
    %v4354 = vmul.f32 %v1805, %v3739
    %v4355 = vmul.f32 %v1811, %v3995
    %v4356 = vmul.f32 %v1817, %v3740
    %v4357 = vmul.f32 %v1823, %v3996
    %v4358 = vmul.f32 %v1829, %v3741
    %v4359 = vmul.f32 %v1835, %v3997
    %v4360 = vmul.f32 %v1841, %v3742
    %v4361 = vmul.f32 %v1847, %v3998
    %v4362 = vmul.f32 %v1853, %v3743
    %v4363 = vmul.f32 %v1859, %v3999
    %v4364 = vmul.f32 %v1865, %v3744
    %v4365 = vmul.f32 %v1871, %v4000
    %v4366 = vmul.f32 %v1877, %v3745
    %v4367 = vmul.f32 %v1883, %v4001
    %v4368 = vmul.f32 %v1889, %v3746
    %v4369 = vmul.f32 %v1895, %v4002
    %v4370 = vmul.f32 %v1901, %v3747
    %v4371 = vmul.f32 %v1907, %v4003
    %v4372 = vmul.f32 %v1913, %v3748
    %v4373 = vmul.f32 %v1919, %v4004
    %v4374 = vmul.f32 %v1925, %v3749
    %v4375 = vmul.f32 %v1931, %v4005
    %v4376 = vmul.f32 %v1937, %v3750
    %v4377 = vmul.f32 %v1943, %v4006
    %v4378 = vmul.f32 %v1949, %v3751
    %v4379 = vmul.f32 %v1955, %v4007
    %v4380 = vmul.f32 %v1961, %v3752
    %v4381 = vmul.f32 %v1967, %v4008
    %v4382 = vmul.f32 %v1973, %v3753
    %v4383 = vmul.f32 %v1979, %v4009
    %v4384 = vmul.f32 %v1985, %v3754
    %v4385 = vmul.f32 %v1991, %v4010
    %v4386 = vmul.f32 %v1997, %v3755
    %v4387 = vmul.f32 %v2003, %v4011
    %v4388 = vmul.f32 %v2009, %v3756
    %v4389 = vmul.f32 %v2015, %v4012
    %v4390 = vmul.f32 %v2021, %v3757
    %v4391 = vmul.f32 %v2027, %v4013
    %v4392 = vmul.f32 %v2033, %v3758
    %v4393 = vmul.f32 %v2039, %v4014
    %v4394 = vmul.f32 %v2045, %v3759
    %v4395 = vmul.f32 %v2051, %v4015
    %v4396 = vmul.f32 %v2057, %v3760
    %v4397 = vmul.f32 %v2063, %v4016
    %v4398 = vmul.f32 %v2069, %v3761
    %v4399 = vmul.f32 %v2075, %v4017
    %v4400 = vmul.f32 %v2081, %v3762
    %v4401 = vmul.f32 %v2087, %v4018
    %v4402 = vmul.f32 %v2093, %v3763
    %v4403 = vmul.f32 %v2099, %v4019
    %v4404 = vmul.f32 %v2105, %v3636
    %v4405 = vmul.f32 %v2111, %v3892
    %v4406 = vmul.f32 %v2117, %v3637
    %v4407 = vmul.f32 %v2123, %v3893
    %v4408 = vmul.f32 %v2129, %v3638
    %v4409 = vmul.f32 %v2135, %v3894
    %v4410 = vmul.f32 %v2141, %v3639
    %v4411 = vmul.f32 %v2147, %v3895
    %v4412 = vmul.f32 %v2153, %v3640
    %v4413 = vmul.f32 %v2159, %v3896
    %v4414 = vmul.f32 %v2165, %v3641
    %v4415 = vmul.f32 %v2171, %v3897
    %v4416 = vmul.f32 %v2177, %v3642
    %v4417 = vmul.f32 %v2183, %v3898
    %v4418 = vmul.f32 %v2189, %v3643
    %v4419 = vmul.f32 %v2195, %v3899
    %v4420 = vmul.f32 %v2201, %v3644
    %v4421 = vmul.f32 %v2207, %v3900
    %v4422 = vmul.f32 %v2213, %v3645
    %v4423 = vmul.f32 %v2219, %v3901
    %v4424 = vmul.f32 %v2225, %v3646
    %v4425 = vmul.f32 %v2231, %v3902
    %v4426 = vmul.f32 %v2237, %v3647
    %v4427 = vmul.f32 %v2243, %v3903
    %v4428 = vmul.f32 %v2249, %v3648
    %v4429 = vmul.f32 %v2255, %v3904
    %v4430 = vmul.f32 %v2261, %v3649
    %v4431 = vmul.f32 %v2267, %v3905
    %v4432 = vmul.f32 %v2273, %v3650
    %v4433 = vmul.f32 %v2279, %v3906
    %v4434 = vmul.f32 %v2285, %v3651
    %v4435 = vmul.f32 %v2291, %v3907
    %v4436 = vmul.f32 %v2297, %v3652
    %v4437 = vmul.f32 %v2303, %v3908
    %v4438 = vmul.f32 %v2309, %v3653
    %v4439 = vmul.f32 %v2315, %v3909
    %v4440 = vmul.f32 %v2321, %v3654
    %v4441 = vmul.f32 %v2327, %v3910
    %v4442 = vmul.f32 %v2333, %v3655
    %v4443 = vmul.f32 %v2339, %v3911
    %v4444 = vmul.f32 %v2345, %v3656
    %v4445 = vmul.f32 %v2351, %v3912
    %v4446 = vmul.f32 %v2357, %v3657
    %v4447 = vmul.f32 %v2363, %v3913
    %v4448 = vmul.f32 %v2369, %v3658
    %v4449 = vmul.f32 %v2375, %v3914
    %v4450 = vmul.f32 %v2381, %v3659
    %v4451 = vmul.f32 %v2387, %v3915
    %v4452 = vmul.f32 %v2393, %v3660
    %v4453 = vmul.f32 %v2399, %v3916
    %v4454 = vmul.f32 %v2405, %v3661
    %v4455 = vmul.f32 %v2411, %v3917
    %v4456 = vmul.f32 %v2417, %v3662
    %v4457 = vmul.f32 %v2423, %v3918
    %v4458 = vmul.f32 %v2429, %v3663
    %v4459 = vmul.f32 %v2435, %v3919
    %v4460 = vmul.f32 %v2441, %v3664
    %v4461 = vmul.f32 %v2447, %v3920
    %v4462 = vmul.f32 %v2453, %v3665
    %v4463 = vmul.f32 %v2459, %v3921
    %v4464 = vmul.f32 %v2465, %v3666
    %v4465 = vmul.f32 %v2471, %v3922
    %v4466 = vmul.f32 %v2477, %v3667
    %v4467 = vmul.f32 %v2483, %v3923
    %v4468 = vmul.f32 %v2489, %v3668
    %v4469 = vmul.f32 %v2495, %v3924
    %v4470 = vmul.f32 %v2501, %v3669
    %v4471 = vmul.f32 %v2507, %v3925
    %v4472 = vmul.f32 %v2513, %v3670
    %v4473 = vmul.f32 %v2519, %v3926
    %v4474 = vmul.f32 %v2525, %v3671
    %v4475 = vmul.f32 %v2531, %v3927
    %v4476 = vmul.f32 %v2537, %v3672
    %v4477 = vmul.f32 %v2543, %v3928
    %v4478 = vmul.f32 %v2549, %v3673
    %v4479 = vmul.f32 %v2555, %v3929
    %v4480 = vmul.f32 %v2561, %v3674
    %v4481 = vmul.f32 %v2567, %v3930
    %v4482 = vmul.f32 %v2573, %v3675
    %v4483 = vmul.f32 %v2579, %v3931
    %v4484 = vmul.f32 %v2585, %v3676
    %v4485 = vmul.f32 %v2591, %v3932
    %v4486 = vmul.f32 %v2597, %v3677
    %v4487 = vmul.f32 %v2603, %v3933
    %v4488 = vmul.f32 %v2609, %v3678
    %v4489 = vmul.f32 %v2615, %v3934
    %v4490 = vmul.f32 %v2621, %v3679
    %v4491 = vmul.f32 %v2627, %v3935
    %v4492 = vmul.f32 %v2633, %v3680
    %v4493 = vmul.f32 %v2639, %v3936
    %v4494 = vmul.f32 %v2645, %v3681
    %v4495 = vmul.f32 %v2651, %v3937
    %v4496 = vmul.f32 %v2657, %v3682
    %v4497 = vmul.f32 %v2663, %v3938
    %v4498 = vmul.f32 %v2669, %v3683
    %v4499 = vmul.f32 %v2675, %v3939
    %v4500 = vmul.f32 %v2681, %v3684
    %v4501 = vmul.f32 %v2687, %v3940
    %v4502 = vmul.f32 %v2693, %v3685
    %v4503 = vmul.f32 %v2699, %v3941
    %v4504 = vmul.f32 %v2705, %v3686
    %v4505 = vmul.f32 %v2711, %v3942
    %v4506 = vmul.f32 %v2717, %v3687
    %v4507 = vmul.f32 %v2723, %v3943
    %v4508 = vmul.f32 %v2729, %v3688
    %v4509 = vmul.f32 %v2735, %v3944
    %v4510 = vmul.f32 %v2741, %v3689
    %v4511 = vmul.f32 %v2747, %v3945
    %v4512 = vmul.f32 %v2753, %v3690
    %v4513 = vmul.f32 %v2759, %v3946
    %v4514 = vmul.f32 %v2765, %v3691
    %v4515 = vmul.f32 %v2771, %v3947
    %v4516 = vmul.f32 %v2777, %v3692
    %v4517 = vmul.f32 %v2783, %v3948
    %v4518 = vmul.f32 %v2789, %v3693
    %v4519 = vmul.f32 %v2795, %v3949
    %v4520 = vmul.f32 %v2801, %v3694
    %v4521 = vmul.f32 %v2807, %v3950
    %v4522 = vmul.f32 %v2813, %v3695
    %v4523 = vmul.f32 %v2819, %v3951
    %v4524 = vmul.f32 %v2825, %v3696
    %v4525 = vmul.f32 %v2831, %v3952
    %v4526 = vmul.f32 %v2837, %v3697
    %v4527 = vmul.f32 %v2843, %v3953
    %v4528 = vmul.f32 %v2849, %v3698
    %v4529 = vmul.f32 %v2855, %v3954
    %v4530 = vmul.f32 %v2861, %v3699
    %v4531 = vmul.f32 %v2867, %v3955
    %v4532 = vmul.f32 %v2873, %v3700
    %v4533 = vmul.f32 %v2879, %v3956
    %v4534 = vmul.f32 %v2885, %v3701
    %v4535 = vmul.f32 %v2891, %v3957
    %v4536 = vmul.f32 %v2897, %v3702
    %v4537 = vmul.f32 %v2903, %v3958
    %v4538 = vmul.f32 %v2909, %v3703
    %v4539 = vmul.f32 %v2915, %v3959
    %v4540 = vmul.f32 %v2921, %v3704
    %v4541 = vmul.f32 %v2927, %v3960
    %v4542 = vmul.f32 %v2933, %v3705
    %v4543 = vmul.f32 %v2939, %v3961
    %v4544 = vmul.f32 %v2945, %v3706
    %v4545 = vmul.f32 %v2951, %v3962
    %v4546 = vmul.f32 %v2957, %v3707
    %v4547 = vmul.f32 %v2963, %v3963
    %v4548 = vmul.f32 %v2969, %v3708
    %v4549 = vmul.f32 %v2975, %v3964
    %v4550 = vmul.f32 %v2981, %v3709
    %v4551 = vmul.f32 %v2987, %v3965
    %v4552 = vmul.f32 %v2993, %v3710
    %v4553 = vmul.f32 %v2999, %v3966
    %v4554 = vmul.f32 %v3005, %v3711
    %v4555 = vmul.f32 %v3011, %v3967
    %v4556 = vmul.f32 %v3017, %v3712
    %v4557 = vmul.f32 %v3023, %v3968
    %v4558 = vmul.f32 %v3029, %v3713
    %v4559 = vmul.f32 %v3035, %v3969
    %v4560 = vmul.f32 %v3041, %v3714
    %v4561 = vmul.f32 %v3047, %v3970
    %v4562 = vmul.f32 %v3053, %v3715
    %v4563 = vmul.f32 %v3059, %v3971
    %v4564 = vmul.f32 %v3065, %v3716
    %v4565 = vmul.f32 %v3071, %v3972
    %v4566 = vmul.f32 %v3077, %v3717
    %v4567 = vmul.f32 %v3083, %v3973
    %v4568 = vmul.f32 %v3089, %v3718
    %v4569 = vmul.f32 %v3095, %v3974
    %v4570 = vmul.f32 %v3101, %v3719
    %v4571 = vmul.f32 %v3107, %v3975
    %v4572 = vmul.f32 %v3113, %v3720
    %v4573 = vmul.f32 %v3119, %v3976
    %v4574 = vmul.f32 %v3125, %v3721
    %v4575 = vmul.f32 %v3131, %v3977
    %v4576 = vmul.f32 %v3137, %v3722
    %v4577 = vmul.f32 %v3143, %v3978
    %v4578 = vmul.f32 %v3149, %v3723
    %v4579 = vmul.f32 %v3155, %v3979
    %v4580 = vmul.f32 %v3161, %v3724
    %v4581 = vmul.f32 %v3167, %v3980
    %v4582 = vmul.f32 %v3173, %v3725
    %v4583 = vmul.f32 %v3179, %v3981
    %v4584 = vmul.f32 %v3185, %v3726
    %v4585 = vmul.f32 %v3191, %v3982
    %v4586 = vmul.f32 %v3197, %v3727
    %v4587 = vmul.f32 %v3203, %v3983
    %v4588 = vmul.f32 %v3209, %v3728
    %v4589 = vmul.f32 %v3215, %v3984
    %v4590 = vmul.f32 %v3221, %v3729
    %v4591 = vmul.f32 %v3227, %v3985
    %v4592 = vmul.f32 %v3233, %v3730
    %v4593 = vmul.f32 %v3239, %v3986
    %v4594 = vmul.f32 %v3245, %v3731
    %v4595 = vmul.f32 %v3251, %v3987
    %v4596 = vmul.f32 %v3257, %v3732
    %v4597 = vmul.f32 %v3263, %v3988
    %v4598 = vmul.f32 %v3269, %v3733
    %v4599 = vmul.f32 %v3275, %v3989
    %v4600 = vmul.f32 %v3281, %v3734
    %v4601 = vmul.f32 %v3287, %v3990
    %v4602 = vmul.f32 %v3293, %v3735
    %v4603 = vmul.f32 %v3299, %v3991
    %v4604 = vmul.f32 %v3305, %v3736
    %v4605 = vmul.f32 %v3311, %v3992
    %v4606 = vmul.f32 %v3317, %v3737
    %v4607 = vmul.f32 %v3323, %v3993
    %v4608 = vmul.f32 %v3329, %v3738
    %v4609 = vmul.f32 %v3335, %v3994
    %v4610 = vmul.f32 %v3341, %v3739
    %v4611 = vmul.f32 %v3347, %v3995
    %v4612 = vmul.f32 %v3353, %v3740
    %v4613 = vmul.f32 %v3359, %v3996
    %v4614 = vmul.f32 %v3365, %v3741
    %v4615 = vmul.f32 %v3371, %v3997
    %v4616 = vmul.f32 %v3377, %v3742
    %v4617 = vmul.f32 %v3383, %v3998
    %v4618 = vmul.f32 %v3389, %v3743
    %v4619 = vmul.f32 %v3395, %v3999
    %v4620 = vmul.f32 %v3401, %v3744
    %v4621 = vmul.f32 %v3407, %v4000
    %v4622 = vmul.f32 %v3413, %v3745
    %v4623 = vmul.f32 %v3419, %v4001
    %v4624 = vmul.f32 %v3425, %v3746
    %v4625 = vmul.f32 %v3431, %v4002
    %v4626 = vmul.f32 %v3437, %v3747
    %v4627 = vmul.f32 %v3443, %v4003
    %v4628 = vmul.f32 %v3449, %v3748
    %v4629 = vmul.f32 %v3455, %v4004
    %v4630 = vmul.f32 %v3461, %v3749
    %v4631 = vmul.f32 %v3467, %v4005
    %v4632 = vmul.f32 %v3473, %v3750
    %v4633 = vmul.f32 %v3479, %v4006
    %v4634 = vmul.f32 %v3485, %v3751
    %v4635 = vmul.f32 %v3491, %v4007
    %v4636 = vmul.f32 %v3497, %v3752
    %v4637 = vmul.f32 %v3503, %v4008
    %v4638 = vmul.f32 %v3509, %v3753
    %v4639 = vmul.f32 %v3515, %v4009
    %v4640 = vmul.f32 %v3521, %v3754
    %v4641 = vmul.f32 %v3527, %v4010
    %v4642 = vmul.f32 %v3533, %v3755
    %v4643 = vmul.f32 %v3539, %v4011
    %v4644 = vmul.f32 %v3545, %v3756
    %v4645 = vmul.f32 %v3551, %v4012
    %v4646 = vmul.f32 %v3557, %v3757
    %v4647 = vmul.f32 %v3563, %v4013
    %v4648 = vmul.f32 %v3569, %v3758
    %v4649 = vmul.f32 %v3575, %v4014
    %v4650 = vmul.f32 %v3581, %v3759
    %v4651 = vmul.f32 %v3587, %v4015
    %v4652 = vmul.f32 %v3593, %v3760
    %v4653 = vmul.f32 %v3599, %v4016
    %v4654 = vmul.f32 %v3605, %v3761
    %v4655 = vmul.f32 %v3611, %v4017
    %v4656 = vmul.f32 %v3617, %v3762
    %v4657 = vmul.f32 %v3623, %v4018
    %v4658 = vmul.f32 %v3629, %v3763
    %v4659 = vmul.f32 %v3635, %v4019
    %vm4660 = vcmask 1043456
    %v4661 = vsel %vm4660, %v4148, 0.0
    %v4662 = vsel %vm4660, %v4149, 0.0
    %v4663 = vadd.f32 %v4661, %v4662
    %v4664 = vsel %vm4660, %v4150, 0.0
    %v4665 = vadd.f32 %v4663, %v4664
    %v4666 = vsel %vm4660, %v4151, 0.0
    %v4667 = vadd.f32 %v4665, %v4666
    %v4668 = vsel %vm4660, %v4152, 0.0
    %v4669 = vadd.f32 %v4667, %v4668
    %v4670 = vsel %vm4660, %v4153, 0.0
    %v4671 = vadd.f32 %v4669, %v4670
    %v4672 = vsel %vm4660, %v4154, 0.0
    %v4673 = vadd.f32 %v4671, %v4672
    %v4674 = vsel %vm4660, %v4155, 0.0
    %v4675 = vadd.f32 %v4673, %v4674
    %v4676 = vsel %vm4660, %v4156, 0.0
    %v4677 = vadd.f32 %v4675, %v4676
    %v4678 = vsel %vm4660, %v4157, 0.0
    %v4679 = vadd.f32 %v4677, %v4678
    %v4680 = vsel %vm4660, %v4158, 0.0
    %v4681 = vadd.f32 %v4679, %v4680
    %v4682 = vsel %vm4660, %v4159, 0.0
    %v4683 = vadd.f32 %v4681, %v4682
    %v4684 = vsel %vm4660, %v4160, 0.0
    %v4685 = vadd.f32 %v4683, %v4684
    %v4686 = vsel %vm4660, %v4161, 0.0
    %v4687 = vadd.f32 %v4685, %v4686
    %v4688 = vsel %vm4660, %v4162, 0.0
    %v4689 = vadd.f32 %v4687, %v4688
    %v4690 = vsel %vm4660, %v4163, 0.0
    %v4691 = vadd.f32 %v4689, %v4690
    %v4692 = vsel %vm4660, %v4164, 0.0
    %v4693 = vadd.f32 %v4691, %v4692
    %v4694 = vsel %vm4660, %v4165, 0.0
    %v4695 = vadd.f32 %v4693, %v4694
    %v4696 = vsel %vm4660, %v4166, 0.0
    %v4697 = vadd.f32 %v4695, %v4696
    %v4698 = vsel %vm4660, %v4167, 0.0
    %v4699 = vadd.f32 %v4697, %v4698
    %v4700 = vsel %vm4660, %v4168, 0.0
    %v4701 = vadd.f32 %v4699, %v4700
    %v4702 = vsel %vm4660, %v4169, 0.0
    %v4703 = vadd.f32 %v4701, %v4702
    %v4704 = vsel %vm4660, %v4170, 0.0
    %v4705 = vadd.f32 %v4703, %v4704
    %v4706 = vsel %vm4660, %v4171, 0.0
    %v4707 = vadd.f32 %v4705, %v4706
    %v4708 = vsel %vm4660, %v4172, 0.0
    %v4709 = vadd.f32 %v4707, %v4708
    %v4710 = vsel %vm4660, %v4173, 0.0
    %v4711 = vadd.f32 %v4709, %v4710
    %v4712 = vsel %vm4660, %v4174, 0.0
    %v4713 = vadd.f32 %v4711, %v4712
    %v4714 = vsel %vm4660, %v4175, 0.0
    %v4715 = vadd.f32 %v4713, %v4714
    %v4716 = vsel %vm4660, %v4176, 0.0
    %v4717 = vadd.f32 %v4715, %v4716
    %v4718 = vsel %vm4660, %v4177, 0.0
    %v4719 = vadd.f32 %v4717, %v4718
    %v4720 = vsel %vm4660, %v4178, 0.0
    %v4721 = vadd.f32 %v4719, %v4720
    %v4722 = vsel %vm4660, %v4179, 0.0
    %v4723 = vadd.f32 %v4721, %v4722
    %v4724 = vsel %vm4660, %v4180, 0.0
    %v4725 = vadd.f32 %v4723, %v4724
    %v4726 = vsel %vm4660, %v4181, 0.0
    %v4727 = vadd.f32 %v4725, %v4726
    %v4728 = vsel %vm4660, %v4182, 0.0
    %v4729 = vadd.f32 %v4727, %v4728
    %v4730 = vsel %vm4660, %v4183, 0.0
    %v4731 = vadd.f32 %v4729, %v4730
    %v4732 = vsel %vm4660, %v4184, 0.0
    %v4733 = vadd.f32 %v4731, %v4732
    %v4734 = vsel %vm4660, %v4185, 0.0
    %v4735 = vadd.f32 %v4733, %v4734
    %v4736 = vsel %vm4660, %v4186, 0.0
    %v4737 = vadd.f32 %v4735, %v4736
    %v4738 = vsel %vm4660, %v4187, 0.0
    %v4739 = vadd.f32 %v4737, %v4738
    %v4740 = vsel %vm4660, %v4188, 0.0
    %v4741 = vadd.f32 %v4739, %v4740
    %v4742 = vsel %vm4660, %v4189, 0.0
    %v4743 = vadd.f32 %v4741, %v4742
    %v4744 = vsel %vm4660, %v4190, 0.0
    %v4745 = vadd.f32 %v4743, %v4744
    %v4746 = vsel %vm4660, %v4191, 0.0
    %v4747 = vadd.f32 %v4745, %v4746
    %v4748 = vsel %vm4660, %v4192, 0.0
    %v4749 = vadd.f32 %v4747, %v4748
    %v4750 = vsel %vm4660, %v4193, 0.0
    %v4751 = vadd.f32 %v4749, %v4750
    %v4752 = vsel %vm4660, %v4194, 0.0
    %v4753 = vadd.f32 %v4751, %v4752
    %v4754 = vsel %vm4660, %v4195, 0.0
    %v4755 = vadd.f32 %v4753, %v4754
    %v4756 = vsel %vm4660, %v4196, 0.0
    %v4757 = vadd.f32 %v4755, %v4756
    %v4758 = vsel %vm4660, %v4197, 0.0
    %v4759 = vadd.f32 %v4757, %v4758
    %v4760 = vsel %vm4660, %v4198, 0.0
    %v4761 = vadd.f32 %v4759, %v4760
    %v4762 = vsel %vm4660, %v4199, 0.0
    %v4763 = vadd.f32 %v4761, %v4762
    %v4764 = vsel %vm4660, %v4200, 0.0
    %v4765 = vadd.f32 %v4763, %v4764
    %v4766 = vsel %vm4660, %v4201, 0.0
    %v4767 = vadd.f32 %v4765, %v4766
    %v4768 = vsel %vm4660, %v4202, 0.0
    %v4769 = vadd.f32 %v4767, %v4768
    %v4770 = vsel %vm4660, %v4203, 0.0
    %v4771 = vadd.f32 %v4769, %v4770
    %v4772 = vsel %vm4660, %v4204, 0.0
    %v4773 = vadd.f32 %v4771, %v4772
    %v4774 = vsel %vm4660, %v4205, 0.0
    %v4775 = vadd.f32 %v4773, %v4774
    %v4776 = vsel %vm4660, %v4206, 0.0
    %v4777 = vadd.f32 %v4775, %v4776
    %v4778 = vsel %vm4660, %v4207, 0.0
    %v4779 = vadd.f32 %v4777, %v4778
    %v4780 = vsel %vm4660, %v4208, 0.0
    %v4781 = vadd.f32 %v4779, %v4780
    %v4782 = vsel %vm4660, %v4209, 0.0
    %v4783 = vadd.f32 %v4781, %v4782
    %v4784 = vsel %vm4660, %v4210, 0.0
    %v4785 = vadd.f32 %v4783, %v4784
    %v4786 = vsel %vm4660, %v4211, 0.0
    %v4787 = vadd.f32 %v4785, %v4786
    %v4788 = vsel %vm4660, %v4212, 0.0
    %v4789 = vadd.f32 %v4787, %v4788
    %v4790 = vsel %vm4660, %v4213, 0.0
    %v4791 = vadd.f32 %v4789, %v4790
    %v4792 = vsel %vm4660, %v4214, 0.0
    %v4793 = vadd.f32 %v4791, %v4792
    %v4794 = vsel %vm4660, %v4215, 0.0
    %v4795 = vadd.f32 %v4793, %v4794
    %v4796 = vsel %vm4660, %v4216, 0.0
    %v4797 = vadd.f32 %v4795, %v4796
    %v4798 = vsel %vm4660, %v4217, 0.0
    %v4799 = vadd.f32 %v4797, %v4798
    %v4800 = vsel %vm4660, %v4218, 0.0
    %v4801 = vadd.f32 %v4799, %v4800
    %v4802 = vsel %vm4660, %v4219, 0.0
    %v4803 = vadd.f32 %v4801, %v4802
    %v4804 = vsel %vm4660, %v4220, 0.0
    %v4805 = vadd.f32 %v4803, %v4804
    %v4806 = vsel %vm4660, %v4221, 0.0
    %v4807 = vadd.f32 %v4805, %v4806
    %v4808 = vsel %vm4660, %v4222, 0.0
    %v4809 = vadd.f32 %v4807, %v4808
    %v4810 = vsel %vm4660, %v4223, 0.0
    %v4811 = vadd.f32 %v4809, %v4810
    %v4812 = vsel %vm4660, %v4224, 0.0
    %v4813 = vadd.f32 %v4811, %v4812
    %v4814 = vsel %vm4660, %v4225, 0.0
    %v4815 = vadd.f32 %v4813, %v4814
    %v4816 = vsel %vm4660, %v4226, 0.0
    %v4817 = vadd.f32 %v4815, %v4816
    %v4818 = vsel %vm4660, %v4227, 0.0
    %v4819 = vadd.f32 %v4817, %v4818
    %v4820 = vsel %vm4660, %v4228, 0.0
    %v4821 = vadd.f32 %v4819, %v4820
    %v4822 = vsel %vm4660, %v4229, 0.0
    %v4823 = vadd.f32 %v4821, %v4822
    %v4824 = vsel %vm4660, %v4230, 0.0
    %v4825 = vadd.f32 %v4823, %v4824
    %v4826 = vsel %vm4660, %v4231, 0.0
    %v4827 = vadd.f32 %v4825, %v4826
    %v4828 = vsel %vm4660, %v4232, 0.0
    %v4829 = vadd.f32 %v4827, %v4828
    %v4830 = vsel %vm4660, %v4233, 0.0
    %v4831 = vadd.f32 %v4829, %v4830
    %v4832 = vsel %vm4660, %v4234, 0.0
    %v4833 = vadd.f32 %v4831, %v4832
    %v4834 = vsel %vm4660, %v4235, 0.0
    %v4835 = vadd.f32 %v4833, %v4834
    %v4836 = vsel %vm4660, %v4236, 0.0
    %v4837 = vadd.f32 %v4835, %v4836
    %v4838 = vsel %vm4660, %v4237, 0.0
    %v4839 = vadd.f32 %v4837, %v4838
    %v4840 = vsel %vm4660, %v4238, 0.0
    %v4841 = vadd.f32 %v4839, %v4840
    %v4842 = vsel %vm4660, %v4239, 0.0
    %v4843 = vadd.f32 %v4841, %v4842
    %v4844 = vsel %vm4660, %v4240, 0.0
    %v4845 = vadd.f32 %v4843, %v4844
    %v4846 = vsel %vm4660, %v4241, 0.0
    %v4847 = vadd.f32 %v4845, %v4846
    %v4848 = vsel %vm4660, %v4242, 0.0
    %v4849 = vadd.f32 %v4847, %v4848
    %v4850 = vsel %vm4660, %v4243, 0.0
    %v4851 = vadd.f32 %v4849, %v4850
    %v4852 = vsel %vm4660, %v4244, 0.0
    %v4853 = vadd.f32 %v4851, %v4852
    %v4854 = vsel %vm4660, %v4245, 0.0
    %v4855 = vadd.f32 %v4853, %v4854
    %v4856 = vsel %vm4660, %v4246, 0.0
    %v4857 = vadd.f32 %v4855, %v4856
    %v4858 = vsel %vm4660, %v4247, 0.0
    %v4859 = vadd.f32 %v4857, %v4858
    %v4860 = vsel %vm4660, %v4248, 0.0
    %v4861 = vadd.f32 %v4859, %v4860
    %v4862 = vsel %vm4660, %v4249, 0.0
    %v4863 = vadd.f32 %v4861, %v4862
    %v4864 = vsel %vm4660, %v4250, 0.0
    %v4865 = vadd.f32 %v4863, %v4864
    %v4866 = vsel %vm4660, %v4251, 0.0
    %v4867 = vadd.f32 %v4865, %v4866
    %v4868 = vsel %vm4660, %v4252, 0.0
    %v4869 = vadd.f32 %v4867, %v4868
    %v4870 = vsel %vm4660, %v4253, 0.0
    %v4871 = vadd.f32 %v4869, %v4870
    %v4872 = vsel %vm4660, %v4254, 0.0
    %v4873 = vadd.f32 %v4871, %v4872
    %v4874 = vsel %vm4660, %v4255, 0.0
    %v4875 = vadd.f32 %v4873, %v4874
    %v4876 = vsel %vm4660, %v4256, 0.0
    %v4877 = vadd.f32 %v4875, %v4876
    %v4878 = vsel %vm4660, %v4257, 0.0
    %v4879 = vadd.f32 %v4877, %v4878
    %v4880 = vsel %vm4660, %v4258, 0.0
    %v4881 = vadd.f32 %v4879, %v4880
    %v4882 = vsel %vm4660, %v4259, 0.0
    %v4883 = vadd.f32 %v4881, %v4882
    %v4884 = vsel %vm4660, %v4260, 0.0
    %v4885 = vadd.f32 %v4883, %v4884
    %v4886 = vsel %vm4660, %v4261, 0.0
    %v4887 = vadd.f32 %v4885, %v4886
    %v4888 = vsel %vm4660, %v4262, 0.0
    %v4889 = vadd.f32 %v4887, %v4888
    %v4890 = vsel %vm4660, %v4263, 0.0
    %v4891 = vadd.f32 %v4889, %v4890
    %v4892 = vsel %vm4660, %v4264, 0.0
    %v4893 = vadd.f32 %v4891, %v4892
    %v4894 = vsel %vm4660, %v4265, 0.0
    %v4895 = vadd.f32 %v4893, %v4894
    %v4896 = vsel %vm4660, %v4266, 0.0
    %v4897 = vadd.f32 %v4895, %v4896
    %v4898 = vsel %vm4660, %v4267, 0.0
    %v4899 = vadd.f32 %v4897, %v4898
    %v4900 = vsel %vm4660, %v4268, 0.0
    %v4901 = vadd.f32 %v4899, %v4900
    %v4902 = vsel %vm4660, %v4269, 0.0
    %v4903 = vadd.f32 %v4901, %v4902
    %v4904 = vsel %vm4660, %v4270, 0.0
    %v4905 = vadd.f32 %v4903, %v4904
    %v4906 = vsel %vm4660, %v4271, 0.0
    %v4907 = vadd.f32 %v4905, %v4906
    %v4908 = vsel %vm4660, %v4272, 0.0
    %v4909 = vadd.f32 %v4907, %v4908
    %v4910 = vsel %vm4660, %v4273, 0.0
    %v4911 = vadd.f32 %v4909, %v4910
    %v4912 = vsel %vm4660, %v4274, 0.0
    %v4913 = vadd.f32 %v4911, %v4912
    %v4914 = vsel %vm4660, %v4275, 0.0
    %v4915 = vadd.f32 %v4913, %v4914
    %v4916 = vsel %vm4660, %v4276, 0.0
    %v4917 = vadd.f32 %v4915, %v4916
    %v4918 = vsel %vm4660, %v4277, 0.0
    %v4919 = vadd.f32 %v4917, %v4918
    %v4920 = vsel %vm4660, %v4278, 0.0
    %v4921 = vadd.f32 %v4919, %v4920
    %v4922 = vsel %vm4660, %v4279, 0.0
    %v4923 = vadd.f32 %v4921, %v4922
    %v4924 = vsel %vm4660, %v4280, 0.0
    %v4925 = vadd.f32 %v4923, %v4924
    %v4926 = vsel %vm4660, %v4281, 0.0
    %v4927 = vadd.f32 %v4925, %v4926
    %v4928 = vsel %vm4660, %v4282, 0.0
    %v4929 = vadd.f32 %v4927, %v4928
    %v4930 = vsel %vm4660, %v4283, 0.0
    %v4931 = vadd.f32 %v4929, %v4930
    %v4932 = vsel %vm4660, %v4284, 0.0
    %v4933 = vadd.f32 %v4931, %v4932
    %v4934 = vsel %vm4660, %v4285, 0.0
    %v4935 = vadd.f32 %v4933, %v4934
    %v4936 = vsel %vm4660, %v4286, 0.0
    %v4937 = vadd.f32 %v4935, %v4936
    %v4938 = vsel %vm4660, %v4287, 0.0
    %v4939 = vadd.f32 %v4937, %v4938
    %v4940 = vsel %vm4660, %v4288, 0.0
    %v4941 = vadd.f32 %v4939, %v4940
    %v4942 = vsel %vm4660, %v4289, 0.0
    %v4943 = vadd.f32 %v4941, %v4942
    %v4944 = vsel %vm4660, %v4290, 0.0
    %v4945 = vadd.f32 %v4943, %v4944
    %v4946 = vsel %vm4660, %v4291, 0.0
    %v4947 = vadd.f32 %v4945, %v4946
    %v4948 = vsel %vm4660, %v4292, 0.0
    %v4949 = vadd.f32 %v4947, %v4948
    %v4950 = vsel %vm4660, %v4293, 0.0
    %v4951 = vadd.f32 %v4949, %v4950
    %v4952 = vsel %vm4660, %v4294, 0.0
    %v4953 = vadd.f32 %v4951, %v4952
    %v4954 = vsel %vm4660, %v4295, 0.0
    %v4955 = vadd.f32 %v4953, %v4954
    %v4956 = vsel %vm4660, %v4296, 0.0
    %v4957 = vadd.f32 %v4955, %v4956
    %v4958 = vsel %vm4660, %v4297, 0.0
    %v4959 = vadd.f32 %v4957, %v4958
    %v4960 = vsel %vm4660, %v4298, 0.0
    %v4961 = vadd.f32 %v4959, %v4960
    %v4962 = vsel %vm4660, %v4299, 0.0
    %v4963 = vadd.f32 %v4961, %v4962
    %v4964 = vsel %vm4660, %v4300, 0.0
    %v4965 = vadd.f32 %v4963, %v4964
    %v4966 = vsel %vm4660, %v4301, 0.0
    %v4967 = vadd.f32 %v4965, %v4966
    %v4968 = vsel %vm4660, %v4302, 0.0
    %v4969 = vadd.f32 %v4967, %v4968
    %v4970 = vsel %vm4660, %v4303, 0.0
    %v4971 = vadd.f32 %v4969, %v4970
    %v4972 = vsel %vm4660, %v4304, 0.0
    %v4973 = vadd.f32 %v4971, %v4972
    %v4974 = vsel %vm4660, %v4305, 0.0
    %v4975 = vadd.f32 %v4973, %v4974
    %v4976 = vsel %vm4660, %v4306, 0.0
    %v4977 = vadd.f32 %v4975, %v4976
    %v4978 = vsel %vm4660, %v4307, 0.0
    %v4979 = vadd.f32 %v4977, %v4978
    %v4980 = vsel %vm4660, %v4308, 0.0
    %v4981 = vadd.f32 %v4979, %v4980
    %v4982 = vsel %vm4660, %v4309, 0.0
    %v4983 = vadd.f32 %v4981, %v4982
    %v4984 = vsel %vm4660, %v4310, 0.0
    %v4985 = vadd.f32 %v4983, %v4984
    %v4986 = vsel %vm4660, %v4311, 0.0
    %v4987 = vadd.f32 %v4985, %v4986
    %v4988 = vsel %vm4660, %v4312, 0.0
    %v4989 = vadd.f32 %v4987, %v4988
    %v4990 = vsel %vm4660, %v4313, 0.0
    %v4991 = vadd.f32 %v4989, %v4990
    %v4992 = vsel %vm4660, %v4314, 0.0
    %v4993 = vadd.f32 %v4991, %v4992
    %v4994 = vsel %vm4660, %v4315, 0.0
    %v4995 = vadd.f32 %v4993, %v4994
    %v4996 = vsel %vm4660, %v4316, 0.0
    %v4997 = vadd.f32 %v4995, %v4996
    %v4998 = vsel %vm4660, %v4317, 0.0
    %v4999 = vadd.f32 %v4997, %v4998
    %v5000 = vsel %vm4660, %v4318, 0.0
    %v5001 = vadd.f32 %v4999, %v5000
    %v5002 = vsel %vm4660, %v4319, 0.0
    %v5003 = vadd.f32 %v5001, %v5002
    %v5004 = vsel %vm4660, %v4320, 0.0
    %v5005 = vadd.f32 %v5003, %v5004
    %v5006 = vsel %vm4660, %v4321, 0.0
    %v5007 = vadd.f32 %v5005, %v5006
    %v5008 = vsel %vm4660, %v4322, 0.0
    %v5009 = vadd.f32 %v5007, %v5008
    %v5010 = vsel %vm4660, %v4323, 0.0
    %v5011 = vadd.f32 %v5009, %v5010
    %v5012 = vsel %vm4660, %v4324, 0.0
    %v5013 = vadd.f32 %v5011, %v5012
    %v5014 = vsel %vm4660, %v4325, 0.0
    %v5015 = vadd.f32 %v5013, %v5014
    %v5016 = vsel %vm4660, %v4326, 0.0
    %v5017 = vadd.f32 %v5015, %v5016
    %v5018 = vsel %vm4660, %v4327, 0.0
    %v5019 = vadd.f32 %v5017, %v5018
    %v5020 = vsel %vm4660, %v4328, 0.0
    %v5021 = vadd.f32 %v5019, %v5020
    %v5022 = vsel %vm4660, %v4329, 0.0
    %v5023 = vadd.f32 %v5021, %v5022
    %v5024 = vsel %vm4660, %v4330, 0.0
    %v5025 = vadd.f32 %v5023, %v5024
    %v5026 = vsel %vm4660, %v4331, 0.0
    %v5027 = vadd.f32 %v5025, %v5026
    %v5028 = vsel %vm4660, %v4332, 0.0
    %v5029 = vadd.f32 %v5027, %v5028
    %v5030 = vsel %vm4660, %v4333, 0.0
    %v5031 = vadd.f32 %v5029, %v5030
    %v5032 = vsel %vm4660, %v4334, 0.0
    %v5033 = vadd.f32 %v5031, %v5032
    %v5034 = vsel %vm4660, %v4335, 0.0
    %v5035 = vadd.f32 %v5033, %v5034
    %v5036 = vsel %vm4660, %v4336, 0.0
    %v5037 = vadd.f32 %v5035, %v5036
    %v5038 = vsel %vm4660, %v4337, 0.0
    %v5039 = vadd.f32 %v5037, %v5038
    %v5040 = vsel %vm4660, %v4338, 0.0
    %v5041 = vadd.f32 %v5039, %v5040
    %v5042 = vsel %vm4660, %v4339, 0.0
    %v5043 = vadd.f32 %v5041, %v5042
    %v5044 = vsel %vm4660, %v4340, 0.0
    %v5045 = vadd.f32 %v5043, %v5044
    %v5046 = vsel %vm4660, %v4341, 0.0
    %v5047 = vadd.f32 %v5045, %v5046
    %v5048 = vsel %vm4660, %v4342, 0.0
    %v5049 = vadd.f32 %v5047, %v5048
    %v5050 = vsel %vm4660, %v4343, 0.0
    %v5051 = vadd.f32 %v5049, %v5050
    %v5052 = vsel %vm4660, %v4344, 0.0
    %v5053 = vadd.f32 %v5051, %v5052
    %v5054 = vsel %vm4660, %v4345, 0.0
    %v5055 = vadd.f32 %v5053, %v5054
    %v5056 = vsel %vm4660, %v4346, 0.0
    %v5057 = vadd.f32 %v5055, %v5056
    %v5058 = vsel %vm4660, %v4347, 0.0
    %v5059 = vadd.f32 %v5057, %v5058
    %v5060 = vsel %vm4660, %v4348, 0.0
    %v5061 = vadd.f32 %v5059, %v5060
    %v5062 = vsel %vm4660, %v4349, 0.0
    %v5063 = vadd.f32 %v5061, %v5062
    %v5064 = vsel %vm4660, %v4350, 0.0
    %v5065 = vadd.f32 %v5063, %v5064
    %v5066 = vsel %vm4660, %v4351, 0.0
    %v5067 = vadd.f32 %v5065, %v5066
    %v5068 = vsel %vm4660, %v4352, 0.0
    %v5069 = vadd.f32 %v5067, %v5068
    %v5070 = vsel %vm4660, %v4353, 0.0
    %v5071 = vadd.f32 %v5069, %v5070
    %v5072 = vsel %vm4660, %v4354, 0.0
    %v5073 = vadd.f32 %v5071, %v5072
    %v5074 = vsel %vm4660, %v4355, 0.0
    %v5075 = vadd.f32 %v5073, %v5074
    %v5076 = vsel %vm4660, %v4356, 0.0
    %v5077 = vadd.f32 %v5075, %v5076
    %v5078 = vsel %vm4660, %v4357, 0.0
    %v5079 = vadd.f32 %v5077, %v5078
    %v5080 = vsel %vm4660, %v4358, 0.0
    %v5081 = vadd.f32 %v5079, %v5080
    %v5082 = vsel %vm4660, %v4359, 0.0
    %v5083 = vadd.f32 %v5081, %v5082
    %v5084 = vsel %vm4660, %v4360, 0.0
    %v5085 = vadd.f32 %v5083, %v5084
    %v5086 = vsel %vm4660, %v4361, 0.0
    %v5087 = vadd.f32 %v5085, %v5086
    %v5088 = vsel %vm4660, %v4362, 0.0
    %v5089 = vadd.f32 %v5087, %v5088
    %v5090 = vsel %vm4660, %v4363, 0.0
    %v5091 = vadd.f32 %v5089, %v5090
    %v5092 = vsel %vm4660, %v4364, 0.0
    %v5093 = vadd.f32 %v5091, %v5092
    %v5094 = vsel %vm4660, %v4365, 0.0
    %v5095 = vadd.f32 %v5093, %v5094
    %v5096 = vsel %vm4660, %v4366, 0.0
    %v5097 = vadd.f32 %v5095, %v5096
    %v5098 = vsel %vm4660, %v4367, 0.0
    %v5099 = vadd.f32 %v5097, %v5098
    %v5100 = vsel %vm4660, %v4368, 0.0
    %v5101 = vadd.f32 %v5099, %v5100
    %v5102 = vsel %vm4660, %v4369, 0.0
    %v5103 = vadd.f32 %v5101, %v5102
    %v5104 = vsel %vm4660, %v4370, 0.0
    %v5105 = vadd.f32 %v5103, %v5104
    %v5106 = vsel %vm4660, %v4371, 0.0
    %v5107 = vadd.f32 %v5105, %v5106
    %v5108 = vsel %vm4660, %v4372, 0.0
    %v5109 = vadd.f32 %v5107, %v5108
    %v5110 = vsel %vm4660, %v4373, 0.0
    %v5111 = vadd.f32 %v5109, %v5110
    %v5112 = vsel %vm4660, %v4374, 0.0
    %v5113 = vadd.f32 %v5111, %v5112
    %v5114 = vsel %vm4660, %v4375, 0.0
    %v5115 = vadd.f32 %v5113, %v5114
    %v5116 = vsel %vm4660, %v4376, 0.0
    %v5117 = vadd.f32 %v5115, %v5116
    %v5118 = vsel %vm4660, %v4377, 0.0
    %v5119 = vadd.f32 %v5117, %v5118
    %v5120 = vsel %vm4660, %v4378, 0.0
    %v5121 = vadd.f32 %v5119, %v5120
    %v5122 = vsel %vm4660, %v4379, 0.0
    %v5123 = vadd.f32 %v5121, %v5122
    %v5124 = vsel %vm4660, %v4380, 0.0
    %v5125 = vadd.f32 %v5123, %v5124
    %v5126 = vsel %vm4660, %v4381, 0.0
    %v5127 = vadd.f32 %v5125, %v5126
    %v5128 = vsel %vm4660, %v4382, 0.0
    %v5129 = vadd.f32 %v5127, %v5128
    %v5130 = vsel %vm4660, %v4383, 0.0
    %v5131 = vadd.f32 %v5129, %v5130
    %v5132 = vsel %vm4660, %v4384, 0.0
    %v5133 = vadd.f32 %v5131, %v5132
    %v5134 = vsel %vm4660, %v4385, 0.0
    %v5135 = vadd.f32 %v5133, %v5134
    %v5136 = vsel %vm4660, %v4386, 0.0
    %v5137 = vadd.f32 %v5135, %v5136
    %v5138 = vsel %vm4660, %v4387, 0.0
    %v5139 = vadd.f32 %v5137, %v5138
    %v5140 = vsel %vm4660, %v4388, 0.0
    %v5141 = vadd.f32 %v5139, %v5140
    %v5142 = vsel %vm4660, %v4389, 0.0
    %v5143 = vadd.f32 %v5141, %v5142
    %v5144 = vsel %vm4660, %v4390, 0.0
    %v5145 = vadd.f32 %v5143, %v5144
    %v5146 = vsel %vm4660, %v4391, 0.0
    %v5147 = vadd.f32 %v5145, %v5146
    %v5148 = vsel %vm4660, %v4392, 0.0
    %v5149 = vadd.f32 %v5147, %v5148
    %v5150 = vsel %vm4660, %v4393, 0.0
    %v5151 = vadd.f32 %v5149, %v5150
    %v5152 = vsel %vm4660, %v4394, 0.0
    %v5153 = vadd.f32 %v5151, %v5152
    %v5154 = vsel %vm4660, %v4395, 0.0
    %v5155 = vadd.f32 %v5153, %v5154
    %v5156 = vsel %vm4660, %v4396, 0.0
    %v5157 = vadd.f32 %v5155, %v5156
    %v5158 = vsel %vm4660, %v4397, 0.0
    %v5159 = vadd.f32 %v5157, %v5158
    %v5160 = vsel %vm4660, %v4398, 0.0
    %v5161 = vadd.f32 %v5159, %v5160
    %v5162 = vsel %vm4660, %v4399, 0.0
    %v5163 = vadd.f32 %v5161, %v5162
    %v5164 = vsel %vm4660, %v4400, 0.0
    %v5165 = vadd.f32 %v5163, %v5164
    %v5166 = vsel %vm4660, %v4401, 0.0
    %v5167 = vadd.f32 %v5165, %v5166
    %v5168 = vsel %vm4660, %v4402, 0.0
    %v5169 = vadd.f32 %v5167, %v5168
    %v5170 = vsel %vm4660, %v4403, 0.0
    %v5171 = vadd.f32 %v5169, %v5170
    %5172 = vadd.xlane.f32.xlu0 %v5171
    %v5173 = vpop.xlane.xlu0 %5172
    %v5174 = vsel %vm4660, %v4404, 0.0
    %v5175 = vsel %vm4660, %v4405, 0.0
    %v5176 = vadd.f32 %v5174, %v5175
    %v5177 = vsel %vm4660, %v4406, 0.0
    %v5178 = vadd.f32 %v5176, %v5177
    %v5179 = vsel %vm4660, %v4407, 0.0
    %v5180 = vadd.f32 %v5178, %v5179
    %v5181 = vsel %vm4660, %v4408, 0.0
    %v5182 = vadd.f32 %v5180, %v5181
    %v5183 = vsel %vm4660, %v4409, 0.0
    %v5184 = vadd.f32 %v5182, %v5183
    %v5185 = vsel %vm4660, %v4410, 0.0
    %v5186 = vadd.f32 %v5184, %v5185
    %v5187 = vsel %vm4660, %v4411, 0.0
    %v5188 = vadd.f32 %v5186, %v5187
    %v5189 = vsel %vm4660, %v4412, 0.0
    %v5190 = vadd.f32 %v5188, %v5189
    %v5191 = vsel %vm4660, %v4413, 0.0
    %v5192 = vadd.f32 %v5190, %v5191
    %v5193 = vsel %vm4660, %v4414, 0.0
    %v5194 = vadd.f32 %v5192, %v5193
    %v5195 = vsel %vm4660, %v4415, 0.0
    %v5196 = vadd.f32 %v5194, %v5195
    %v5197 = vsel %vm4660, %v4416, 0.0
    %v5198 = vadd.f32 %v5196, %v5197
    %v5199 = vsel %vm4660, %v4417, 0.0
    %v5200 = vadd.f32 %v5198, %v5199
    %v5201 = vsel %vm4660, %v4418, 0.0
    %v5202 = vadd.f32 %v5200, %v5201
    %v5203 = vsel %vm4660, %v4419, 0.0
    %v5204 = vadd.f32 %v5202, %v5203
    %v5205 = vsel %vm4660, %v4420, 0.0
    %v5206 = vadd.f32 %v5204, %v5205
    %v5207 = vsel %vm4660, %v4421, 0.0
    %v5208 = vadd.f32 %v5206, %v5207
    %v5209 = vsel %vm4660, %v4422, 0.0
    %v5210 = vadd.f32 %v5208, %v5209
    %v5211 = vsel %vm4660, %v4423, 0.0
    %v5212 = vadd.f32 %v5210, %v5211
    %v5213 = vsel %vm4660, %v4424, 0.0
    %v5214 = vadd.f32 %v5212, %v5213
    %v5215 = vsel %vm4660, %v4425, 0.0
    %v5216 = vadd.f32 %v5214, %v5215
    %v5217 = vsel %vm4660, %v4426, 0.0
    %v5218 = vadd.f32 %v5216, %v5217
    %v5219 = vsel %vm4660, %v4427, 0.0
    %v5220 = vadd.f32 %v5218, %v5219
    %v5221 = vsel %vm4660, %v4428, 0.0
    %v5222 = vadd.f32 %v5220, %v5221
    %v5223 = vsel %vm4660, %v4429, 0.0
    %v5224 = vadd.f32 %v5222, %v5223
    %v5225 = vsel %vm4660, %v4430, 0.0
    %v5226 = vadd.f32 %v5224, %v5225
    %v5227 = vsel %vm4660, %v4431, 0.0
    %v5228 = vadd.f32 %v5226, %v5227
    %v5229 = vsel %vm4660, %v4432, 0.0
    %v5230 = vadd.f32 %v5228, %v5229
    %v5231 = vsel %vm4660, %v4433, 0.0
    %v5232 = vadd.f32 %v5230, %v5231
    %v5233 = vsel %vm4660, %v4434, 0.0
    %v5234 = vadd.f32 %v5232, %v5233
    %v5235 = vsel %vm4660, %v4435, 0.0
    %v5236 = vadd.f32 %v5234, %v5235
    %v5237 = vsel %vm4660, %v4436, 0.0
    %v5238 = vadd.f32 %v5236, %v5237
    %v5239 = vsel %vm4660, %v4437, 0.0
    %v5240 = vadd.f32 %v5238, %v5239
    %v5241 = vsel %vm4660, %v4438, 0.0
    %v5242 = vadd.f32 %v5240, %v5241
    %v5243 = vsel %vm4660, %v4439, 0.0
    %v5244 = vadd.f32 %v5242, %v5243
    %v5245 = vsel %vm4660, %v4440, 0.0
    %v5246 = vadd.f32 %v5244, %v5245
    %v5247 = vsel %vm4660, %v4441, 0.0
    %v5248 = vadd.f32 %v5246, %v5247
    %v5249 = vsel %vm4660, %v4442, 0.0
    %v5250 = vadd.f32 %v5248, %v5249
    %v5251 = vsel %vm4660, %v4443, 0.0
    %v5252 = vadd.f32 %v5250, %v5251
    %v5253 = vsel %vm4660, %v4444, 0.0
    %v5254 = vadd.f32 %v5252, %v5253
    %v5255 = vsel %vm4660, %v4445, 0.0
    %v5256 = vadd.f32 %v5254, %v5255
    %v5257 = vsel %vm4660, %v4446, 0.0
    %v5258 = vadd.f32 %v5256, %v5257
    %v5259 = vsel %vm4660, %v4447, 0.0
    %v5260 = vadd.f32 %v5258, %v5259
    %v5261 = vsel %vm4660, %v4448, 0.0
    %v5262 = vadd.f32 %v5260, %v5261
    %v5263 = vsel %vm4660, %v4449, 0.0
    %v5264 = vadd.f32 %v5262, %v5263
    %v5265 = vsel %vm4660, %v4450, 0.0
    %v5266 = vadd.f32 %v5264, %v5265
    %v5267 = vsel %vm4660, %v4451, 0.0
    %v5268 = vadd.f32 %v5266, %v5267
    %v5269 = vsel %vm4660, %v4452, 0.0
    %v5270 = vadd.f32 %v5268, %v5269
    %v5271 = vsel %vm4660, %v4453, 0.0
    %v5272 = vadd.f32 %v5270, %v5271
    %v5273 = vsel %vm4660, %v4454, 0.0
    %v5274 = vadd.f32 %v5272, %v5273
    %v5275 = vsel %vm4660, %v4455, 0.0
    %v5276 = vadd.f32 %v5274, %v5275
    %v5277 = vsel %vm4660, %v4456, 0.0
    %v5278 = vadd.f32 %v5276, %v5277
    %v5279 = vsel %vm4660, %v4457, 0.0
    %v5280 = vadd.f32 %v5278, %v5279
    %v5281 = vsel %vm4660, %v4458, 0.0
    %v5282 = vadd.f32 %v5280, %v5281
    %v5283 = vsel %vm4660, %v4459, 0.0
    %v5284 = vadd.f32 %v5282, %v5283
    %v5285 = vsel %vm4660, %v4460, 0.0
    %v5286 = vadd.f32 %v5284, %v5285
    %v5287 = vsel %vm4660, %v4461, 0.0
    %v5288 = vadd.f32 %v5286, %v5287
    %v5289 = vsel %vm4660, %v4462, 0.0
    %v5290 = vadd.f32 %v5288, %v5289
    %v5291 = vsel %vm4660, %v4463, 0.0
    %v5292 = vadd.f32 %v5290, %v5291
    %v5293 = vsel %vm4660, %v4464, 0.0
    %v5294 = vadd.f32 %v5292, %v5293
    %v5295 = vsel %vm4660, %v4465, 0.0
    %v5296 = vadd.f32 %v5294, %v5295
    %v5297 = vsel %vm4660, %v4466, 0.0
    %v5298 = vadd.f32 %v5296, %v5297
    %v5299 = vsel %vm4660, %v4467, 0.0
    %v5300 = vadd.f32 %v5298, %v5299
    %v5301 = vsel %vm4660, %v4468, 0.0
    %v5302 = vadd.f32 %v5300, %v5301
    %v5303 = vsel %vm4660, %v4469, 0.0
    %v5304 = vadd.f32 %v5302, %v5303
    %v5305 = vsel %vm4660, %v4470, 0.0
    %v5306 = vadd.f32 %v5304, %v5305
    %v5307 = vsel %vm4660, %v4471, 0.0
    %v5308 = vadd.f32 %v5306, %v5307
    %v5309 = vsel %vm4660, %v4472, 0.0
    %v5310 = vadd.f32 %v5308, %v5309
    %v5311 = vsel %vm4660, %v4473, 0.0
    %v5312 = vadd.f32 %v5310, %v5311
    %v5313 = vsel %vm4660, %v4474, 0.0
    %v5314 = vadd.f32 %v5312, %v5313
    %v5315 = vsel %vm4660, %v4475, 0.0
    %v5316 = vadd.f32 %v5314, %v5315
    %v5317 = vsel %vm4660, %v4476, 0.0
    %v5318 = vadd.f32 %v5316, %v5317
    %v5319 = vsel %vm4660, %v4477, 0.0
    %v5320 = vadd.f32 %v5318, %v5319
    %v5321 = vsel %vm4660, %v4478, 0.0
    %v5322 = vadd.f32 %v5320, %v5321
    %v5323 = vsel %vm4660, %v4479, 0.0
    %v5324 = vadd.f32 %v5322, %v5323
    %v5325 = vsel %vm4660, %v4480, 0.0
    %v5326 = vadd.f32 %v5324, %v5325
    %v5327 = vsel %vm4660, %v4481, 0.0
    %v5328 = vadd.f32 %v5326, %v5327
    %v5329 = vsel %vm4660, %v4482, 0.0
    %v5330 = vadd.f32 %v5328, %v5329
    %v5331 = vsel %vm4660, %v4483, 0.0
    %v5332 = vadd.f32 %v5330, %v5331
    %v5333 = vsel %vm4660, %v4484, 0.0
    %v5334 = vadd.f32 %v5332, %v5333
    %v5335 = vsel %vm4660, %v4485, 0.0
    %v5336 = vadd.f32 %v5334, %v5335
    %v5337 = vsel %vm4660, %v4486, 0.0
    %v5338 = vadd.f32 %v5336, %v5337
    %v5339 = vsel %vm4660, %v4487, 0.0
    %v5340 = vadd.f32 %v5338, %v5339
    %v5341 = vsel %vm4660, %v4488, 0.0
    %v5342 = vadd.f32 %v5340, %v5341
    %v5343 = vsel %vm4660, %v4489, 0.0
    %v5344 = vadd.f32 %v5342, %v5343
    %v5345 = vsel %vm4660, %v4490, 0.0
    %v5346 = vadd.f32 %v5344, %v5345
    %v5347 = vsel %vm4660, %v4491, 0.0
    %v5348 = vadd.f32 %v5346, %v5347
    %v5349 = vsel %vm4660, %v4492, 0.0
    %v5350 = vadd.f32 %v5348, %v5349
    %v5351 = vsel %vm4660, %v4493, 0.0
    %v5352 = vadd.f32 %v5350, %v5351
    %v5353 = vsel %vm4660, %v4494, 0.0
    %v5354 = vadd.f32 %v5352, %v5353
    %v5355 = vsel %vm4660, %v4495, 0.0
    %v5356 = vadd.f32 %v5354, %v5355
    %v5357 = vsel %vm4660, %v4496, 0.0
    %v5358 = vadd.f32 %v5356, %v5357
    %v5359 = vsel %vm4660, %v4497, 0.0
    %v5360 = vadd.f32 %v5358, %v5359
    %v5361 = vsel %vm4660, %v4498, 0.0
    %v5362 = vadd.f32 %v5360, %v5361
    %v5363 = vsel %vm4660, %v4499, 0.0
    %v5364 = vadd.f32 %v5362, %v5363
    %v5365 = vsel %vm4660, %v4500, 0.0
    %v5366 = vadd.f32 %v5364, %v5365
    %v5367 = vsel %vm4660, %v4501, 0.0
    %v5368 = vadd.f32 %v5366, %v5367
    %v5369 = vsel %vm4660, %v4502, 0.0
    %v5370 = vadd.f32 %v5368, %v5369
    %v5371 = vsel %vm4660, %v4503, 0.0
    %v5372 = vadd.f32 %v5370, %v5371
    %v5373 = vsel %vm4660, %v4504, 0.0
    %v5374 = vadd.f32 %v5372, %v5373
    %v5375 = vsel %vm4660, %v4505, 0.0
    %v5376 = vadd.f32 %v5374, %v5375
    %v5377 = vsel %vm4660, %v4506, 0.0
    %v5378 = vadd.f32 %v5376, %v5377
    %v5379 = vsel %vm4660, %v4507, 0.0
    %v5380 = vadd.f32 %v5378, %v5379
    %v5381 = vsel %vm4660, %v4508, 0.0
    %v5382 = vadd.f32 %v5380, %v5381
    %v5383 = vsel %vm4660, %v4509, 0.0
    %v5384 = vadd.f32 %v5382, %v5383
    %v5385 = vsel %vm4660, %v4510, 0.0
    %v5386 = vadd.f32 %v5384, %v5385
    %v5387 = vsel %vm4660, %v4511, 0.0
    %v5388 = vadd.f32 %v5386, %v5387
    %v5389 = vsel %vm4660, %v4512, 0.0
    %v5390 = vadd.f32 %v5388, %v5389
    %v5391 = vsel %vm4660, %v4513, 0.0
    %v5392 = vadd.f32 %v5390, %v5391
    %v5393 = vsel %vm4660, %v4514, 0.0
    %v5394 = vadd.f32 %v5392, %v5393
    %v5395 = vsel %vm4660, %v4515, 0.0
    %v5396 = vadd.f32 %v5394, %v5395
    %v5397 = vsel %vm4660, %v4516, 0.0
    %v5398 = vadd.f32 %v5396, %v5397
    %v5399 = vsel %vm4660, %v4517, 0.0
    %v5400 = vadd.f32 %v5398, %v5399
    %v5401 = vsel %vm4660, %v4518, 0.0
    %v5402 = vadd.f32 %v5400, %v5401
    %v5403 = vsel %vm4660, %v4519, 0.0
    %v5404 = vadd.f32 %v5402, %v5403
    %v5405 = vsel %vm4660, %v4520, 0.0
    %v5406 = vadd.f32 %v5404, %v5405
    %v5407 = vsel %vm4660, %v4521, 0.0
    %v5408 = vadd.f32 %v5406, %v5407
    %v5409 = vsel %vm4660, %v4522, 0.0
    %v5410 = vadd.f32 %v5408, %v5409
    %v5411 = vsel %vm4660, %v4523, 0.0
    %v5412 = vadd.f32 %v5410, %v5411
    %v5413 = vsel %vm4660, %v4524, 0.0
    %v5414 = vadd.f32 %v5412, %v5413
    %v5415 = vsel %vm4660, %v4525, 0.0
    %v5416 = vadd.f32 %v5414, %v5415
    %v5417 = vsel %vm4660, %v4526, 0.0
    %v5418 = vadd.f32 %v5416, %v5417
    %v5419 = vsel %vm4660, %v4527, 0.0
    %v5420 = vadd.f32 %v5418, %v5419
    %v5421 = vsel %vm4660, %v4528, 0.0
    %v5422 = vadd.f32 %v5420, %v5421
    %v5423 = vsel %vm4660, %v4529, 0.0
    %v5424 = vadd.f32 %v5422, %v5423
    %v5425 = vsel %vm4660, %v4530, 0.0
    %v5426 = vadd.f32 %v5424, %v5425
    %v5427 = vsel %vm4660, %v4531, 0.0
    %v5428 = vadd.f32 %v5426, %v5427
    %v5429 = vsel %vm4660, %v4532, 0.0
    %v5430 = vadd.f32 %v5428, %v5429
    %v5431 = vsel %vm4660, %v4533, 0.0
    %v5432 = vadd.f32 %v5430, %v5431
    %v5433 = vsel %vm4660, %v4534, 0.0
    %v5434 = vadd.f32 %v5432, %v5433
    %v5435 = vsel %vm4660, %v4535, 0.0
    %v5436 = vadd.f32 %v5434, %v5435
    %v5437 = vsel %vm4660, %v4536, 0.0
    %v5438 = vadd.f32 %v5436, %v5437
    %v5439 = vsel %vm4660, %v4537, 0.0
    %v5440 = vadd.f32 %v5438, %v5439
    %v5441 = vsel %vm4660, %v4538, 0.0
    %v5442 = vadd.f32 %v5440, %v5441
    %v5443 = vsel %vm4660, %v4539, 0.0
    %v5444 = vadd.f32 %v5442, %v5443
    %v5445 = vsel %vm4660, %v4540, 0.0
    %v5446 = vadd.f32 %v5444, %v5445
    %v5447 = vsel %vm4660, %v4541, 0.0
    %v5448 = vadd.f32 %v5446, %v5447
    %v5449 = vsel %vm4660, %v4542, 0.0
    %v5450 = vadd.f32 %v5448, %v5449
    %v5451 = vsel %vm4660, %v4543, 0.0
    %v5452 = vadd.f32 %v5450, %v5451
    %v5453 = vsel %vm4660, %v4544, 0.0
    %v5454 = vadd.f32 %v5452, %v5453
    %v5455 = vsel %vm4660, %v4545, 0.0
    %v5456 = vadd.f32 %v5454, %v5455
    %v5457 = vsel %vm4660, %v4546, 0.0
    %v5458 = vadd.f32 %v5456, %v5457
    %v5459 = vsel %vm4660, %v4547, 0.0
    %v5460 = vadd.f32 %v5458, %v5459
    %v5461 = vsel %vm4660, %v4548, 0.0
    %v5462 = vadd.f32 %v5460, %v5461
    %v5463 = vsel %vm4660, %v4549, 0.0
    %v5464 = vadd.f32 %v5462, %v5463
    %v5465 = vsel %vm4660, %v4550, 0.0
    %v5466 = vadd.f32 %v5464, %v5465
    %v5467 = vsel %vm4660, %v4551, 0.0
    %v5468 = vadd.f32 %v5466, %v5467
    %v5469 = vsel %vm4660, %v4552, 0.0
    %v5470 = vadd.f32 %v5468, %v5469
    %v5471 = vsel %vm4660, %v4553, 0.0
    %v5472 = vadd.f32 %v5470, %v5471
    %v5473 = vsel %vm4660, %v4554, 0.0
    %v5474 = vadd.f32 %v5472, %v5473
    %v5475 = vsel %vm4660, %v4555, 0.0
    %v5476 = vadd.f32 %v5474, %v5475
    %v5477 = vsel %vm4660, %v4556, 0.0
    %v5478 = vadd.f32 %v5476, %v5477
    %v5479 = vsel %vm4660, %v4557, 0.0
    %v5480 = vadd.f32 %v5478, %v5479
    %v5481 = vsel %vm4660, %v4558, 0.0
    %v5482 = vadd.f32 %v5480, %v5481
    %v5483 = vsel %vm4660, %v4559, 0.0
    %v5484 = vadd.f32 %v5482, %v5483
    %v5485 = vsel %vm4660, %v4560, 0.0
    %v5486 = vadd.f32 %v5484, %v5485
    %v5487 = vsel %vm4660, %v4561, 0.0
    %v5488 = vadd.f32 %v5486, %v5487
    %v5489 = vsel %vm4660, %v4562, 0.0
    %v5490 = vadd.f32 %v5488, %v5489
    %v5491 = vsel %vm4660, %v4563, 0.0
    %v5492 = vadd.f32 %v5490, %v5491
    %v5493 = vsel %vm4660, %v4564, 0.0
    %v5494 = vadd.f32 %v5492, %v5493
    %v5495 = vsel %vm4660, %v4565, 0.0
    %v5496 = vadd.f32 %v5494, %v5495
    %v5497 = vsel %vm4660, %v4566, 0.0
    %v5498 = vadd.f32 %v5496, %v5497
    %v5499 = vsel %vm4660, %v4567, 0.0
    %v5500 = vadd.f32 %v5498, %v5499
    %v5501 = vsel %vm4660, %v4568, 0.0
    %v5502 = vadd.f32 %v5500, %v5501
    %v5503 = vsel %vm4660, %v4569, 0.0
    %v5504 = vadd.f32 %v5502, %v5503
    %v5505 = vsel %vm4660, %v4570, 0.0
    %v5506 = vadd.f32 %v5504, %v5505
    %v5507 = vsel %vm4660, %v4571, 0.0
    %v5508 = vadd.f32 %v5506, %v5507
    %v5509 = vsel %vm4660, %v4572, 0.0
    %v5510 = vadd.f32 %v5508, %v5509
    %v5511 = vsel %vm4660, %v4573, 0.0
    %v5512 = vadd.f32 %v5510, %v5511
    %v5513 = vsel %vm4660, %v4574, 0.0
    %v5514 = vadd.f32 %v5512, %v5513
    %v5515 = vsel %vm4660, %v4575, 0.0
    %v5516 = vadd.f32 %v5514, %v5515
    %v5517 = vsel %vm4660, %v4576, 0.0
    %v5518 = vadd.f32 %v5516, %v5517
    %v5519 = vsel %vm4660, %v4577, 0.0
    %v5520 = vadd.f32 %v5518, %v5519
    %v5521 = vsel %vm4660, %v4578, 0.0
    %v5522 = vadd.f32 %v5520, %v5521
    %v5523 = vsel %vm4660, %v4579, 0.0
    %v5524 = vadd.f32 %v5522, %v5523
    %v5525 = vsel %vm4660, %v4580, 0.0
    %v5526 = vadd.f32 %v5524, %v5525
    %v5527 = vsel %vm4660, %v4581, 0.0
    %v5528 = vadd.f32 %v5526, %v5527
    %v5529 = vsel %vm4660, %v4582, 0.0
    %v5530 = vadd.f32 %v5528, %v5529
    %v5531 = vsel %vm4660, %v4583, 0.0
    %v5532 = vadd.f32 %v5530, %v5531
    %v5533 = vsel %vm4660, %v4584, 0.0
    %v5534 = vadd.f32 %v5532, %v5533
    %v5535 = vsel %vm4660, %v4585, 0.0
    %v5536 = vadd.f32 %v5534, %v5535
    %v5537 = vsel %vm4660, %v4586, 0.0
    %v5538 = vadd.f32 %v5536, %v5537
    %v5539 = vsel %vm4660, %v4587, 0.0
    %v5540 = vadd.f32 %v5538, %v5539
    %v5541 = vsel %vm4660, %v4588, 0.0
    %v5542 = vadd.f32 %v5540, %v5541
    %v5543 = vsel %vm4660, %v4589, 0.0
    %v5544 = vadd.f32 %v5542, %v5543
    %v5545 = vsel %vm4660, %v4590, 0.0
    %v5546 = vadd.f32 %v5544, %v5545
    %v5547 = vsel %vm4660, %v4591, 0.0
    %v5548 = vadd.f32 %v5546, %v5547
    %v5549 = vsel %vm4660, %v4592, 0.0
    %v5550 = vadd.f32 %v5548, %v5549
    %v5551 = vsel %vm4660, %v4593, 0.0
    %v5552 = vadd.f32 %v5550, %v5551
    %v5553 = vsel %vm4660, %v4594, 0.0
    %v5554 = vadd.f32 %v5552, %v5553
    %v5555 = vsel %vm4660, %v4595, 0.0
    %v5556 = vadd.f32 %v5554, %v5555
    %v5557 = vsel %vm4660, %v4596, 0.0
    %v5558 = vadd.f32 %v5556, %v5557
    %v5559 = vsel %vm4660, %v4597, 0.0
    %v5560 = vadd.f32 %v5558, %v5559
    %v5561 = vsel %vm4660, %v4598, 0.0
    %v5562 = vadd.f32 %v5560, %v5561
    %v5563 = vsel %vm4660, %v4599, 0.0
    %v5564 = vadd.f32 %v5562, %v5563
    %v5565 = vsel %vm4660, %v4600, 0.0
    %v5566 = vadd.f32 %v5564, %v5565
    %v5567 = vsel %vm4660, %v4601, 0.0
    %v5568 = vadd.f32 %v5566, %v5567
    %v5569 = vsel %vm4660, %v4602, 0.0
    %v5570 = vadd.f32 %v5568, %v5569
    %v5571 = vsel %vm4660, %v4603, 0.0
    %v5572 = vadd.f32 %v5570, %v5571
    %v5573 = vsel %vm4660, %v4604, 0.0
    %v5574 = vadd.f32 %v5572, %v5573
    %v5575 = vsel %vm4660, %v4605, 0.0
    %v5576 = vadd.f32 %v5574, %v5575
    %v5577 = vsel %vm4660, %v4606, 0.0
    %v5578 = vadd.f32 %v5576, %v5577
    %v5579 = vsel %vm4660, %v4607, 0.0
    %v5580 = vadd.f32 %v5578, %v5579
    %v5581 = vsel %vm4660, %v4608, 0.0
    %v5582 = vadd.f32 %v5580, %v5581
    %v5583 = vsel %vm4660, %v4609, 0.0
    %v5584 = vadd.f32 %v5582, %v5583
    %v5585 = vsel %vm4660, %v4610, 0.0
    %v5586 = vadd.f32 %v5584, %v5585
    %v5587 = vsel %vm4660, %v4611, 0.0
    %v5588 = vadd.f32 %v5586, %v5587
    %v5589 = vsel %vm4660, %v4612, 0.0
    %v5590 = vadd.f32 %v5588, %v5589
    %v5591 = vsel %vm4660, %v4613, 0.0
    %v5592 = vadd.f32 %v5590, %v5591
    %v5593 = vsel %vm4660, %v4614, 0.0
    %v5594 = vadd.f32 %v5592, %v5593
    %v5595 = vsel %vm4660, %v4615, 0.0
    %v5596 = vadd.f32 %v5594, %v5595
    %v5597 = vsel %vm4660, %v4616, 0.0
    %v5598 = vadd.f32 %v5596, %v5597
    %v5599 = vsel %vm4660, %v4617, 0.0
    %v5600 = vadd.f32 %v5598, %v5599
    %v5601 = vsel %vm4660, %v4618, 0.0
    %v5602 = vadd.f32 %v5600, %v5601
    %v5603 = vsel %vm4660, %v4619, 0.0
    %v5604 = vadd.f32 %v5602, %v5603
    %v5605 = vsel %vm4660, %v4620, 0.0
    %v5606 = vadd.f32 %v5604, %v5605
    %v5607 = vsel %vm4660, %v4621, 0.0
    %v5608 = vadd.f32 %v5606, %v5607
    %v5609 = vsel %vm4660, %v4622, 0.0
    %v5610 = vadd.f32 %v5608, %v5609
    %v5611 = vsel %vm4660, %v4623, 0.0
    %v5612 = vadd.f32 %v5610, %v5611
    %v5613 = vsel %vm4660, %v4624, 0.0
    %v5614 = vadd.f32 %v5612, %v5613
    %v5615 = vsel %vm4660, %v4625, 0.0
    %v5616 = vadd.f32 %v5614, %v5615
    %v5617 = vsel %vm4660, %v4626, 0.0
    %v5618 = vadd.f32 %v5616, %v5617
    %v5619 = vsel %vm4660, %v4627, 0.0
    %v5620 = vadd.f32 %v5618, %v5619
    %v5621 = vsel %vm4660, %v4628, 0.0
    %v5622 = vadd.f32 %v5620, %v5621
    %v5623 = vsel %vm4660, %v4629, 0.0
    %v5624 = vadd.f32 %v5622, %v5623
    %v5625 = vsel %vm4660, %v4630, 0.0
    %v5626 = vadd.f32 %v5624, %v5625
    %v5627 = vsel %vm4660, %v4631, 0.0
    %v5628 = vadd.f32 %v5626, %v5627
    %v5629 = vsel %vm4660, %v4632, 0.0
    %v5630 = vadd.f32 %v5628, %v5629
    %v5631 = vsel %vm4660, %v4633, 0.0
    %v5632 = vadd.f32 %v5630, %v5631
    %v5633 = vsel %vm4660, %v4634, 0.0
    %v5634 = vadd.f32 %v5632, %v5633
    %v5635 = vsel %vm4660, %v4635, 0.0
    %v5636 = vadd.f32 %v5634, %v5635
    %v5637 = vsel %vm4660, %v4636, 0.0
    %v5638 = vadd.f32 %v5636, %v5637
    %v5639 = vsel %vm4660, %v4637, 0.0
    %v5640 = vadd.f32 %v5638, %v5639
    %v5641 = vsel %vm4660, %v4638, 0.0
    %v5642 = vadd.f32 %v5640, %v5641
    %v5643 = vsel %vm4660, %v4639, 0.0
    %v5644 = vadd.f32 %v5642, %v5643
    %v5645 = vsel %vm4660, %v4640, 0.0
    %v5646 = vadd.f32 %v5644, %v5645
    %v5647 = vsel %vm4660, %v4641, 0.0
    %v5648 = vadd.f32 %v5646, %v5647
    %v5649 = vsel %vm4660, %v4642, 0.0
    %v5650 = vadd.f32 %v5648, %v5649
    %v5651 = vsel %vm4660, %v4643, 0.0
    %v5652 = vadd.f32 %v5650, %v5651
    %v5653 = vsel %vm4660, %v4644, 0.0
    %v5654 = vadd.f32 %v5652, %v5653
    %v5655 = vsel %vm4660, %v4645, 0.0
    %v5656 = vadd.f32 %v5654, %v5655
    %v5657 = vsel %vm4660, %v4646, 0.0
    %v5658 = vadd.f32 %v5656, %v5657
    %v5659 = vsel %vm4660, %v4647, 0.0
    %v5660 = vadd.f32 %v5658, %v5659
    %v5661 = vsel %vm4660, %v4648, 0.0
    %v5662 = vadd.f32 %v5660, %v5661
    %v5663 = vsel %vm4660, %v4649, 0.0
    %v5664 = vadd.f32 %v5662, %v5663
    %v5665 = vsel %vm4660, %v4650, 0.0
    %v5666 = vadd.f32 %v5664, %v5665
    %v5667 = vsel %vm4660, %v4651, 0.0
    %v5668 = vadd.f32 %v5666, %v5667
    %v5669 = vsel %vm4660, %v4652, 0.0
    %v5670 = vadd.f32 %v5668, %v5669
    %v5671 = vsel %vm4660, %v4653, 0.0
    %v5672 = vadd.f32 %v5670, %v5671
    %v5673 = vsel %vm4660, %v4654, 0.0
    %v5674 = vadd.f32 %v5672, %v5673
    %v5675 = vsel %vm4660, %v4655, 0.0
    %v5676 = vadd.f32 %v5674, %v5675
    %v5677 = vsel %vm4660, %v4656, 0.0
    %v5678 = vadd.f32 %v5676, %v5677
    %v5679 = vsel %vm4660, %v4657, 0.0
    %v5680 = vadd.f32 %v5678, %v5679
    %v5681 = vsel %vm4660, %v4658, 0.0
    %v5682 = vadd.f32 %v5680, %v5681
    %v5683 = vsel %vm4660, %v4659, 0.0
    %v5684 = vadd.f32 %v5682, %v5683
    %5685 = vadd.xlane.f32.xlu0 %v5684
    %v5686 = vpop.xlane.xlu0 %5685
    %v5687 = vld [vmem:[#allocation7] sm:$0x1]
    %v5689 = vlaneseq
    %v5690 = vshrl.u32 %v5689, 7
    %v5691 = vsub.s32 0, %v5690
    %v5692 = vrot.slane %v5687, %v5691
    %5694 = vbcast.lane.b32.xlu0 %v5692, 256
    %v5695 = vpop.permute.xlu0 %5694
    %v5697 = vadd.f32 %v5173, %v5695
    %v5698 = vadd.f32 %v5686, %v5695
    %5701 = vset.pattern.permute.xlu0 0
    %5702 = vperm.xlu0 %5701, %v5697
    %v5703 = vpop.permute.xlu0 %5702
    %5704 = vset.pattern.permute.xlu0 0
    %5705 = vperm.xlu0 %5704, %v5698
    %v5706 = vpop.permute.xlu0 %5705
    %v5707 = vlaneseq
    %v5708 = vand.u32 %v5707, 127
    %v5709 = vlaneseq
    %v5710 = vshrl.u32 %v5709, 7
    %v5711 = vsub.s32 %v5708, %v5710
    %v5712 = vrot.slane %v5703, %v5711
    %v5713 = vlaneseq
    %v5714 = vshrl.u32 %v5713, 7
    %v5715 = vsub.s32 %v5708, %v5714
    %v5716 = vrot.slane %v5706, %v5715
    %vm5717 = vcmask 1041409
    %v5718 = vsel %vm5717, %v5716, %v5712
    %vm5720 = vcmask 25600
    %5721 = vst.msk [vmem:[#allocation8] sm:$0x3] %vm5720, %v5718
    // Predicated region
    $region26: #{tpu_custom_call.1} parent=1 // pred_check
      _
    $region27: #{tpu_custom_call.1} parent=1 // pred_check_branch
      %5723 = sbr.rel (0) target = $region29
    $region28: #{tpu_custom_call.1} parent=1 // pred_region
      %s5725 = ssub.s32 32, 32
      %5726 = vsyncadd [#allocation4], %s5725
      %s5728 = sshll.u32 [#allocation8], 4
      %s5729 = int_to_ptr.vmem [resolvable:$true] %s5728
      %5731 = dma.vmem_to_hbm [thread:$0]  %s5729, 32, %s3, [#allocation4]
    $region29: #{tpu_custom_call.1} parent=1 // pred_fallthru
      _
    // Predicated region
    $region30: #{tpu_custom_call.1} parent=1 // pred_check
      _
    $region31: #{tpu_custom_call.1} parent=1 // pred_check_branch
      %5733 = sbr.rel (0) target = $region33
    $region32: #{tpu_custom_call.1} parent=1 // pred_region
      %5734 = dma.done [#allocation4], 32
    $region33: #{tpu_custom_call.1} parent=1 // pred_fallthru
      _
    %5735 = vsyncpa [#allocation3], 1
    %5736 = vsyncpa [#allocation6], 1
    %5737 = vsyncpa [#allocation4], 1

</llo_original>
